<compile_context>
chip_gen: v7x
topology: tpu7x:2x2x1
jax: 0.10.0
libtpu: 0.0.40
codegen_flags: <defaults>
</compile_context>

<pallas_src>
import functools

import jax
import jax.numpy as jnp
from jax.experimental import pallas as pl
from jax.experimental.pallas import tpu as pltpu


# ---------------------------------------------------------------------------
# math helpers (traced inside kernels, all f32)
# ---------------------------------------------------------------------------
def _softmax(x, axis):
    m = jnp.max(x, axis=axis, keepdims=True)
    e = jnp.exp(x - m)
    return e / jnp.sum(e, axis=axis, keepdims=True)


def _log_softmax(x, axis):
    m = jnp.max(x, axis=axis, keepdims=True)
    s = x - m
    return s - jnp.log(jnp.sum(jnp.exp(s), axis=axis, keepdims=True))


def _gelu_tanh(x):
    # TODO(synk): PyTorch nn.GELU() default is exact erf-GELU; tanh approximation is used
    #             here (Mosaic/EUP-friendly), max abs deviation ~1e-3.
    c = jnp.float32(0.7978845608028654)  # sqrt(2/pi)
    return 0.5 * x * (1.0 + jnp.tanh(c * (x + 0.044715 * x * x * x)))


# ---------------------------------------------------------------------------
# Kernel 1: per-modality [conv3x3 'same' + ReLU + GAP] encoder + projection head.
# grid=(2,): program 0 = image/MSI branch, program 1 = text/RGB branch ("parallel").
# ---------------------------------------------------------------------------
def encoder_proj_kernel(mnf_ref, mnl_ref, x_ref, cw_ref, cb_ref,
                        w1_ref, b1_ref, w2_ref, b2_ref, g_ref, be_ref,
                        emb_ref, *, H, W, p_real):
    HW = H * W

    # ---- 3x3 'same' conv as ONE im2col matmul (in-kernel im2col, no HBM blow-up) ----
    x = x_ref[...]                        # (B, HW + 2*(W+1), C_pad) bf16, zero-padded flat
    mnf = mnf_ref[...]                    # (1, HW, 1) bf16: 0 at column 0 of every image row
    mnl = mnl_ref[...]                    # (1, HW, 1) bf16: 0 at column W-1 of every image row

    taps = []
    for di in range(3):
        for dj in range(3):
            start = (W + 1) + (di - 1) * W + (dj - 1)        # static sublane offset
            tap = x[:, start:start + HW, :]                  # (B, HW, C_pad) bf16
            if dj == 0:
                tap = tap * mnf           # kill row-wrapped "left of column 0" taps
            elif dj == 2:
                tap = tap * mnl           # kill row-wrapped "right of column W-1" taps
            taps.append(tap)
    col = jnp.concatenate(taps, axis=-1)                     # (B, HW, 9*C_pad) bf16

    acc = jax.lax.dot_general(                               # single MXU pass, K = 9*C_pad
        col, cw_ref[...], (((2,), (0,)), ((), ())),
        preferred_element_type=jnp.float32)                  # (B, HW, E_pad) f32
    y = jnp.maximum(acc + cb_ref[...], 0.0)                  # bias + ReLU in f32
    feat = jnp.mean(y, axis=1)                               # global average pool -> (B, E_pad)

    # ---- projection head: Linear -> GELU -> Linear -> (+residual) -> LayerNorm ----
    projected = jnp.dot(feat.astype(jnp.bfloat16), w1_ref[...],
                        preferred_element_type=jnp.float32) + b1_ref[...]
    h = _gelu_tanh(projected)
    h = jnp.dot(h.astype(jnp.bfloat16), w2_ref[...],
                preferred_element_type=jnp.float32) + b2_ref[...]
    h = h + projected                                        # residual (dropout = eval identity)

    # masked LayerNorm over the real projection_dim lanes (padded lanes of h are exact 0)
    p_padded = h.shape[-1]
    lane = jax.lax.broadcasted_iota(jnp.int32, (1, p_padded), 1)
    lmask = (lane < p_real).astype(jnp.float32)
    inv_p = jnp.float32(1.0 / p_real)
    mean = jnp.sum(h * lmask, axis=-1, keepdims=True) * inv_p
    diff = (h - mean) * lmask
    var = jnp.sum(diff * diff, axis=-1, keepdims=True) * inv_p
    norm = (h - mean) * jax.lax.rsqrt(var + 1e-5)
    # gamma/beta are zero in padded lanes, so padded embedding lanes come out exactly 0.
    emb_ref[...] = norm * g_ref[...] + be_ref[...]


# ---------------------------------------------------------------------------
# Kernel 2: CLIP symmetric contrastive loss from the (2, B, P_pad) embeddings.
# ---------------------------------------------------------------------------
def clip_loss_kernel(emb_ref, o_ref, *, temperature):
    img = emb_ref[0]                  # (B, P_pad) f32, padded lanes are exact zeros
    txt = emb_ref[1]
    xyT = (((1,), (1,)), ((), ()))    # X @ Y.T (contract the lane/P axis)
    logits = jax.lax.dot_general(txt, img, xyT,
                                 preferred_element_type=jnp.float32) / temperature
    img_sim = jax.lax.dot_general(img, img, xyT, preferred_element_type=jnp.float32)
    txt_sim = jax.lax.dot_general(txt, txt, xyT, preferred_element_type=jnp.float32)
    targets = _softmax((img_sim + txt_sim) * 0.5 * temperature, axis=-1)

    texts_loss = jnp.sum(-targets * _log_softmax(logits, axis=-1), axis=1)     # (B,)
    # images_loss = CE(logits.T, targets.T), written in the equivalent column-wise form.
    # TODO(synk): at large B compute logits_t = img@txt.T and transpose targets once so the
    #             log-softmax / reduction run on the lane axis instead of axis 0 (XLU work).
    images_loss = jnp.sum(-targets * _log_softmax(logits, axis=0), axis=0)     # (B,)
    loss = jnp.mean((images_loss + texts_loss) * 0.5)
    o_ref[0, 0] = loss


# ---------------------------------------------------------------------------
# wrapper helpers: cheap layout prep + zero padding to lane-dense shapes
# ---------------------------------------------------------------------------
def _round_up(v, m):
    return ((v + m - 1) // m) * m


def _prep_image(x_nchw, c_pad):
    """NCHW -> (B, H*W, C_pad) flattened NHWC bf16, zero-padded by W+1 rows on both ends."""
    B, C, H, W = x_nchw.shape
    x = jnp.transpose(x_nchw, (0, 2, 3, 1)).reshape(B, H * W, C)
    x = jnp.pad(x, ((0, 0), (W + 1, W + 1), (0, c_pad - C)))
    return x.astype(jnp.bfloat16)


def _pad_conv_w(w, c, c_pad, e_pad):
    """(9*C, E) -> (9, C, E) -> zero-pad channels/outputs -> (9*C_pad, E_pad)."""
    e = w.shape[1]
    w = w.reshape(9, c, e)
    w = jnp.pad(w, ((0, 0), (0, c_pad - c), (0, e_pad - e)))
    return w.reshape(9 * c_pad, e_pad)


def _pad_vec(v, n_pad):
    return jnp.pad(v, (0, n_pad - v.shape[0])).reshape(1, n_pad)


def _pad_mat(w, r_pad, c_pad):
    return jnp.pad(w, ((0, r_pad - w.shape[0]), (0, c_pad - w.shape[1])))


# ---------------------------------------------------------------------------
# forward: encoder+projection kernel (grid over modality) -> loss kernel
# ---------------------------------------------------------------------------
@functools.partial(jax.jit, static_argnums=(3,))
def clip_forward(msi_img, rgb_img, params, temperature):
    B, Ci, H, W = msi_img.shape
    Br, Ct, Hr, Wr = rgb_img.shape
    assert (B, H, W) == (Br, Hr, Wr), "both modalities must share batch & spatial dims"
    assert W >= 2, "3x3 'same' conv boundary masking assumes W >= 2"
    HW = H * W
    HWp = HW + 2 * (W + 1)

    C_pad = _round_up(max(Ci, Ct), 8)
    E_img = params["img_conv_w"].shape[1]
    E_txt = params["txt_conv_w"].shape[1]
    P = params["img_proj"]["w1"].shape[1]
    E_pad = _round_up(max(E_img, E_txt), 128)     # lane-dense conv output
    P_pad = _round_up(P, 128)                     # lane-dense projection width
    KC = 9 * C_pad

    # activations shipped already in bf16 (halves input DMA; matmul operands are bf16 anyway)
    x_all = jnp.stack([_prep_image(msi_img, C_pad), _prep_image(rgb_img, C_pad)], axis=0)

    col = jnp.arange(HW, dtype=jnp.int32) % W
    mnf = (col != 0).astype(jnp.bfloat16).reshape(1, HW, 1)
    mnl = (col != (W - 1)).astype(jnp.bfloat16).reshape(1, HW, 1)

    ip, tp = params["img_proj"], params["txt_proj"]
    conv_w = jnp.stack([_pad_conv_w(params["img_conv_w"], Ci, C_pad, E_pad),
                        _pad_conv_w(params["txt_conv_w"], Ct, C_pad, E_pad)],
                       axis=0).astype(jnp.bfloat16)                        # (2, 9*C_pad, E_pad)
    conv_b = jnp.stack([_pad_vec(params["img_conv_b"], E_pad),
                        _pad_vec(params["txt_conv_b"], E_pad)], axis=0)    # (2, 1, E_pad) f32
    w1 = jnp.stack([_pad_mat(ip["w1"], E_pad, P_pad),
                    _pad_mat(tp["w1"], E_pad, P_pad)], axis=0).astype(jnp.bfloat16)
    b1 = jnp.stack([_pad_vec(ip["b1"], P_pad), _pad_vec(tp["b1"], P_pad)], axis=0)
    w2 = jnp.stack([_pad_mat(ip["w2"], P_pad, P_pad),
                    _pad_mat(tp["w2"], P_pad, P_pad)], axis=0).astype(jnp.bfloat16)
    b2 = jnp.stack([_pad_vec(ip["b2"], P_pad), _pad_vec(tp["b2"], P_pad)], axis=0)
    gamma = jnp.stack([_pad_vec(ip["gamma"], P_pad), _pad_vec(tp["gamma"], P_pad)], axis=0)
    beta = jnp.stack([_pad_vec(ip["beta"], P_pad), _pad_vec(tp["beta"], P_pad)], axis=0)

    emb = pl.pallas_call(
        functools.partial(encoder_proj_kernel, H=H, W=W, p_real=P),
        grid=(2,),
        out_shape=jax.ShapeDtypeStruct((2, B, P_pad), jnp.float32),
        in_specs=[
            pl.BlockSpec((1, HW, 1), lambda m: (0, 0, 0)),                 # mask: not-first-col
            pl.BlockSpec((1, HW, 1), lambda m: (0, 0, 0)),                 # mask: not-last-col
            pl.BlockSpec((None, B, HWp, C_pad), lambda m: (m, 0, 0, 0)),   # x (per modality)
            pl.BlockSpec((None, KC, E_pad), lambda m: (m, 0, 0)),          # conv weight (bf16)
            pl.BlockSpec((None, 1, E_pad), lambda m: (m, 0, 0)),           # conv bias
            pl.BlockSpec((None, E_pad, P_pad), lambda m: (m, 0, 0)),       # proj w1 (bf16)
            pl.BlockSpec((None, 1, P_pad), lambda m: (m, 0, 0)),           # proj b1
            pl.BlockSpec((None, P_pad, P_pad), lambda m: (m, 0, 0)),       # proj w2 (bf16)
            pl.BlockSpec((None, 1, P_pad), lambda m: (m, 0, 0)),           # proj b2
            pl.BlockSpec((None, 1, P_pad), lambda m: (m, 0, 0)),           # LN gamma
            pl.BlockSpec((None, 1, P_pad), lambda m: (m, 0, 0)),           # LN beta
        ],
        out_specs=pl.BlockSpec((None, B, P_pad), lambda m: (m, 0, 0)),
        compiler_params=pltpu.CompilerParams(dimension_semantics=("parallel",)),
    )(mnf, mnl, x_all, conv_w, conv_b, w1, b1, w2, b2, gamma, beta)

    loss = pl.pallas_call(
        functools.partial(clip_loss_kernel, temperature=float(temperature)),
        out_shape=jax.ShapeDtypeStruct((1, 1), jnp.float32),
        in_specs=[pl.BlockSpec(memory_space=pltpu.MemorySpace.VMEM)],
        out_specs=pl.BlockSpec(memory_space=pltpu.MemorySpace.SMEM),
    )(emb)
    return loss[0, 0]


# ---------------------------------------------------------------------------
# parameter init (logical, un-padded f32 shapes)
# ---------------------------------------------------------------------------
def init_params(key, msi_channel, rgb_channel, image_embedding, text_embedding,
                projection_dim):
    ks = jax.random.split(key, 4)

    def lin(k, fan_in, fan_out):
        scale = 1.0 / jnp.sqrt(jnp.float32(fan_in))
        return jax.random.normal(k, (fan_in, fan_out), jnp.float32) * scale

    def proj_params(k, emb, proj):
        k1, k2 = jax.random.split(k)
        return {
            "w1": lin(k1, emb, proj),
            "b1": jnp.zeros((proj,), jnp.float32),
            "w2": lin(k2, proj, proj),
            "b2": jnp.zeros((proj,), jnp.float32),
            "gamma": jnp.ones((proj,), jnp.float32),
            "beta": jnp.zeros((proj,), jnp.float32),
        }

    return {
        "img_conv_w": lin(ks[0], 9 * msi_channel, image_embedding),
        "img_conv_b": jnp.zeros((image_embedding,), jnp.float32),
        "txt_conv_w": lin(ks[1], 9 * rgb_channel, text_embedding),
        "txt_conv_b": jnp.zeros((text_embedding,), jnp.float32),
        "img_proj": proj_params(ks[2], image_embedding, projection_dim),
        "txt_proj": proj_params(ks[3], text_embedding, projection_dim),
    }


# ---------------------------------------------------------------------------
if __name__ == "__main__":
    B, H, W = 2, 16, 16
    msi_channel, rgb_channel = 4, 3
    image_embedding = 32
    text_embedding = 32
    projection_dim = 32
    temperature = 1.0
    # train_num_class / dropout only affect discarded class heads / eval-mode dropout.

    key = jax.random.PRNGKey(0)
    k_params, k_msi, k_rgb = jax.random.split(key, 3)
    params = init_params(k_params, msi_channel, rgb_channel,
                         image_embedding, text_embedding, projection_dim)

    msi_img = jax.random.normal(k_msi, (B, msi_channel, H, W), jnp.float32)
    rgb_img = jax.random.normal(k_rgb, (B, rgb_channel, H, W), jnp.float32)

    loss = clip_forward(msi_img, rgb_img, params, temperature)
    jax.block_until_ready(loss)
    print("KERNEL_OK")
</pallas_src>

<mosaic_0001>
module attributes {stable_mosaic.version = 11 : i64} {
  func.func @clip_loss_kernel(%arg0: memref<2x2x128xf32, #tpu.memory_space<vmem>>, %arg1: memref<1x1xf32, #tpu.memory_space<smem>>) attributes {dimension_semantics = [], scalar_prefetch = 0 : i64, scratch_operands = 0 : i64, tpu.core_type = #tpu.core_type<tc>} {
    %c0 = arith.constant 0 : index
    %c0_0 = arith.constant 0 : index
    %c0_1 = arith.constant 0 : index
    %0 = vector.load %arg0[%c0, %c0_0, %c0_1] : memref<2x2x128xf32, #tpu.memory_space<vmem>>, vector<1x2x128xf32>
    %1 = vector.shape_cast %0 : vector<1x2x128xf32> to vector<2x128xf32>
    %c1 = arith.constant 1 : index
    %c0_2 = arith.constant 0 : index
    %c0_3 = arith.constant 0 : index
    %2 = vector.load %arg0[%c1, %c0_2, %c0_3] : memref<2x2x128xf32, #tpu.memory_space<vmem>>, vector<1x2x128xf32>
    %3 = vector.shape_cast %2 : vector<1x2x128xf32> to vector<2x128xf32>
    %cst = arith.constant dense<0.000000e+00> : vector<2x2xf32>
    %4 = tpu.matmul %3, %1, %cst {dimension_numbers = #tpu.dot_dimension_numbers<[1], [1], [0], [0], [0, 0, 1, 0], [], []>} : vector<2x128xf32>, vector<2x128xf32>, vector<2x2xf32> -> vector<2x2xf32>
    %cst_4 = arith.constant 1.000000e+00 : f32
    %5 = vector.broadcast %cst_4 : f32 to vector<2x2xf32>
    %6 = arith.divf %4, %5 : vector<2x2xf32>
    %cst_5 = arith.constant dense<0.000000e+00> : vector<2x2xf32>
    %7 = tpu.matmul %1, %1, %cst_5 {dimension_numbers = #tpu.dot_dimension_numbers<[1], [1], [0], [0], [0, 0, 1, 0], [], []>} : vector<2x128xf32>, vector<2x128xf32>, vector<2x2xf32> -> vector<2x2xf32>
    %cst_6 = arith.constant dense<0.000000e+00> : vector<2x2xf32>
    %8 = tpu.matmul %3, %3, %cst_6 {dimension_numbers = #tpu.dot_dimension_numbers<[1], [1], [0], [0], [0, 0, 1, 0], [], []>} : vector<2x128xf32>, vector<2x128xf32>, vector<2x2xf32> -> vector<2x2xf32>
    %9 = arith.addf %7, %8 : vector<2x2xf32>
    %cst_7 = arith.constant 5.000000e-01 : f32
    %10 = vector.broadcast %cst_7 : f32 to vector<2x2xf32>
    %11 = arith.mulf %9, %10 : vector<2x2xf32>
    %cst_8 = arith.constant 1.000000e+00 : f32
    %12 = vector.broadcast %cst_8 : f32 to vector<2x2xf32>
    %13 = arith.mulf %11, %12 : vector<2x2xf32>
    %cst_9 = arith.constant dense<0xFF800000> : vector<2xf32>
    %14 = vector.multi_reduction <maximumf>, %13, %cst_9 [1] : vector<2x2xf32> to vector<2xf32>
    %15 = vector.shape_cast %14 : vector<2xf32> to vector<2x1xf32>
    %16 = vector.broadcast %15 : vector<2x1xf32> to vector<2x2xf32>
    %17 = arith.subf %13, %16 : vector<2x2xf32>
    %18 = math.exp %17 : vector<2x2xf32>
    %cst_10 = arith.constant dense<0.000000e+00> : vector<2xf32>
    %19 = vector.multi_reduction <add>, %18, %cst_10 [1] : vector<2x2xf32> to vector<2xf32>
    %20 = vector.shape_cast %19 : vector<2xf32> to vector<2x1xf32>
    %21 = vector.broadcast %20 : vector<2x1xf32> to vector<2x2xf32>
    %22 = arith.divf %18, %21 : vector<2x2xf32>
    %cst_11 = arith.constant 0.000000e+00 : f32
    %23 = vector.broadcast %cst_11 : f32 to vector<2x2xf32>
    %24 = arith.subf %23, %22 : vector<2x2xf32>
    %cst_12 = arith.constant dense<0xFF800000> : vector<2xf32>
    %25 = vector.multi_reduction <maximumf>, %6, %cst_12 [1] : vector<2x2xf32> to vector<2xf32>
    %26 = vector.shape_cast %25 : vector<2xf32> to vector<2x1xf32>
    %27 = vector.broadcast %26 : vector<2x1xf32> to vector<2x2xf32>
    %28 = arith.subf %6, %27 : vector<2x2xf32>
    %29 = math.exp %28 : vector<2x2xf32>
    %cst_13 = arith.constant dense<0.000000e+00> : vector<2xf32>
    %30 = vector.multi_reduction <add>, %29, %cst_13 [1] : vector<2x2xf32> to vector<2xf32>
    %31 = vector.shape_cast %30 : vector<2xf32> to vector<2x1xf32>
    %32 = math.log %31 : vector<2x1xf32>
    %33 = vector.broadcast %32 : vector<2x1xf32> to vector<2x2xf32>
    %34 = arith.subf %28, %33 : vector<2x2xf32>
    %35 = arith.mulf %24, %34 : vector<2x2xf32>
    %cst_14 = arith.constant dense<0.000000e+00> : vector<2xf32>
    %36 = vector.multi_reduction <add>, %35, %cst_14 [1] : vector<2x2xf32> to vector<2xf32>
    %cst_15 = arith.constant 0.000000e+00 : f32
    %37 = vector.broadcast %cst_15 : f32 to vector<2x2xf32>
    %38 = arith.subf %37, %22 : vector<2x2xf32>
    %cst_16 = arith.constant dense<0xFF800000> : vector<2xf32>
    %39 = vector.multi_reduction <maximumf>, %6, %cst_16 [0] : vector<2x2xf32> to vector<2xf32>
    %40 = vector.shape_cast %39 : vector<2xf32> to vector<1x2xf32>
    %41 = vector.broadcast %40 : vector<1x2xf32> to vector<2x2xf32>
    %42 = arith.subf %6, %41 : vector<2x2xf32>
    %43 = math.exp %42 : vector<2x2xf32>
    %cst_17 = arith.constant dense<0.000000e+00> : vector<2xf32>
    %44 = vector.multi_reduction <add>, %43, %cst_17 [0] : vector<2x2xf32> to vector<2xf32>
    %45 = vector.shape_cast %44 : vector<2xf32> to vector<1x2xf32>
    %46 = math.log %45 : vector<1x2xf32>
    %47 = vector.broadcast %46 : vector<1x2xf32> to vector<2x2xf32>
    %48 = arith.subf %42, %47 : vector<2x2xf32>
    %49 = arith.mulf %38, %48 : vector<2x2xf32>
    %cst_18 = arith.constant dense<0.000000e+00> : vector<2xf32>
    %50 = vector.multi_reduction <add>, %49, %cst_18 [0] : vector<2x2xf32> to vector<2xf32>
    %51 = arith.addf %50, %36 : vector<2xf32>
    %cst_19 = arith.constant 5.000000e-01 : f32
    %52 = vector.broadcast %cst_19 : f32 to vector<2xf32>
    %53 = arith.mulf %51, %52 : vector<2xf32>
    %54 = vector.shape_cast %53 : vector<2xf32> to vector<1x2xf32>
    %cst_20 = arith.constant dense<0.000000e+00> : vector<1xf32>
    %55 = vector.multi_reduction <add>, %54, %cst_20 [1] : vector<1x2xf32> to vector<1xf32>
    %56 = vector.shape_cast %55 : vector<1xf32> to vector<1x1xf32>
    %57 = vector.extract %56[0, 0] : f32 from vector<1x1xf32>
    %cst_21 = arith.constant 2.000000e+00 : f32
    %58 = arith.divf %57, %cst_21 : f32
    %c0_22 = arith.constant 0 : index
    %c0_23 = arith.constant 0 : index
    %59 = memref.load %arg1[%c0_22, %c0_23] : memref<1x1xf32, #tpu.memory_space<smem>>
    memref.store %58, %arg1[%c0_22, %c0_23] : memref<1x1xf32, #tpu.memory_space<smem>>
    return
  }
}

module attributes {stable_mosaic.version = 11 : i64} {
  func.func @encoder_proj_kernel(%arg0: i32, %arg1: memref<1x256x1xbf16, #tpu.memory_space<vmem>>, %arg2: memref<1x256x1xbf16, #tpu.memory_space<vmem>>, %arg3: memref<1x2x290x8xbf16, #tpu.memory_space<vmem>>, %arg4: memref<1x72x128xbf16, #tpu.memory_space<vmem>>, %arg5: memref<1x1x128xf32, #tpu.memory_space<vmem>>, %arg6: memref<1x128x128xbf16, #tpu.memory_space<vmem>>, %arg7: memref<1x1x128xf32, #tpu.memory_space<vmem>>, %arg8: memref<1x128x128xbf16, #tpu.memory_space<vmem>>, %arg9: memref<1x1x128xf32, #tpu.memory_space<vmem>>, %arg10: memref<1x1x128xf32, #tpu.memory_space<vmem>>, %arg11: memref<1x1x128xf32, #tpu.memory_space<vmem>>, %arg12: memref<1x2x128xf32, #tpu.memory_space<vmem>>) attributes {dimension_semantics = [#tpu.dimension_semantics<parallel>], iteration_bounds = array<i64: 2>, scalar_prefetch = 0 : i64, scratch_operands = 0 : i64, tpu.core_type = #tpu.core_type<tc>, window_params = [{pipeline_mode = #tpu.pipeline_mode<synchronous>, transform_indices = @transform_0, window_bounds = array<i64: 1, 256, 1>}, {pipeline_mode = #tpu.pipeline_mode<synchronous>, transform_indices = @transform_1, window_bounds = array<i64: 1, 256, 1>}, {transform_indices = @transform_2, window_bounds = array<i64: 1, 2, 290, 8>}, {transform_indices = @transform_3, window_bounds = array<i64: 1, 72, 128>}, {transform_indices = @transform_4, window_bounds = array<i64: 1, 1, 128>}, {transform_indices = @transform_5, window_bounds = array<i64: 1, 128, 128>}, {transform_indices = @transform_6, window_bounds = array<i64: 1, 1, 128>}, {transform_indices = @transform_7, window_bounds = array<i64: 1, 128, 128>}, {transform_indices = @transform_8, window_bounds = array<i64: 1, 1, 128>}, {transform_indices = @transform_9, window_bounds = array<i64: 1, 1, 128>}, {transform_indices = @transform_10, window_bounds = array<i64: 1, 1, 128>}, {transform_indices = @transform_11, window_bounds = array<i64: 1, 2, 128>}]} {
    %c0 = arith.constant 0 : index
    %c0_0 = arith.constant 0 : index
    %c0_1 = arith.constant 0 : index
    %c0_2 = arith.constant 0 : index
    %0 = vector.load %arg3[%c0, %c0_0, %c0_1, %c0_2] : memref<1x2x290x8xbf16, #tpu.memory_space<vmem>>, vector<1x2x290x8xbf16>
    %1 = vector.shape_cast %0 : vector<1x2x290x8xbf16> to vector<2x290x8xbf16>
    %c0_3 = arith.constant 0 : index
    %c0_4 = arith.constant 0 : index
    %c0_5 = arith.constant 0 : index
    %2 = vector.load %arg1[%c0_3, %c0_4, %c0_5] : memref<1x256x1xbf16, #tpu.memory_space<vmem>>, vector<1x256x1xbf16>
    %c0_6 = arith.constant 0 : index
    %c0_7 = arith.constant 0 : index
    %c0_8 = arith.constant 0 : index
    %3 = vector.load %arg2[%c0_6, %c0_7, %c0_8] : memref<1x256x1xbf16, #tpu.memory_space<vmem>>, vector<1x256x1xbf16>
    %4 = vector.extract_strided_slice %1 {offsets = [0, 0, 0], sizes = [2, 256, 8], strides = [1, 1, 1]} : vector<2x290x8xbf16> to vector<2x256x8xbf16>
    %5 = vector.broadcast %2 : vector<1x256x1xbf16> to vector<2x256x8xbf16>
    %6 = arith.mulf %4, %5 : vector<2x256x8xbf16>
    %7 = vector.extract_strided_slice %1 {offsets = [0, 1, 0], sizes = [2, 256, 8], strides = [1, 1, 1]} : vector<2x290x8xbf16> to vector<2x256x8xbf16>
    %8 = vector.extract_strided_slice %1 {offsets = [0, 2, 0], sizes = [2, 256, 8], strides = [1, 1, 1]} : vector<2x290x8xbf16> to vector<2x256x8xbf16>
    %9 = vector.broadcast %3 : vector<1x256x1xbf16> to vector<2x256x8xbf16>
    %10 = arith.mulf %8, %9 : vector<2x256x8xbf16>
    %11 = vector.extract_strided_slice %1 {offsets = [0, 16, 0], sizes = [2, 256, 8], strides = [1, 1, 1]} : vector<2x290x8xbf16> to vector<2x256x8xbf16>
    %12 = vector.broadcast %2 : vector<1x256x1xbf16> to vector<2x256x8xbf16>
    %13 = arith.mulf %11, %12 : vector<2x256x8xbf16>
    %14 = vector.extract_strided_slice %1 {offsets = [0, 17, 0], sizes = [2, 256, 8], strides = [1, 1, 1]} : vector<2x290x8xbf16> to vector<2x256x8xbf16>
    %15 = vector.extract_strided_slice %1 {offsets = [0, 18, 0], sizes = [2, 256, 8], strides = [1, 1, 1]} : vector<2x290x8xbf16> to vector<2x256x8xbf16>
    %16 = vector.broadcast %3 : vector<1x256x1xbf16> to vector<2x256x8xbf16>
    %17 = arith.mulf %15, %16 : vector<2x256x8xbf16>
    %18 = vector.extract_strided_slice %1 {offsets = [0, 32, 0], sizes = [2, 256, 8], strides = [1, 1, 1]} : vector<2x290x8xbf16> to vector<2x256x8xbf16>
    %19 = vector.broadcast %2 : vector<1x256x1xbf16> to vector<2x256x8xbf16>
    %20 = arith.mulf %18, %19 : vector<2x256x8xbf16>
    %21 = vector.extract_strided_slice %1 {offsets = [0, 33, 0], sizes = [2, 256, 8], strides = [1, 1, 1]} : vector<2x290x8xbf16> to vector<2x256x8xbf16>
    %22 = vector.extract_strided_slice %1 {offsets = [0, 34, 0], sizes = [2, 256, 8], strides = [1, 1, 1]} : vector<2x290x8xbf16> to vector<2x256x8xbf16>
    %23 = vector.broadcast %3 : vector<1x256x1xbf16> to vector<2x256x8xbf16>
    %24 = arith.mulf %22, %23 : vector<2x256x8xbf16>
    %25 = tpu.concatenate %6, %7, %10, %13, %14, %17, %20, %21, %24 in 2 : vector<2x256x8xbf16>, vector<2x256x8xbf16>, vector<2x256x8xbf16>, vector<2x256x8xbf16>, vector<2x256x8xbf16>, vector<2x256x8xbf16>, vector<2x256x8xbf16>, vector<2x256x8xbf16>, vector<2x256x8xbf16> -> vector<2x256x72xbf16>
    %c0_9 = arith.constant 0 : index
    %c0_10 = arith.constant 0 : index
    %c0_11 = arith.constant 0 : index
    %26 = vector.load %arg4[%c0_9, %c0_10, %c0_11] : memref<1x72x128xbf16, #tpu.memory_space<vmem>>, vector<1x72x128xbf16>
    %27 = vector.shape_cast %26 : vector<1x72x128xbf16> to vector<72x128xbf16>
    %cst = arith.constant dense<0.000000e+00> : vector<2x256x128xf32>
    %28 = tpu.matmul %25, %27, %cst {dimension_numbers = #tpu.dot_dimension_numbers<[2], [0], [0, 1], [1], [0, 0, 0, 1, 1, 1], [], []>} : vector<2x256x72xbf16>, vector<72x128xbf16>, vector<2x256x128xf32> -> vector<2x256x128xf32>
    %c0_12 = arith.constant 0 : index
    %c0_13 = arith.constant 0 : index
    %c0_14 = arith.constant 0 : index
    %29 = vector.load %arg5[%c0_12, %c0_13, %c0_14] : memref<1x1x128xf32, #tpu.memory_space<vmem>>, vector<1x1x128xf32>
    %30 = vector.shape_cast %29 : vector<1x1x128xf32> to vector<1x128xf32>
    %31 = vector.shape_cast %30 : vector<1x128xf32> to vector<1x1x128xf32>
    %32 = vector.broadcast %31 : vector<1x1x128xf32> to vector<2x256x128xf32>
    %33 = arith.addf %28, %32 : vector<2x256x128xf32>
    %cst_15 = arith.constant 0.000000e+00 : f32
    %34 = vector.broadcast %cst_15 : f32 to vector<2x256x128xf32>
    %35 = arith.maximumf %33, %34 : vector<2x256x128xf32>
    %cst_16 = arith.constant dense<0.000000e+00> : vector<2x128xf32>
    %36 = vector.multi_reduction <add>, %35, %cst_16 [1] : vector<2x256x128xf32> to vector<2x128xf32>
    %cst_17 = arith.constant 2.560000e+02 : f32
    %37 = vector.broadcast %cst_17 : f32 to vector<2x128xf32>
    %38 = arith.divf %36, %37 : vector<2x128xf32>
    %39 = arith.truncf %38 : vector<2x128xf32> to vector<2x128xbf16>
    %c0_18 = arith.constant 0 : index
    %c0_19 = arith.constant 0 : index
    %c0_20 = arith.constant 0 : index
    %40 = vector.load %arg6[%c0_18, %c0_19, %c0_20] : memref<1x128x128xbf16, #tpu.memory_space<vmem>>, vector<1x128x128xbf16>
    %41 = vector.shape_cast %40 : vector<1x128x128xbf16> to vector<128x128xbf16>
    %cst_21 = arith.constant dense<0.000000e+00> : vector<2x128xf32>
    %42 = tpu.matmul %39, %41, %cst_21 {dimension_numbers = #tpu.dot_dimension_numbers<[1], [0], [0], [1], [0, 0, 1, 1], [], []>} : vector<2x128xbf16>, vector<128x128xbf16>, vector<2x128xf32> -> vector<2x128xf32>
    %c0_22 = arith.constant 0 : index
    %c0_23 = arith.constant 0 : index
    %c0_24 = arith.constant 0 : index
    %43 = vector.load %arg7[%c0_22, %c0_23, %c0_24] : memref<1x1x128xf32, #tpu.memory_space<vmem>>, vector<1x1x128xf32>
    %44 = vector.shape_cast %43 : vector<1x1x128xf32> to vector<1x128xf32>
    %45 = vector.broadcast %44 : vector<1x128xf32> to vector<2x128xf32>
    %46 = arith.addf %42, %45 : vector<2x128xf32>
    %cst_25 = arith.constant 5.000000e-01 : f32
    %47 = vector.broadcast %cst_25 : f32 to vector<2x128xf32>
    %48 = arith.mulf %47, %46 : vector<2x128xf32>
    %cst_26 = arith.constant 4.471500e-02 : f32
    %49 = vector.broadcast %cst_26 : f32 to vector<2x128xf32>
    %50 = arith.mulf %49, %46 : vector<2x128xf32>
    %51 = arith.mulf %50, %46 : vector<2x128xf32>
    %52 = arith.mulf %51, %46 : vector<2x128xf32>
    %53 = arith.addf %46, %52 : vector<2x128xf32>
    %cst_27 = arith.constant 0.797884583 : f32
    %54 = vector.broadcast %cst_27 : f32 to vector<2x128xf32>
    %55 = arith.mulf %54, %53 : vector<2x128xf32>
    %56 = math.tanh %55 : vector<2x128xf32>
    %cst_28 = arith.constant 1.000000e+00 : f32
    %57 = vector.broadcast %cst_28 : f32 to vector<2x128xf32>
    %58 = arith.addf %57, %56 : vector<2x128xf32>
    %59 = arith.mulf %48, %58 : vector<2x128xf32>
    %60 = arith.truncf %59 : vector<2x128xf32> to vector<2x128xbf16>
    %c0_29 = arith.constant 0 : index
    %c0_30 = arith.constant 0 : index
    %c0_31 = arith.constant 0 : index
    %61 = vector.load %arg8[%c0_29, %c0_30, %c0_31] : memref<1x128x128xbf16, #tpu.memory_space<vmem>>, vector<1x128x128xbf16>
    %62 = vector.shape_cast %61 : vector<1x128x128xbf16> to vector<128x128xbf16>
    %cst_32 = arith.constant dense<0.000000e+00> : vector<2x128xf32>
    %63 = tpu.matmul %60, %62, %cst_32 {dimension_numbers = #tpu.dot_dimension_numbers<[1], [0], [0], [1], [0, 0, 1, 1], [], []>} : vector<2x128xbf16>, vector<128x128xbf16>, vector<2x128xf32> -> vector<2x128xf32>
    %c0_33 = arith.constant 0 : index
    %c0_34 = arith.constant 0 : index
    %c0_35 = arith.constant 0 : index
    %64 = vector.load %arg9[%c0_33, %c0_34, %c0_35] : memref<1x1x128xf32, #tpu.memory_space<vmem>>, vector<1x1x128xf32>
    %65 = vector.shape_cast %64 : vector<1x1x128xf32> to vector<1x128xf32>
    %66 = vector.broadcast %65 : vector<1x128xf32> to vector<2x128xf32>
    %67 = arith.addf %63, %66 : vector<2x128xf32>
    %68 = arith.addf %67, %46 : vector<2x128xf32>
    %69 = tpu.iota {dimensions = array<i32: 1>} : vector<1x128xi32>
    %c32_i32 = arith.constant 32 : i32
    %70 = vector.broadcast %c32_i32 : i32 to vector<1x128xi32>
    %71 = arith.cmpi slt, %69, %70 : vector<1x128xi32>
    %72 = arith.extui %71 : vector<1x128xi1> to vector<1x128xi32>
    %73 = arith.sitofp %72 : vector<1x128xi32> to vector<1x128xf32>
    %74 = vector.broadcast %73 : vector<1x128xf32> to vector<2x128xf32>
    %75 = arith.mulf %68, %74 : vector<2x128xf32>
    %cst_36 = arith.constant dense<0.000000e+00> : vector<2xf32>
    %76 = vector.multi_reduction <add>, %75, %cst_36 [1] : vector<2x128xf32> to vector<2xf32>
    %77 = vector.shape_cast %76 : vector<2xf32> to vector<2x1xf32>
    %cst_37 = arith.constant 3.125000e-02 : f32
    %78 = vector.broadcast %cst_37 : f32 to vector<2x1xf32>
    %79 = arith.mulf %77, %78 : vector<2x1xf32>
    %80 = vector.broadcast %79 : vector<2x1xf32> to vector<2x128xf32>
    %81 = arith.subf %68, %80 : vector<2x128xf32>
    %82 = vector.broadcast %73 : vector<1x128xf32> to vector<2x128xf32>
    %83 = arith.mulf %81, %82 : vector<2x128xf32>
    %84 = arith.mulf %83, %83 : vector<2x128xf32>
    %cst_38 = arith.constant dense<0.000000e+00> : vector<2xf32>
    %85 = vector.multi_reduction <add>, %84, %cst_38 [1] : vector<2x128xf32> to vector<2xf32>
    %86 = vector.shape_cast %85 : vector<2xf32> to vector<2x1xf32>
    %cst_39 = arith.constant 3.125000e-02 : f32
    %87 = vector.broadcast %cst_39 : f32 to vector<2x1xf32>
    %88 = arith.mulf %86, %87 : vector<2x1xf32>
    %89 = vector.broadcast %79 : vector<2x1xf32> to vector<2x128xf32>
    %90 = arith.subf %68, %89 : vector<2x128xf32>
    %cst_40 = arith.constant 9.99999974E-6 : f32
    %91 = vector.broadcast %cst_40 : f32 to vector<2x1xf32>
    %92 = arith.addf %88, %91 : vector<2x1xf32>
    %93 = math.rsqrt %92 : vector<2x1xf32>
    %94 = vector.broadcast %93 : vector<2x1xf32> to vector<2x128xf32>
    %95 = arith.mulf %90, %94 : vector<2x128xf32>
    %c0_41 = arith.constant 0 : index
    %c0_42 = arith.constant 0 : index
    %c0_43 = arith.constant 0 : index
    %96 = vector.load %arg10[%c0_41, %c0_42, %c0_43] : memref<1x1x128xf32, #tpu.memory_space<vmem>>, vector<1x1x128xf32>
    %97 = vector.shape_cast %96 : vector<1x1x128xf32> to vector<1x128xf32>
    %98 = vector.broadcast %97 : vector<1x128xf32> to vector<2x128xf32>
    %99 = arith.mulf %95, %98 : vector<2x128xf32>
    %c0_44 = arith.constant 0 : index
    %c0_45 = arith.constant 0 : index
    %c0_46 = arith.constant 0 : index
    %100 = vector.load %arg11[%c0_44, %c0_45, %c0_46] : memref<1x1x128xf32, #tpu.memory_space<vmem>>, vector<1x1x128xf32>
    %101 = vector.shape_cast %100 : vector<1x1x128xf32> to vector<1x128xf32>
    %102 = vector.broadcast %101 : vector<1x128xf32> to vector<2x128xf32>
    %103 = arith.addf %99, %102 : vector<2x128xf32>
    %c0_47 = arith.constant 0 : index
    %c0_48 = arith.constant 0 : index
    %c0_49 = arith.constant 0 : index
    %104 = vector.load %arg12[%c0_47, %c0_48, %c0_49] : memref<1x2x128xf32, #tpu.memory_space<vmem>>, vector<1x2x128xf32>
    %105 = vector.shape_cast %104 : vector<1x2x128xf32> to vector<2x128xf32>
    %106 = vector.shape_cast %103 : vector<2x128xf32> to vector<1x2x128xf32>
    tpu.vector_store %arg12[%c0_47, %c0_48, %c0_49], %106 {strides = array<i32>} : memref<1x2x128xf32, #tpu.memory_space<vmem>>, vector<1x2x128xf32>,
    return
  }
  func.func @transform_0(%arg0: i32) -> (i32, i32, i32) {
    %c0_i32 = arith.constant 0 : i32
    %c0_i32_0 = arith.constant 0 : i32
    %c0_i32_1 = arith.constant 0 : i32
    %c0_i32_2 = arith.constant 0 : i32
    return %c0_i32, %c0_i32_0, %c0_i32_1 : i32, i32, i32
  }
  func.func @transform_1(%arg0: i32) -> (i32, i32, i32) {
    %c0_i32 = arith.constant 0 : i32
    %c0_i32_0 = arith.constant 0 : i32
    %c0_i32_1 = arith.constant 0 : i32
    %c0_i32_2 = arith.constant 0 : i32
    return %c0_i32, %c0_i32_0, %c0_i32_1 : i32, i32, i32
  }
  func.func @transform_2(%arg0: i32) -> (i32, i32, i32, i32) {
    %c0_i32 = arith.constant 0 : i32
    %c0_i32_0 = arith.constant 0 : i32
    %c0_i32_1 = arith.constant 0 : i32
    %c0_i32_2 = arith.constant 0 : i32
    return %arg0, %c0_i32, %c0_i32_0, %c0_i32_1 : i32, i32, i32, i32
  }
  func.func @transform_3(%arg0: i32) -> (i32, i32, i32) {
    %c0_i32 = arith.constant 0 : i32
    %c0_i32_0 = arith.constant 0 : i32
    %c0_i32_1 = arith.constant 0 : i32
    return %arg0, %c0_i32, %c0_i32_0 : i32, i32, i32
  }
  func.func @transform_4(%arg0: i32) -> (i32, i32, i32) {
    %c0_i32 = arith.constant 0 : i32
    %c0_i32_0 = arith.constant 0 : i32
    %c0_i32_1 = arith.constant 0 : i32
    return %arg0, %c0_i32, %c0_i32_0 : i32, i32, i32
  }
  func.func @transform_5(%arg0: i32) -> (i32, i32, i32) {
    %c0_i32 = arith.constant 0 : i32
    %c0_i32_0 = arith.constant 0 : i32
    %c0_i32_1 = arith.constant 0 : i32
    return %arg0, %c0_i32, %c0_i32_0 : i32, i32, i32
  }
  func.func @transform_6(%arg0: i32) -> (i32, i32, i32) {
    %c0_i32 = arith.constant 0 : i32
    %c0_i32_0 = arith.constant 0 : i32
    %c0_i32_1 = arith.constant 0 : i32
    return %arg0, %c0_i32, %c0_i32_0 : i32, i32, i32
  }
  func.func @transform_7(%arg0: i32) -> (i32, i32, i32) {
    %c0_i32 = arith.constant 0 : i32
    %c0_i32_0 = arith.constant 0 : i32
    %c0_i32_1 = arith.constant 0 : i32
    return %arg0, %c0_i32, %c0_i32_0 : i32, i32, i32
  }
  func.func @transform_8(%arg0: i32) -> (i32, i32, i32) {
    %c0_i32 = arith.constant 0 : i32
    %c0_i32_0 = arith.constant 0 : i32
    %c0_i32_1 = arith.constant 0 : i32
    return %arg0, %c0_i32, %c0_i32_0 : i32, i32, i32
  }
  func.func @transform_9(%arg0: i32) -> (i32, i32, i32) {
    %c0_i32 = arith.constant 0 : i32
    %c0_i32_0 = arith.constant 0 : i32
    %c0_i32_1 = arith.constant 0 : i32
    return %arg0, %c0_i32, %c0_i32_0 : i32, i32, i32
  }
  func.func @transform_10(%arg0: i32) -> (i32, i32, i32) {
    %c0_i32 = arith.constant 0 : i32
    %c0_i32_0 = arith.constant 0 : i32
    %c0_i32_1 = arith.constant 0 : i32
    return %arg0, %c0_i32, %c0_i32_0 : i32, i32, i32
  }
  func.func @transform_11(%arg0: i32) -> (i32, i32, i32) {
    %c0_i32 = arith.constant 0 : i32
    %c0_i32_0 = arith.constant 0 : i32
    %c0_i32_1 = arith.constant 0 : i32
    return %arg0, %c0_i32, %c0_i32_0 : i32, i32, i32
  }
}

</mosaic_0001>

<llo_original>
// kernel: clip_forward.3
$region0: #{clip_forward.3}
  #allocation0 [shape = 'u32[]', space=smem, size = 0x4, offset = 0x4, fixed_abs, tag = 'smem constant byte address 0x4 - core index']
  #allocation1 [shape = 'u32[144,128]{1,0:T(1,128)}', space=vmem, size = 0x12000, scoped, tag = 'internal scratch']
  %s0 = inlined_call_operand.vmem [shape: f32[2,2,128], index: 0, kind: input, shape index: {}]
  %s1 = inlined_call_operand.hbm [shape: f32[1,1], index: 1, kind: output, shape index: {}]
  %s2 = sld [smem:[#allocation0]]
  $region14: #{clip_forward.3} parent=0
    _
  %s4 = ssub.s32 1, %s2
  %s5 = scalar_select 0, %s4, %s2
  $region1: #{clip_forward.3} parent=0
    #allocation2 [shape = 'u8[512]{0}', space=smem, size = 0x200, scoped, tag = 'output window, operand 0, single buffered']
    #allocation3 [shape = 's32[1]{0}', space=sflag, size = 0x4, scoped, tag = 'scoped memory for clip_forward.3']
    %6 = vsyncpa [#allocation3], 0
    // Predicated region
    $region2: #{clip_forward.3} parent=1 // pred_check
      _
    $region3: #{clip_forward.3} parent=1 // pred_check_branch
      %8 = sbr.rel (0) target = $region5
    $region4: #{clip_forward.3} parent=1 // pred_region
      _
    $region5: #{clip_forward.3} parent=1 // pred_fallthru
      _
    %v9 = vld [vmem:[%s0] sm:$0x3]
    %s10 = scalar_lea.vmem %s0, 2
    %v11 = vld [vmem:[%s10] sm:$0x3]
    %12 = vmatprep.subr.mxu0 0.0
    %13 = vmatpush1.xpose.msra.mxu0 %v9
    %14 = vmatprep.subr.mxu0 0.0
    %15 = vmatpush1.xpose.msra.mxu0 0.0
    %16 = vmatprep.subr.mxu0 0.0
    %17 = vmatpush1.xpose.msra.mxu0 0.0
    %18 = vmatprep.subr.mxu0 0.0
    %19 = vmatpush1.xpose.msra.mxu0 0.0
    %20 = vmatprep.subr.mxu0 0.0
    %21 = vmatpush1.xpose.msra.mxu0 0.0
    %22 = vmatprep.subr.mxu0 0.0
    %23 = vmatpush1.xpose.msra.mxu0 0.0
    %24 = vmatprep.subr.mxu0 0.0
    %25 = vmatpush1.xpose.msra.mxu0 0.0
    %26 = vmatprep.subr.mxu0 0.0
    %27 = vmatpush1.xpose.msra.mxu0 0.0
    %28 = vmatprep.subr.mxu0 0.0
    %29 = vmatpush1.xpose.msra.mxu0 0.0
    %30 = vmatprep.subr.mxu0 0.0
    %31 = vmatpush1.xpose.msra.mxu0 0.0
    %32 = vmatprep.subr.mxu0 0.0
    %33 = vmatpush1.xpose.msra.mxu0 0.0
    %34 = vmatprep.subr.mxu0 0.0
    %35 = vmatpush1.xpose.msra.mxu0 0.0
    %36 = vmatprep.subr.mxu0 0.0
    %37 = vmatpush1.xpose.msra.mxu0 0.0
    %38 = vmatprep.subr.mxu0 0.0
    %39 = vmatpush1.xpose.msra.mxu0 0.0
    %40 = vmatprep.subr.mxu0 0.0
    %41 = vmatpush1.xpose.msra.mxu0 0.0
    %42 = vmatprep.subr.mxu0 0.0
    %43 = vmatpush1.xpose.msra.mxu0 0.0
    %44 = vmatprep.subr.mxu0 0.0
    %45 = vmatpush1.xpose.msra.mxu0 0.0
    %46 = vmatprep.subr.mxu0 0.0
    %47 = vmatpush1.xpose.msra.mxu0 0.0
    %48 = vmatprep.subr.mxu0 0.0
    %49 = vmatpush1.xpose.msra.mxu0 0.0
    %50 = vmatprep.subr.mxu0 0.0
    %51 = vmatpush1.xpose.msra.mxu0 0.0
    %52 = vmatprep.subr.mxu0 0.0
    %53 = vmatpush1.xpose.msra.mxu0 0.0
    %54 = vmatprep.subr.mxu0 0.0
    %55 = vmatpush1.xpose.msra.mxu0 0.0
    %56 = vmatprep.subr.mxu0 0.0
    %57 = vmatpush1.xpose.msra.mxu0 0.0
    %58 = vmatprep.subr.mxu0 0.0
    %59 = vmatpush1.xpose.msra.mxu0 0.0
    %60 = vmatprep.subr.mxu0 0.0
    %61 = vmatpush1.xpose.msra.mxu0 0.0
    %62 = vmatprep.subr.mxu0 0.0
    %63 = vmatpush1.xpose.msra.mxu0 0.0
    %64 = vmatprep.subr.mxu0 0.0
    %65 = vmatpush1.xpose.msra.mxu0 0.0
    %66 = vmatprep.subr.mxu0 0.0
    %67 = vmatpush1.xpose.msra.mxu0 0.0
    %68 = vmatprep.subr.mxu0 0.0
    %69 = vmatpush1.xpose.msra.mxu0 0.0
    %70 = vmatprep.subr.mxu0 0.0
    %71 = vmatpush1.xpose.msra.mxu0 0.0
    %72 = vmatprep.subr.mxu0 0.0
    %73 = vmatpush1.xpose.msra.mxu0 0.0
    %74 = vmatprep.subr.mxu0 0.0
    %75 = vmatpush1.xpose.msra.mxu0 0.0
    %76 = vmatprep.mubr.f32.mxu0 0.0
    %77 = vmatmul.mubr.f32.gmra.mrb[0].mxu0 %v11
    %v78 = vpop.f32.mrb[0].mxu0
    %v79 = vadd.f32 0.0, %v78
    %v80 = vpop.f32.mrb[0].mxu0
    %81 = vdwg.mxu0
    %82 = vmatprep.subr.mxu0 0.0
    %83 = vmatpush1.xpose.msra.mxu0 %v11
    %84 = vmatprep.subr.mxu0 0.0
    %85 = vmatpush1.xpose.msra.mxu0 0.0
    %86 = vmatprep.subr.mxu0 0.0
    %87 = vmatpush1.xpose.msra.mxu0 0.0
    %88 = vmatprep.subr.mxu0 0.0
    %89 = vmatpush1.xpose.msra.mxu0 0.0
    %90 = vmatprep.subr.mxu0 0.0
    %91 = vmatpush1.xpose.msra.mxu0 0.0
    %92 = vmatprep.subr.mxu0 0.0
    %93 = vmatpush1.xpose.msra.mxu0 0.0
    %94 = vmatprep.subr.mxu0 0.0
    %95 = vmatpush1.xpose.msra.mxu0 0.0
    %96 = vmatprep.subr.mxu0 0.0
    %97 = vmatpush1.xpose.msra.mxu0 0.0
    %98 = vmatprep.subr.mxu0 0.0
    %99 = vmatpush1.xpose.msra.mxu0 0.0
    %100 = vmatprep.subr.mxu0 0.0
    %101 = vmatpush1.xpose.msra.mxu0 0.0
    %102 = vmatprep.subr.mxu0 0.0
    %103 = vmatpush1.xpose.msra.mxu0 0.0
    %104 = vmatprep.subr.mxu0 0.0
    %105 = vmatpush1.xpose.msra.mxu0 0.0
    %106 = vmatprep.subr.mxu0 0.0
    %107 = vmatpush1.xpose.msra.mxu0 0.0
    %108 = vmatprep.subr.mxu0 0.0
    %109 = vmatpush1.xpose.msra.mxu0 0.0
    %110 = vmatprep.subr.mxu0 0.0
    %111 = vmatpush1.xpose.msra.mxu0 0.0
    %112 = vmatprep.subr.mxu0 0.0
    %113 = vmatpush1.xpose.msra.mxu0 0.0
    %114 = vmatprep.subr.mxu0 0.0
    %115 = vmatpush1.xpose.msra.mxu0 0.0
    %116 = vmatprep.subr.mxu0 0.0
    %117 = vmatpush1.xpose.msra.mxu0 0.0
    %118 = vmatprep.subr.mxu0 0.0
    %119 = vmatpush1.xpose.msra.mxu0 0.0
    %120 = vmatprep.subr.mxu0 0.0
    %121 = vmatpush1.xpose.msra.mxu0 0.0
    %122 = vmatprep.subr.mxu0 0.0
    %123 = vmatpush1.xpose.msra.mxu0 0.0
    %124 = vmatprep.subr.mxu0 0.0
    %125 = vmatpush1.xpose.msra.mxu0 0.0
    %126 = vmatprep.subr.mxu0 0.0
    %127 = vmatpush1.xpose.msra.mxu0 0.0
    %128 = vmatprep.subr.mxu0 0.0
    %129 = vmatpush1.xpose.msra.mxu0 0.0
    %130 = vmatprep.subr.mxu0 0.0
    %131 = vmatpush1.xpose.msra.mxu0 0.0
    %132 = vmatprep.subr.mxu0 0.0
    %133 = vmatpush1.xpose.msra.mxu0 0.0
    %134 = vmatprep.subr.mxu0 0.0
    %135 = vmatpush1.xpose.msra.mxu0 0.0
    %136 = vmatprep.subr.mxu0 0.0
    %137 = vmatpush1.xpose.msra.mxu0 0.0
    %138 = vmatprep.subr.mxu0 0.0
    %139 = vmatpush1.xpose.msra.mxu0 0.0
    %140 = vmatprep.subr.mxu0 0.0
    %141 = vmatpush1.xpose.msra.mxu0 0.0
    %142 = vmatprep.subr.mxu0 0.0
    %143 = vmatpush1.xpose.msra.mxu0 0.0
    %144 = vmatprep.subr.mxu0 0.0
    %145 = vmatpush1.xpose.msra.mxu0 0.0
    %146 = vmatprep.mubr.f32.mxu0 0.0
    %147 = vmatmul.mubr.f32.gmra.mrb[0].mxu0 %v11
    %v148 = vpop.f32.mrb[0].mxu0
    %v149 = vadd.f32 0.0, %v148
    %v150 = vpop.f32.mrb[0].mxu0
    %151 = vdwg.mxu0
    %152 = vmatprep.subr.mxu0 0.0
    %153 = vmatpush1.xpose.msra.mxu0 %v9
    %154 = vmatprep.subr.mxu0 0.0
    %155 = vmatpush1.xpose.msra.mxu0 0.0
    %156 = vmatprep.subr.mxu0 0.0
    %157 = vmatpush1.xpose.msra.mxu0 0.0
    %158 = vmatprep.subr.mxu0 0.0
    %159 = vmatpush1.xpose.msra.mxu0 0.0
    %160 = vmatprep.subr.mxu0 0.0
    %161 = vmatpush1.xpose.msra.mxu0 0.0
    %162 = vmatprep.subr.mxu0 0.0
    %163 = vmatpush1.xpose.msra.mxu0 0.0
    %164 = vmatprep.subr.mxu0 0.0
    %165 = vmatpush1.xpose.msra.mxu0 0.0
    %166 = vmatprep.subr.mxu0 0.0
    %167 = vmatpush1.xpose.msra.mxu0 0.0
    %168 = vmatprep.subr.mxu0 0.0
    %169 = vmatpush1.xpose.msra.mxu0 0.0
    %170 = vmatprep.subr.mxu0 0.0
    %171 = vmatpush1.xpose.msra.mxu0 0.0
    %172 = vmatprep.subr.mxu0 0.0
    %173 = vmatpush1.xpose.msra.mxu0 0.0
    %174 = vmatprep.subr.mxu0 0.0
    %175 = vmatpush1.xpose.msra.mxu0 0.0
    %176 = vmatprep.subr.mxu0 0.0
    %177 = vmatpush1.xpose.msra.mxu0 0.0
    %178 = vmatprep.subr.mxu0 0.0
    %179 = vmatpush1.xpose.msra.mxu0 0.0
    %180 = vmatprep.subr.mxu0 0.0
    %181 = vmatpush1.xpose.msra.mxu0 0.0
    %182 = vmatprep.subr.mxu0 0.0
    %183 = vmatpush1.xpose.msra.mxu0 0.0
    %184 = vmatprep.subr.mxu0 0.0
    %185 = vmatpush1.xpose.msra.mxu0 0.0
    %186 = vmatprep.subr.mxu0 0.0
    %187 = vmatpush1.xpose.msra.mxu0 0.0
    %188 = vmatprep.subr.mxu0 0.0
    %189 = vmatpush1.xpose.msra.mxu0 0.0
    %190 = vmatprep.subr.mxu0 0.0
    %191 = vmatpush1.xpose.msra.mxu0 0.0
    %192 = vmatprep.subr.mxu0 0.0
    %193 = vmatpush1.xpose.msra.mxu0 0.0
    %194 = vmatprep.subr.mxu0 0.0
    %195 = vmatpush1.xpose.msra.mxu0 0.0
    %196 = vmatprep.subr.mxu0 0.0
    %197 = vmatpush1.xpose.msra.mxu0 0.0
    %198 = vmatprep.subr.mxu0 0.0
    %199 = vmatpush1.xpose.msra.mxu0 0.0
    %200 = vmatprep.subr.mxu0 0.0
    %201 = vmatpush1.xpose.msra.mxu0 0.0
    %202 = vmatprep.subr.mxu0 0.0
    %203 = vmatpush1.xpose.msra.mxu0 0.0
    %204 = vmatprep.subr.mxu0 0.0
    %205 = vmatpush1.xpose.msra.mxu0 0.0
    %206 = vmatprep.subr.mxu0 0.0
    %207 = vmatpush1.xpose.msra.mxu0 0.0
    %208 = vmatprep.subr.mxu0 0.0
    %209 = vmatpush1.xpose.msra.mxu0 0.0
    %210 = vmatprep.subr.mxu0 0.0
    %211 = vmatpush1.xpose.msra.mxu0 0.0
    %212 = vmatprep.subr.mxu0 0.0
    %213 = vmatpush1.xpose.msra.mxu0 0.0
    %214 = vmatprep.subr.mxu0 0.0
    %215 = vmatpush1.xpose.msra.mxu0 0.0
    %216 = vmatprep.mubr.f32.mxu0 0.0
    %217 = vmatmul.mubr.f32.gmra.mrb[0].mxu0 %v9
    %v218 = vpop.f32.mrb[0].mxu0
    %v219 = vadd.f32 %v149, %v218
    %v220 = vpop.f32.mrb[0].mxu0
    %221 = vdwg.mxu0
    %v222 = vmul.f32 %v219, 0.5
    %vm223 = vcmask 9216
    %v224 = vsel %vm223, %v222, -inf
    %225 = vmax.xlane.f32.xlu0 %v224
    %v226 = vpop.xlane.xlu0 %225
    %v227 = vsub.f32 %v222, %v226
    %v228 = vmul.f32 %v227, 1.442695
    %v229 = vpow.pop %v228
    %v230 = vsel %vm223, %v229, 0.0
    %231 = vadd.xlane.f32.xlu0 %v230
    %v232 = vpop.xlane.xlu0 %231
    %v233 = vrcp.pop %v232
    %v234 = vmul.f32 %v229, %v233
    %v235 = vsub.f32 0.0, %v234
    %v236 = vsel %vm223, %v79, -inf
    %237 = vmax.xlane.f32.xlu0 %v236
    %v238 = vpop.xlane.xlu0 %237
    %v239 = vsub.f32 %v79, %v238
    %v240 = vmul.f32 %v239, 1.442695
    %v241 = vpow.pop %v240
    %v242 = vsel %vm223, %v241, 0.0
    %243 = vadd.xlane.f32.xlu0 %v242
    %v244 = vpop.xlane.xlu0 %243
    %v245 = vlog2.pop %v244
    %v246 = vmul.f32 %v245, 0.6931472
    %v247 = vsub.f32 %v239, %v246
    %v248 = vmul.f32 %v235, %v247
    %v249 = vsel %vm223, %v248, 0.0
    %250 = vadd.xlane.f32.xlu0 %v249
    %v251 = vpop.xlane.xlu0 %250
    %v252 = vrot.slane %v236, 4
    %v253 = vmax.f32 %v236, %v252
    %v254 = vrot.slane %v253, 2
    %v255 = vmax.f32 %v253, %v254
    %v256 = vrot.slane %v255, 1
    %v257 = vmax.f32 %v255, %v256
    %v258 = vsub.f32 %v79, %v257
    %v259 = vmul.f32 %v258, 1.442695
    %v260 = vpow.pop %v259
    %v261 = vsel %vm223, %v260, 0.0
    %v262 = vrot.slane %v261, 4
    %v263 = vadd.f32 %v261, %v262
    %v264 = vrot.slane %v263, 2
    %v265 = vadd.f32 %v263, %v264
    %v266 = vrot.slane %v265, 1
    %v267 = vadd.f32 %v265, %v266
    %v268 = vlog2.pop %v267
    %v269 = vmul.f32 %v268, 0.6931472
    %v270 = vsub.f32 %v258, %v269
    %v271 = vmul.f32 %v235, %v270
    %v272 = vsel %vm223, %v271, 0.0
    %v273 = vrot.slane %v272, 4
    %v274 = vadd.f32 %v272, %v273
    %v275 = vrot.slane %v274, 2
    %v276 = vadd.f32 %v274, %v275
    %v277 = vrot.slane %v276, 1
    %v278 = vadd.f32 %v276, %v277
    %v280 = vlaneseq
    %v281 = vand.u32 %v280, 127
    %v282 = vlaneseq
    %v283 = vshrl.u32 %v282, 7
    %v284 = vsub.s32 %v281, %v283
    %v285 = vrot.slane %v251, %v284
    %v287 = vadd.f32 %v278, %v285
    %v288 = vmul.f32 %v287, 0.5
    %vm289 = vcmask 8192
    %v290 = vsel %vm289, %v288, 0.0
    %291 = vadd.xlane.f32.xlu0 %v290
    %v292 = vpop.xlane.xlu0 %291
    %s293 = vtos %v292
    %v294 = vrcp.pop 2.0
    %s295 = vtos %v294
    %s296 = smul.f32 %s293, %s295
    %s297 = scalar_lea.smem [#allocation2], 0
    %298 = sst [smem:[%s297]] %s296
    // Predicated region
    $region6: #{clip_forward.3} parent=1 // pred_check
      _
    $region7: #{clip_forward.3} parent=1 // pred_check_branch
      %300 = sbr.rel (0) target = $region9
    $region8: #{clip_forward.3} parent=1 // pred_region
      %s302 = ssub.s32 16, 16
      %303 = vsyncadd [#allocation3], %s302
      %306 = dma.smem_to_hbm [#allocation2], 16, %s1, [#allocation3]
    $region9: #{clip_forward.3} parent=1 // pred_fallthru
      _
    // Predicated region
    $region10: #{clip_forward.3} parent=1 // pred_check
      _
    $region11: #{clip_forward.3} parent=1 // pred_check_branch
      %308 = sbr.rel (0) target = $region13
    $region12: #{clip_forward.3} parent=1 // pred_region
      %309 = dma.done [#allocation3], 16
    $region13: #{clip_forward.3} parent=1 // pred_fallthru
      _
    %310 = sfence
    %311 = vsyncpa [#allocation3], 1

// kernel: clip_forward.2
$region0: #{clip_forward.2}
  #allocation0 [shape = 'u32[]', space=smem, size = 0x4, offset = 0x4, fixed_abs, tag = 'smem constant byte address 0x4 - core index']
  #allocation1 [shape = 'u32[144,128]{1,0:T(1,128)}', space=vmem, size = 0x12000, scoped, tag = 'internal scratch']
  %s0 = inlined_call_operand.vmem [shape: bf16[1,256,1], index: 0, kind: input, shape index: {}]
  %s1 = inlined_call_operand.vmem [shape: bf16[1,256,1], index: 1, kind: input, shape index: {}]
  %s2 = inlined_call_operand.vmem [shape: bf16[2,2,290,8], index: 2, kind: input, shape index: {}]
  %s3 = inlined_call_operand.vmem [shape: bf16[2,72,128], index: 3, kind: input, shape index: {}]
  %s4 = inlined_call_operand.vmem [shape: f32[2,1,128], index: 4, kind: input, shape index: {}]
  %s5 = inlined_call_operand.vmem [shape: bf16[2,128,128], index: 5, kind: input, shape index: {}]
  %s6 = inlined_call_operand.vmem [shape: f32[2,1,128], index: 6, kind: input, shape index: {}]
  %s7 = inlined_call_operand.vmem [shape: bf16[2,128,128], index: 7, kind: input, shape index: {}]
  %s8 = inlined_call_operand.vmem [shape: f32[2,1,128], index: 8, kind: input, shape index: {}]
  %s9 = inlined_call_operand.vmem [shape: f32[2,1,128], index: 9, kind: input, shape index: {}]
  %s10 = inlined_call_operand.vmem [shape: f32[2,1,128], index: 10, kind: input, shape index: {}]
  %s11 = inlined_call_operand.vmem [shape: f32[2,2,128], index: 11, kind: output, shape index: {}]
  %s12 = sld [smem:[#allocation0]]
  $region77: #{clip_forward.2} parent=0
    _
  %s14 = ssub.s32 1, %s12
  %s15 = scalar_select 0, %s14, %s12
  loop: start=0, step=1, limit=4
  $region2: #{clip_forward.2} parent=0 // loop_pre_header
    _
  $region3: #{clip_forward.2} parent=0 // loop_header
    %s17 = sphi 0, %s21
    %p18 = scmp.ge.s32.totalorder %s17, 4
    %s25 = sphi 0, %s25
    %s27 = sphi 0, %s25
    %s28 = sphi 0, %s27
    %s42 = sphi 0, %s28
    %s46 = sphi 0, %s46
    %s48 = sphi 0, %s46
    %s49 = sphi 0, %s48
    %s63 = sphi 0, %s49
    %s69 = sphi 0, %s71
    %s72 = sphi 0, %s69
    %s73 = sphi 0, %s72
    %s89 = sphi 0, %s73
    %s95 = sphi 0, %s97
    %s98 = sphi 0, %s95
    %s99 = sphi 0, %s98
    %s115 = sphi 0, %s99
    %s121 = sphi 0, %s123
    %s124 = sphi 0, %s121
    %s125 = sphi 0, %s124
    %s141 = sphi 0, %s125
    %s147 = sphi 0, %s149
    %s150 = sphi 0, %s147
    %s151 = sphi 0, %s150
    %s167 = sphi 0, %s151
    %s173 = sphi 0, %s175
    %s176 = sphi 0, %s173
    %s177 = sphi 0, %s176
    %s193 = sphi 0, %s177
    %s199 = sphi 0, %s201
    %s202 = sphi 0, %s199
    %s203 = sphi 0, %s202
    %s219 = sphi 0, %s203
    %s225 = sphi 0, %s227
    %s228 = sphi 0, %s225
    %s229 = sphi 0, %s228
    %s245 = sphi 0, %s229
    %s251 = sphi 0, %s253
    %s254 = sphi 0, %s251
    %s255 = sphi 0, %s254
    %s271 = sphi 0, %s255
    %s277 = sphi 0, %s279
    %s280 = sphi 0, %s277
    %s281 = sphi 0, %s280
    %s297 = sphi 0, %s281
    %s303 = sphi 0, %s305
    %s306 = sphi 0, %s303
    %s307 = sphi 0, %s306
    %s323 = sphi 0, %s307
  $region4: #{clip_forward.2} parent=0 // loop_header_branch
    %20 = sbr.rel (%p18) target = $region8
  $region5: #{clip_forward.2} parent=0 // loop_body
    %s22 = ssub.s32 %s17, 1
    %s23 = ssub.s32 %s17, 2
    %s24 = sadd.s32 %s17, 1
    %s26 = sadd.s32 %s25, 1
    %p29 = scmp.eq.s32.totalorder %s17, 1
    %p30 = scmp.ne.s32.totalorder %s25, %s27
    %p31 = scmp.eq.s32.totalorder %s17, 0
    %p32 = por %p30, %p31
    %p33 = scmp.ne.s32.totalorder %s25, %s27
    %p34 = scmp.eq.s32.totalorder %s22, 1
    %p35 = por %p33, %p34
    %p36 = scmp.ne.s32.totalorder %s27, %s28
    %p37 = scmp.eq.s32.totalorder %s22, 0
    %p38 = por %p36, %p37
    %p39 = scmp.ne.s32.totalorder %s27, %s28
    %p40 = scmp.eq.s32.totalorder %s23, 1
    %p41 = por %p39, %p40
    %p43 = scmp.ne.s32.totalorder %s28, %s42
    %p44 = scmp.eq.s32.totalorder %s23, 0
    %p45 = por %p43, %p44
    %s47 = sadd.s32 %s46, 1
    %p50 = scmp.eq.s32.totalorder %s17, 1
    %p51 = scmp.ne.s32.totalorder %s46, %s48
    %p52 = scmp.eq.s32.totalorder %s17, 0
    %p53 = por %p51, %p52
    %p54 = scmp.ne.s32.totalorder %s46, %s48
    %p55 = scmp.eq.s32.totalorder %s22, 1
    %p56 = por %p54, %p55
    %p57 = scmp.ne.s32.totalorder %s48, %s49
    %p58 = scmp.eq.s32.totalorder %s22, 0
    %p59 = por %p57, %p58
    %p60 = scmp.ne.s32.totalorder %s48, %s49
    %p61 = scmp.eq.s32.totalorder %s23, 1
    %p62 = por %p60, %p61
    %p64 = scmp.ne.s32.totalorder %s49, %s63
    %p65 = scmp.eq.s32.totalorder %s23, 0
    %p66 = por %p64, %p65
    %s67 = ssub.s32 %s17, %s24
    %p68 = scmp.eq.s32.totalorder %s67, 0
    %s70 = sadd.s32 %s69, 1
    %s71 = scalar_select %p68, %s69, %s70
    %p74 = pneg %p68
    %p75 = scmp.eq.s32.totalorder %s17, 1
    %p76 = por %p74, %p75
    %p77 = scmp.ne.s32.totalorder %s69, %s72
    %p78 = scmp.eq.s32.totalorder %s17, 0
    %p79 = por %p77, %p78
    %p80 = scmp.ne.s32.totalorder %s69, %s72
    %p81 = scmp.eq.s32.totalorder %s22, 1
    %p82 = por %p80, %p81
    %p83 = scmp.ne.s32.totalorder %s72, %s73
    %p84 = scmp.eq.s32.totalorder %s22, 0
    %p85 = por %p83, %p84
    %p86 = scmp.ne.s32.totalorder %s72, %s73
    %p87 = scmp.eq.s32.totalorder %s23, 1
    %p88 = por %p86, %p87
    %p90 = scmp.ne.s32.totalorder %s73, %s89
    %p91 = scmp.eq.s32.totalorder %s23, 0
    %p92 = por %p90, %p91
    %s93 = ssub.s32 %s17, %s24
    %p94 = scmp.eq.s32.totalorder %s93, 0
    %s96 = sadd.s32 %s95, 1
    %s97 = scalar_select %p94, %s95, %s96
    %p100 = pneg %p94
    %p101 = scmp.eq.s32.totalorder %s17, 1
    %p102 = por %p100, %p101
    %p103 = scmp.ne.s32.totalorder %s95, %s98
    %p104 = scmp.eq.s32.totalorder %s17, 0
    %p105 = por %p103, %p104
    %p106 = scmp.ne.s32.totalorder %s95, %s98
    %p107 = scmp.eq.s32.totalorder %s22, 1
    %p108 = por %p106, %p107
    %p109 = scmp.ne.s32.totalorder %s98, %s99
    %p110 = scmp.eq.s32.totalorder %s22, 0
    %p111 = por %p109, %p110
    %p112 = scmp.ne.s32.totalorder %s98, %s99
    %p113 = scmp.eq.s32.totalorder %s23, 1
    %p114 = por %p112, %p113
    %p116 = scmp.ne.s32.totalorder %s99, %s115
    %p117 = scmp.eq.s32.totalorder %s23, 0
    %p118 = por %p116, %p117
    %s119 = ssub.s32 %s17, %s24
    %p120 = scmp.eq.s32.totalorder %s119, 0
    %s122 = sadd.s32 %s121, 1
    %s123 = scalar_select %p120, %s121, %s122
    %p126 = pneg %p120
    %p127 = scmp.eq.s32.totalorder %s17, 1
    %p128 = por %p126, %p127
    %p129 = scmp.ne.s32.totalorder %s121, %s124
    %p130 = scmp.eq.s32.totalorder %s17, 0
    %p131 = por %p129, %p130
    %p132 = scmp.ne.s32.totalorder %s121, %s124
    %p133 = scmp.eq.s32.totalorder %s22, 1
    %p134 = por %p132, %p133
    %p135 = scmp.ne.s32.totalorder %s124, %s125
    %p136 = scmp.eq.s32.totalorder %s22, 0
    %p137 = por %p135, %p136
    %p138 = scmp.ne.s32.totalorder %s124, %s125
    %p139 = scmp.eq.s32.totalorder %s23, 1
    %p140 = por %p138, %p139
    %p142 = scmp.ne.s32.totalorder %s125, %s141
    %p143 = scmp.eq.s32.totalorder %s23, 0
    %p144 = por %p142, %p143
    %s145 = ssub.s32 %s17, %s24
    %p146 = scmp.eq.s32.totalorder %s145, 0
    %s148 = sadd.s32 %s147, 1
    %s149 = scalar_select %p146, %s147, %s148
    %p152 = pneg %p146
    %p153 = scmp.eq.s32.totalorder %s17, 1
    %p154 = por %p152, %p153
    %p155 = scmp.ne.s32.totalorder %s147, %s150
    %p156 = scmp.eq.s32.totalorder %s17, 0
    %p157 = por %p155, %p156
    %p158 = scmp.ne.s32.totalorder %s147, %s150
    %p159 = scmp.eq.s32.totalorder %s22, 1
    %p160 = por %p158, %p159
    %p161 = scmp.ne.s32.totalorder %s150, %s151
    %p162 = scmp.eq.s32.totalorder %s22, 0
    %p163 = por %p161, %p162
    %p164 = scmp.ne.s32.totalorder %s150, %s151
    %p165 = scmp.eq.s32.totalorder %s23, 1
    %p166 = por %p164, %p165
    %p168 = scmp.ne.s32.totalorder %s151, %s167
    %p169 = scmp.eq.s32.totalorder %s23, 0
    %p170 = por %p168, %p169
    %s171 = ssub.s32 %s17, %s24
    %p172 = scmp.eq.s32.totalorder %s171, 0
    %s174 = sadd.s32 %s173, 1
    %s175 = scalar_select %p172, %s173, %s174
    %p178 = pneg %p172
    %p179 = scmp.eq.s32.totalorder %s17, 1
    %p180 = por %p178, %p179
    %p181 = scmp.ne.s32.totalorder %s173, %s176
    %p182 = scmp.eq.s32.totalorder %s17, 0
    %p183 = por %p181, %p182
    %p184 = scmp.ne.s32.totalorder %s173, %s176
    %p185 = scmp.eq.s32.totalorder %s22, 1
    %p186 = por %p184, %p185
    %p187 = scmp.ne.s32.totalorder %s176, %s177
    %p188 = scmp.eq.s32.totalorder %s22, 0
    %p189 = por %p187, %p188
    %p190 = scmp.ne.s32.totalorder %s176, %s177
    %p191 = scmp.eq.s32.totalorder %s23, 1
    %p192 = por %p190, %p191
    %p194 = scmp.ne.s32.totalorder %s177, %s193
    %p195 = scmp.eq.s32.totalorder %s23, 0
    %p196 = por %p194, %p195
    %s197 = ssub.s32 %s17, %s24
    %p198 = scmp.eq.s32.totalorder %s197, 0
    %s200 = sadd.s32 %s199, 1
    %s201 = scalar_select %p198, %s199, %s200
    %p204 = pneg %p198
    %p205 = scmp.eq.s32.totalorder %s17, 1
    %p206 = por %p204, %p205
    %p207 = scmp.ne.s32.totalorder %s199, %s202
    %p208 = scmp.eq.s32.totalorder %s17, 0
    %p209 = por %p207, %p208
    %p210 = scmp.ne.s32.totalorder %s199, %s202
    %p211 = scmp.eq.s32.totalorder %s22, 1
    %p212 = por %p210, %p211
    %p213 = scmp.ne.s32.totalorder %s202, %s203
    %p214 = scmp.eq.s32.totalorder %s22, 0
    %p215 = por %p213, %p214
    %p216 = scmp.ne.s32.totalorder %s202, %s203
    %p217 = scmp.eq.s32.totalorder %s23, 1
    %p218 = por %p216, %p217
    %p220 = scmp.ne.s32.totalorder %s203, %s219
    %p221 = scmp.eq.s32.totalorder %s23, 0
    %p222 = por %p220, %p221
    %s223 = ssub.s32 %s17, %s24
    %p224 = scmp.eq.s32.totalorder %s223, 0
    %s226 = sadd.s32 %s225, 1
    %s227 = scalar_select %p224, %s225, %s226
    %p230 = pneg %p224
    %p231 = scmp.eq.s32.totalorder %s17, 1
    %p232 = por %p230, %p231
    %p233 = scmp.ne.s32.totalorder %s225, %s228
    %p234 = scmp.eq.s32.totalorder %s17, 0
    %p235 = por %p233, %p234
    %p236 = scmp.ne.s32.totalorder %s225, %s228
    %p237 = scmp.eq.s32.totalorder %s22, 1
    %p238 = por %p236, %p237
    %p239 = scmp.ne.s32.totalorder %s228, %s229
    %p240 = scmp.eq.s32.totalorder %s22, 0
    %p241 = por %p239, %p240
    %p242 = scmp.ne.s32.totalorder %s228, %s229
    %p243 = scmp.eq.s32.totalorder %s23, 1
    %p244 = por %p242, %p243
    %p246 = scmp.ne.s32.totalorder %s229, %s245
    %p247 = scmp.eq.s32.totalorder %s23, 0
    %p248 = por %p246, %p247
    %s249 = ssub.s32 %s17, %s24
    %p250 = scmp.eq.s32.totalorder %s249, 0
    %s252 = sadd.s32 %s251, 1
    %s253 = scalar_select %p250, %s251, %s252
    %p256 = pneg %p250
    %p257 = scmp.eq.s32.totalorder %s17, 1
    %p258 = por %p256, %p257
    %p259 = scmp.ne.s32.totalorder %s251, %s254
    %p260 = scmp.eq.s32.totalorder %s17, 0
    %p261 = por %p259, %p260
    %p262 = scmp.ne.s32.totalorder %s251, %s254
    %p263 = scmp.eq.s32.totalorder %s22, 1
    %p264 = por %p262, %p263
    %p265 = scmp.ne.s32.totalorder %s254, %s255
    %p266 = scmp.eq.s32.totalorder %s22, 0
    %p267 = por %p265, %p266
    %p268 = scmp.ne.s32.totalorder %s254, %s255
    %p269 = scmp.eq.s32.totalorder %s23, 1
    %p270 = por %p268, %p269
    %p272 = scmp.ne.s32.totalorder %s255, %s271
    %p273 = scmp.eq.s32.totalorder %s23, 0
    %p274 = por %p272, %p273
    %s275 = ssub.s32 %s17, %s24
    %p276 = scmp.eq.s32.totalorder %s275, 0
    %s278 = sadd.s32 %s277, 1
    %s279 = scalar_select %p276, %s277, %s278
    %p282 = pneg %p276
    %p283 = scmp.eq.s32.totalorder %s17, 1
    %p284 = por %p282, %p283
    %p285 = scmp.ne.s32.totalorder %s277, %s280
    %p286 = scmp.eq.s32.totalorder %s17, 0
    %p287 = por %p285, %p286
    %p288 = scmp.ne.s32.totalorder %s277, %s280
    %p289 = scmp.eq.s32.totalorder %s22, 1
    %p290 = por %p288, %p289
    %p291 = scmp.ne.s32.totalorder %s280, %s281
    %p292 = scmp.eq.s32.totalorder %s22, 0
    %p293 = por %p291, %p292
    %p294 = scmp.ne.s32.totalorder %s280, %s281
    %p295 = scmp.eq.s32.totalorder %s23, 1
    %p296 = por %p294, %p295
    %p298 = scmp.ne.s32.totalorder %s281, %s297
    %p299 = scmp.eq.s32.totalorder %s23, 0
    %p300 = por %p298, %p299
    %s301 = ssub.s32 %s17, %s24
    %p302 = scmp.eq.s32.totalorder %s301, 0
    %s304 = sadd.s32 %s303, 1
    %s305 = scalar_select %p302, %s303, %s304
    %p308 = pneg %p302
    %p309 = scmp.eq.s32.totalorder %s17, 1
    %p310 = por %p308, %p309
    %p311 = scmp.ne.s32.totalorder %s303, %s306
    %p312 = scmp.eq.s32.totalorder %s17, 0
    %p313 = por %p311, %p312
    %p314 = scmp.ne.s32.totalorder %s303, %s306
    %p315 = scmp.eq.s32.totalorder %s22, 1
    %p316 = por %p314, %p315
    %p317 = scmp.ne.s32.totalorder %s306, %s307
    %p318 = scmp.eq.s32.totalorder %s22, 0
    %p319 = por %p317, %p318
    %p320 = scmp.ne.s32.totalorder %s306, %s307
    %p321 = scmp.eq.s32.totalorder %s23, 1
    %p322 = por %p320, %p321
    %p324 = scmp.ne.s32.totalorder %s307, %s323
    %p325 = scmp.eq.s32.totalorder %s23, 0
    %p326 = por %p324, %p325
    %p327 = scmp.le.s32.totalorder 1, %s17
    %p328 = scmp.lt.s32.totalorder %s17, 3
    %p329 = pnand %p327, %p328
    %p330 = pneg %p329
    // Predicated region
    $region9: #{clip_forward.2} parent=5 // pred_check
      _
    $region10: #{clip_forward.2} parent=5 // pred_check_branch
      %332 = sbr.rel (%p329) target = $region12
    $region11: #{clip_forward.2} parent=5 // pred_region
      %s333 = ssub.s32 %s17, 1
      // Predicated region
      $region13: #{clip_forward.2} parent=11 // pred_check
        %p334 = pneg %p38
      $region14: #{clip_forward.2} parent=11 // pred_check_branch
        %336 = sbr.rel (%p334) target = $region16
      $region15: #{clip_forward.2} parent=11 // pred_region
        _
      $region16: #{clip_forward.2} parent=11 // pred_fallthru
        _
      // Predicated region
      $region17: #{clip_forward.2} parent=11 // pred_check
        %p337 = pneg %p59
      $region18: #{clip_forward.2} parent=11 // pred_check_branch
        %339 = sbr.rel (%p337) target = $region20
      $region19: #{clip_forward.2} parent=11 // pred_region
        _
      $region20: #{clip_forward.2} parent=11 // pred_fallthru
        _
    $region12: #{clip_forward.2} parent=5 // pred_fallthru
      _
    %p340 = scmp.lt.s32.totalorder %s17, 2
    // Predicated region
    $region21: #{clip_forward.2} parent=5 // pred_check
      %p341 = pneg %p340
    $region22: #{clip_forward.2} parent=5 // pred_check_branch
      %343 = sbr.rel (%p341) target = $region24
    $region23: #{clip_forward.2} parent=5 // pred_region
      // Predicated region
      $region25: #{clip_forward.2} parent=23 // pred_check
        %p344 = pneg %p79
      $region26: #{clip_forward.2} parent=23 // pred_check_branch
        %346 = sbr.rel (%p344) target = $region28
      $region27: #{clip_forward.2} parent=23 // pred_region
        %p347 = scmp.lt.s32.totalorder %s17, 1
        %s348 = scalar_select %p347, %s17, 1
        %s349 = smul.addr %s348, 74
        %s350 = smul.addr %s349, 4
        %s351 = scalar_lea.vmem %s2, %s350
      $region28: #{clip_forward.2} parent=23 // pred_fallthru
        _
      // Predicated region
      $region29: #{clip_forward.2} parent=23 // pred_check
        %p352 = pneg %p105
      $region30: #{clip_forward.2} parent=23 // pred_check_branch
        %354 = sbr.rel (%p352) target = $region32
      $region31: #{clip_forward.2} parent=23 // pred_region
        %p355 = scmp.lt.s32.totalorder %s17, 1
        %s356 = scalar_select %p355, %s17, 1
        %s357 = smul.addr %s356, 9
        %s358 = smul.addr %s357, 4
        %s359 = scalar_lea.vmem %s3, %s358
      $region32: #{clip_forward.2} parent=23 // pred_fallthru
        _
      // Predicated region
      $region33: #{clip_forward.2} parent=23 // pred_check
        %p360 = pneg %p131
      $region34: #{clip_forward.2} parent=23 // pred_check_branch
        %362 = sbr.rel (%p360) target = $region36
      $region35: #{clip_forward.2} parent=23 // pred_region
        %p363 = scmp.lt.s32.totalorder %s17, 1
        %s364 = scalar_select %p363, %s17, 1
        %s365 = scalar_lea.vmem %s4, %s364
      $region36: #{clip_forward.2} parent=23 // pred_fallthru
        _
      // Predicated region
      $region37: #{clip_forward.2} parent=23 // pred_check
        %p366 = pneg %p157
      $region38: #{clip_forward.2} parent=23 // pred_check_branch
        %368 = sbr.rel (%p366) target = $region40
      $region39: #{clip_forward.2} parent=23 // pred_region
        %p369 = scmp.lt.s32.totalorder %s17, 1
        %s370 = scalar_select %p369, %s17, 1
        %s371 = smul.addr %s370, 16
        %s372 = smul.addr %s371, 4
        %s373 = scalar_lea.vmem %s5, %s372
      $region40: #{clip_forward.2} parent=23 // pred_fallthru
        _
      // Predicated region
      $region41: #{clip_forward.2} parent=23 // pred_check
        %p374 = pneg %p183
      $region42: #{clip_forward.2} parent=23 // pred_check_branch
        %376 = sbr.rel (%p374) target = $region44
      $region43: #{clip_forward.2} parent=23 // pred_region
        %p377 = scmp.lt.s32.totalorder %s17, 1
        %s378 = scalar_select %p377, %s17, 1
        %s379 = scalar_lea.vmem %s6, %s378
      $region44: #{clip_forward.2} parent=23 // pred_fallthru
        _
      // Predicated region
      $region45: #{clip_forward.2} parent=23 // pred_check
        %p380 = pneg %p209
      $region46: #{clip_forward.2} parent=23 // pred_check_branch
        %382 = sbr.rel (%p380) target = $region48
      $region47: #{clip_forward.2} parent=23 // pred_region
        %p383 = scmp.lt.s32.totalorder %s17, 1
        %s384 = scalar_select %p383, %s17, 1
        %s385 = smul.addr %s384, 16
        %s386 = smul.addr %s385, 4
        %s387 = scalar_lea.vmem %s7, %s386
      $region48: #{clip_forward.2} parent=23 // pred_fallthru
        _
      // Predicated region
      $region49: #{clip_forward.2} parent=23 // pred_check
        %p388 = pneg %p235
      $region50: #{clip_forward.2} parent=23 // pred_check_branch
        %390 = sbr.rel (%p388) target = $region52
      $region51: #{clip_forward.2} parent=23 // pred_region
        %p391 = scmp.lt.s32.totalorder %s17, 1
        %s392 = scalar_select %p391, %s17, 1
        %s393 = scalar_lea.vmem %s8, %s392
      $region52: #{clip_forward.2} parent=23 // pred_fallthru
        _
      // Predicated region
      $region53: #{clip_forward.2} parent=23 // pred_check
        %p394 = pneg %p261
      $region54: #{clip_forward.2} parent=23 // pred_check_branch
        %396 = sbr.rel (%p394) target = $region56
      $region55: #{clip_forward.2} parent=23 // pred_region
        %p397 = scmp.lt.s32.totalorder %s17, 1
        %s398 = scalar_select %p397, %s17, 1
        %s399 = scalar_lea.vmem %s9, %s398
      $region56: #{clip_forward.2} parent=23 // pred_fallthru
        _
      // Predicated region
      $region57: #{clip_forward.2} parent=23 // pred_check
        %p400 = pneg %p287
      $region58: #{clip_forward.2} parent=23 // pred_check_branch
        %402 = sbr.rel (%p400) target = $region60
      $region59: #{clip_forward.2} parent=23 // pred_region
        %p403 = scmp.lt.s32.totalorder %s17, 1
        %s404 = scalar_select %p403, %s17, 1
        %s405 = scalar_lea.vmem %s10, %s404
      $region60: #{clip_forward.2} parent=23 // pred_fallthru
        _
    $region24: #{clip_forward.2} parent=5 // pred_fallthru
      _
    %p406 = scmp.le.s32.totalorder 1, %s17
    %p407 = scmp.lt.s32.totalorder %s17, 3
    %p408 = pnand %p406, %p407
    %p409 = pneg %p408
    // Predicated region
    $region61: #{clip_forward.2} parent=5 // pred_check
      _
    $region62: #{clip_forward.2} parent=5 // pred_check_branch
      %411 = sbr.rel (%p408) target = $region64
    $region63: #{clip_forward.2} parent=5 // pred_region
      %s412 = ssub.s32 %s17, 1
      %p413 = pneg %p38
      %p414 = pneg %p35
      %p415 = pneg %p59
      %p416 = pneg %p56
      %p417 = scmp.lt.s32.totalorder %s22, 1
      %s418 = scalar_select %p417, %s22, 1
      %s419 = smul.addr %s418, 74
      %s420 = smul.addr %s419, 4
      %s421 = scalar_lea.vmem %s2, %s420
      %p422 = pneg %p85
      %p423 = pneg %p82
      %p424 = scmp.lt.s32.totalorder %s22, 1
      %s425 = scalar_select %p424, %s22, 1
      %s426 = smul.addr %s425, 9
      %s427 = smul.addr %s426, 4
      %s428 = scalar_lea.vmem %s3, %s427
      %p429 = pneg %p111
      %p430 = pneg %p108
      %p431 = scmp.lt.s32.totalorder %s22, 1
      %s432 = scalar_select %p431, %s22, 1
      %s433 = scalar_lea.vmem %s4, %s432
      %p434 = pneg %p137
      %p435 = pneg %p134
      %p436 = scmp.lt.s32.totalorder %s22, 1
      %s437 = scalar_select %p436, %s22, 1
      %s438 = smul.addr %s437, 16
      %s439 = smul.addr %s438, 4
      %s440 = scalar_lea.vmem %s5, %s439
      %p441 = pneg %p163
      %p442 = pneg %p160
      %p443 = scmp.lt.s32.totalorder %s22, 1
      %s444 = scalar_select %p443, %s22, 1
      %s445 = scalar_lea.vmem %s6, %s444
      %p446 = pneg %p189
      %p447 = pneg %p186
      %p448 = scmp.lt.s32.totalorder %s22, 1
      %s449 = scalar_select %p448, %s22, 1
      %s450 = smul.addr %s449, 16
      %s451 = smul.addr %s450, 4
      %s452 = scalar_lea.vmem %s7, %s451
      %p453 = pneg %p215
      %p454 = pneg %p212
      %p455 = scmp.lt.s32.totalorder %s22, 1
      %s456 = scalar_select %p455, %s22, 1
      %s457 = scalar_lea.vmem %s8, %s456
      %p458 = pneg %p241
      %p459 = pneg %p238
      %p460 = scmp.lt.s32.totalorder %s22, 1
      %s461 = scalar_select %p460, %s22, 1
      %s462 = scalar_lea.vmem %s9, %s461
      %p463 = pneg %p267
      %p464 = pneg %p264
      %p465 = scmp.lt.s32.totalorder %s22, 1
      %s466 = scalar_select %p465, %s22, 1
      %s467 = scalar_lea.vmem %s10, %s466
      %p468 = pneg %p293
      %p469 = pneg %p290
      %p470 = pneg %p319
      %p471 = pneg %p316
      %p472 = scmp.lt.s32.totalorder %s22, 1
      %s473 = scalar_select %p472, %s22, 1
      %s474 = smul.addr %s473, 2
      %s475 = scalar_lea.vmem %s11, %s474
      %p476 = scmp.lt.s32.totalorder %s22, 1
      %s477 = scalar_select %p476, %s22, 1
      %s478 = smul.addr %s477, 74
      %s479 = smul.addr %s478, 4
      %s480 = scalar_lea.vmem %s2, %s479
      %p481 = scmp.lt.s32.totalorder %s22, 1
      %s482 = scalar_select %p481, %s22, 1
      %s483 = smul.addr %s482, 9
      %s484 = smul.addr %s483, 4
      %s485 = scalar_lea.vmem %s3, %s484
      %p486 = scmp.lt.s32.totalorder %s22, 1
      %s487 = scalar_select %p486, %s22, 1
      %s488 = scalar_lea.vmem %s4, %s487
      %p489 = scmp.lt.s32.totalorder %s22, 1
      %s490 = scalar_select %p489, %s22, 1
      %s491 = smul.addr %s490, 16
      %s492 = smul.addr %s491, 4
      %s493 = scalar_lea.vmem %s5, %s492
      %p494 = scmp.lt.s32.totalorder %s22, 1
      %s495 = scalar_select %p494, %s22, 1
      %s496 = scalar_lea.vmem %s6, %s495
      %p497 = scmp.lt.s32.totalorder %s22, 1
      %s498 = scalar_select %p497, %s22, 1
      %s499 = smul.addr %s498, 16
      %s500 = smul.addr %s499, 4
      %s501 = scalar_lea.vmem %s7, %s500
      %p502 = scmp.lt.s32.totalorder %s22, 1
      %s503 = scalar_select %p502, %s22, 1
      %s504 = scalar_lea.vmem %s8, %s503
      %p505 = scmp.lt.s32.totalorder %s22, 1
      %s506 = scalar_select %p505, %s22, 1
      %s507 = scalar_lea.vmem %s9, %s506
      %p508 = scmp.lt.s32.totalorder %s22, 1
      %s509 = scalar_select %p508, %s22, 1
      %s510 = scalar_lea.vmem %s10, %s509
      %p511 = scmp.lt.s32.totalorder %s22, 1
      %s512 = scalar_select %p511, %s22, 1
      %s513 = smul.addr %s512, 2
      %s514 = scalar_lea.vmem %s11, %s513
      %v516 = vld [vmem:[%s480] sm:$0xf]
      %v517 = vld [vmem:[%s480 + $0x4] sm:$0xf]
      %v518 = vld [vmem:[%s480 + $0x8] sm:$0xf]
      %v519 = vld [vmem:[%s480 + $0xc] sm:$0xf]
      %v520 = vld [vmem:[%s480 + $0x10] sm:$0xf]
      %v521 = vld [vmem:[%s480 + $0x14] sm:$0xf]
      %v522 = vld [vmem:[%s480 + $0x18] sm:$0xf]
      %v523 = vld [vmem:[%s480 + $0x1c] sm:$0xf]
      %v524 = vld [vmem:[%s480 + $0x20] sm:$0xf]
      %v525 = vld [vmem:[%s480 + $0x24] sm:$0xf]
      %v526 = vld [vmem:[%s480 + $0x28] sm:$0xf]
      %v527 = vld [vmem:[%s480 + $0x2c] sm:$0xf]
      %v528 = vld [vmem:[%s480 + $0x30] sm:$0xf]
      %v529 = vld [vmem:[%s480 + $0x34] sm:$0xf]
      %v530 = vld [vmem:[%s480 + $0x38] sm:$0xf]
      %v531 = vld [vmem:[%s480 + $0x3c] sm:$0xf]
      %v532 = vld [vmem:[%s480 + $0x40] sm:$0xf]
      %v533 = vld [vmem:[%s480 + $0x44] sm:$0xf]
      %v534 = vld [vmem:[%s480 + $0x48] sm:$0xf]
      %v535 = vld [vmem:[%s480 + $0x4c] sm:$0xf]
      %v536 = vld [vmem:[%s480 + $0x50] sm:$0xf]
      %v537 = vld [vmem:[%s480 + $0x54] sm:$0xf]
      %v538 = vld [vmem:[%s480 + $0x58] sm:$0xf]
      %v539 = vld [vmem:[%s480 + $0x5c] sm:$0xf]
      %v540 = vld [vmem:[%s480 + $0x60] sm:$0xf]
      %v541 = vld [vmem:[%s480 + $0x64] sm:$0xf]
      %v542 = vld [vmem:[%s480 + $0x68] sm:$0xf]
      %v543 = vld [vmem:[%s480 + $0x6c] sm:$0xf]
      %v544 = vld [vmem:[%s480 + $0x70] sm:$0xf]
      %v545 = vld [vmem:[%s480 + $0x74] sm:$0xf]
      %v546 = vld [vmem:[%s480 + $0x78] sm:$0xf]
      %v547 = vld [vmem:[%s480 + $0x7c] sm:$0xf]
      %v548 = vld [vmem:[%s480 + $0x80] sm:$0xf]
      %v549 = vld [vmem:[%s480 + $0x84] sm:$0xf]
      %v550 = vld [vmem:[%s480 + $0x88] sm:$0xf]
      %v551 = vld [vmem:[%s480 + $0x8c] sm:$0xf]
      %v552 = vld [vmem:[%s480 + $0x90] sm:$0x1]
      %v553 = vld [vmem:[%s480 + $0x94] sm:$0xf]
      %v554 = vld [vmem:[%s480 + $0x98] sm:$0xf]
      %v555 = vld [vmem:[%s480 + $0x9c] sm:$0xf]
      %v556 = vld [vmem:[%s480 + $0xa0] sm:$0xf]
      %v557 = vld [vmem:[%s480 + $0xa4] sm:$0xf]
      %v558 = vld [vmem:[%s480 + $0xa8] sm:$0xf]
      %v559 = vld [vmem:[%s480 + $0xac] sm:$0xf]
      %v560 = vld [vmem:[%s480 + $0xb0] sm:$0xf]
      %v561 = vld [vmem:[%s480 + $0xb4] sm:$0xf]
      %v562 = vld [vmem:[%s480 + $0xb8] sm:$0xf]
      %v563 = vld [vmem:[%s480 + $0xbc] sm:$0xf]
      %v564 = vld [vmem:[%s480 + $0xc0] sm:$0xf]
      %v565 = vld [vmem:[%s480 + $0xc4] sm:$0xf]
      %v566 = vld [vmem:[%s480 + $0xc8] sm:$0xf]
      %v567 = vld [vmem:[%s480 + $0xcc] sm:$0xf]
      %v568 = vld [vmem:[%s480 + $0xd0] sm:$0xf]
      %v569 = vld [vmem:[%s480 + $0xd4] sm:$0xf]
      %v570 = vld [vmem:[%s480 + $0xd8] sm:$0xf]
      %v571 = vld [vmem:[%s480 + $0xdc] sm:$0xf]
      %v572 = vld [vmem:[%s480 + $0xe0] sm:$0xf]
      %v573 = vld [vmem:[%s480 + $0xe4] sm:$0xf]
      %v574 = vld [vmem:[%s480 + $0xe8] sm:$0xf]
      %v575 = vld [vmem:[%s480 + $0xec] sm:$0xf]
      %v576 = vld [vmem:[%s480 + $0xf0] sm:$0xf]
      %v577 = vld [vmem:[%s480 + $0xf4] sm:$0xf]
      %v578 = vld [vmem:[%s480 + $0xf8] sm:$0xf]
      %v579 = vld [vmem:[%s480 + $0xfc] sm:$0xf]
      %v580 = vld [vmem:[%s480 + $0x100] sm:$0xf]
      %v581 = vld [vmem:[%s480 + $0x104] sm:$0xf]
      %v582 = vld [vmem:[%s480 + $0x108] sm:$0xf]
      %v583 = vld [vmem:[%s480 + $0x10c] sm:$0xf]
      %v584 = vld [vmem:[%s480 + $0x110] sm:$0xf]
      %v585 = vld [vmem:[%s480 + $0x114] sm:$0xf]
      %v586 = vld [vmem:[%s480 + $0x118] sm:$0xf]
      %v587 = vld [vmem:[%s480 + $0x11c] sm:$0xf]
      %v588 = vld [vmem:[%s480 + $0x120] sm:$0xf]
      %v589 = vld [vmem:[%s480 + $0x124] sm:$0x1]
      %v590 = vld [vmem:[%s0] sm:$0xf]
      %v591 = vld [vmem:[%s0 + $0x4] sm:$0xf]
      %v592 = vld [vmem:[%s0 + $0x8] sm:$0xf]
      %v593 = vld [vmem:[%s0 + $0xc] sm:$0xf]
      %v594 = vld [vmem:[%s0 + $0x10] sm:$0xf]
      %v595 = vld [vmem:[%s0 + $0x14] sm:$0xf]
      %v596 = vld [vmem:[%s0 + $0x18] sm:$0xf]
      %v597 = vld [vmem:[%s0 + $0x1c] sm:$0xf]
      %v598 = vld [vmem:[%s0 + $0x20] sm:$0xf]
      %v599 = vld [vmem:[%s0 + $0x24] sm:$0xf]
      %v600 = vld [vmem:[%s0 + $0x28] sm:$0xf]
      %v601 = vld [vmem:[%s0 + $0x2c] sm:$0xf]
      %v602 = vld [vmem:[%s0 + $0x30] sm:$0xf]
      %v603 = vld [vmem:[%s0 + $0x34] sm:$0xf]
      %v604 = vld [vmem:[%s0 + $0x38] sm:$0xf]
      %v605 = vld [vmem:[%s0 + $0x3c] sm:$0xf]
      %v606 = vld [vmem:[%s0 + $0x40] sm:$0xf]
      %v607 = vld [vmem:[%s0 + $0x44] sm:$0xf]
      %v608 = vld [vmem:[%s0 + $0x48] sm:$0xf]
      %v609 = vld [vmem:[%s0 + $0x4c] sm:$0xf]
      %v610 = vld [vmem:[%s0 + $0x50] sm:$0xf]
      %v611 = vld [vmem:[%s0 + $0x54] sm:$0xf]
      %v612 = vld [vmem:[%s0 + $0x58] sm:$0xf]
      %v613 = vld [vmem:[%s0 + $0x5c] sm:$0xf]
      %v614 = vld [vmem:[%s0 + $0x60] sm:$0xf]
      %v615 = vld [vmem:[%s0 + $0x64] sm:$0xf]
      %v616 = vld [vmem:[%s0 + $0x68] sm:$0xf]
      %v617 = vld [vmem:[%s0 + $0x6c] sm:$0xf]
      %v618 = vld [vmem:[%s0 + $0x70] sm:$0xf]
      %v619 = vld [vmem:[%s0 + $0x74] sm:$0xf]
      %v620 = vld [vmem:[%s0 + $0x78] sm:$0xf]
      %v621 = vld [vmem:[%s0 + $0x7c] sm:$0xf]
      %v622 = vld [vmem:[%s1] sm:$0xf]
      %v623 = vld [vmem:[%s1 + $0x4] sm:$0xf]
      %v624 = vld [vmem:[%s1 + $0x8] sm:$0xf]
      %v625 = vld [vmem:[%s1 + $0xc] sm:$0xf]
      %v626 = vld [vmem:[%s1 + $0x10] sm:$0xf]
      %v627 = vld [vmem:[%s1 + $0x14] sm:$0xf]
      %v628 = vld [vmem:[%s1 + $0x18] sm:$0xf]
      %v629 = vld [vmem:[%s1 + $0x1c] sm:$0xf]
      %v630 = vld [vmem:[%s1 + $0x20] sm:$0xf]
      %v631 = vld [vmem:[%s1 + $0x24] sm:$0xf]
      %v632 = vld [vmem:[%s1 + $0x28] sm:$0xf]
      %v633 = vld [vmem:[%s1 + $0x2c] sm:$0xf]
      %v634 = vld [vmem:[%s1 + $0x30] sm:$0xf]
      %v635 = vld [vmem:[%s1 + $0x34] sm:$0xf]
      %v636 = vld [vmem:[%s1 + $0x38] sm:$0xf]
      %v637 = vld [vmem:[%s1 + $0x3c] sm:$0xf]
      %v638 = vld [vmem:[%s1 + $0x40] sm:$0xf]
      %v639 = vld [vmem:[%s1 + $0x44] sm:$0xf]
      %v640 = vld [vmem:[%s1 + $0x48] sm:$0xf]
      %v641 = vld [vmem:[%s1 + $0x4c] sm:$0xf]
      %v642 = vld [vmem:[%s1 + $0x50] sm:$0xf]
      %v643 = vld [vmem:[%s1 + $0x54] sm:$0xf]
      %v644 = vld [vmem:[%s1 + $0x58] sm:$0xf]
      %v645 = vld [vmem:[%s1 + $0x5c] sm:$0xf]
      %v646 = vld [vmem:[%s1 + $0x60] sm:$0xf]
      %v647 = vld [vmem:[%s1 + $0x64] sm:$0xf]
      %v648 = vld [vmem:[%s1 + $0x68] sm:$0xf]
      %v649 = vld [vmem:[%s1 + $0x6c] sm:$0xf]
      %v650 = vld [vmem:[%s1 + $0x70] sm:$0xf]
      %v651 = vld [vmem:[%s1 + $0x74] sm:$0xf]
      %v652 = vld [vmem:[%s1 + $0x78] sm:$0xf]
      %v653 = vld [vmem:[%s1 + $0x7c] sm:$0xf]
      %655 = vset.pattern.permute.xlu0 0
      %656 = vperm.xlu0 %655, %v590
      %v657 = vpop.permute.xlu0 %656
      %v660 = vunpack.c.l.s4 839922192
      %v661 = vunpack.c.0.s8 %v660
      %v662 = vlaneseq
      %v663 = vshrl.u32 %v662, 7
      %v664 = vsub.s32 %v661, %v663
      %v665 = vrot.slane %v657, %v664
      %667 = vset.pattern.permute.xlu0 0
      %668 = vperm.xlu0 %667, %v591
      %v669 = vpop.permute.xlu0 %668
      %v672 = vunpack.c.l.s4 839922192
      %v673 = vunpack.c.0.s8 %v672
      %v674 = vlaneseq
      %v675 = vshrl.u32 %v674, 7
      %v676 = vsub.s32 %v673, %v675
      %v677 = vrot.slane %v669, %v676
      %679 = vset.pattern.permute.xlu0 0
      %680 = vperm.xlu0 %679, %v592
      %v681 = vpop.permute.xlu0 %680
      %v684 = vunpack.c.l.s4 839922192
      %v685 = vunpack.c.0.s8 %v684
      %v686 = vlaneseq
      %v687 = vshrl.u32 %v686, 7
      %v688 = vsub.s32 %v685, %v687
      %v689 = vrot.slane %v681, %v688
      %691 = vset.pattern.permute.xlu0 0
      %692 = vperm.xlu0 %691, %v593
      %v693 = vpop.permute.xlu0 %692
      %v696 = vunpack.c.l.s4 839922192
      %v697 = vunpack.c.0.s8 %v696
      %v698 = vlaneseq
      %v699 = vshrl.u32 %v698, 7
      %v700 = vsub.s32 %v697, %v699
      %v701 = vrot.slane %v693, %v700
      %703 = vset.pattern.permute.xlu0 0
      %704 = vperm.xlu0 %703, %v594
      %v705 = vpop.permute.xlu0 %704
      %v708 = vunpack.c.l.s4 839922192
      %v709 = vunpack.c.0.s8 %v708
      %v710 = vlaneseq
      %v711 = vshrl.u32 %v710, 7
      %v712 = vsub.s32 %v709, %v711
      %v713 = vrot.slane %v705, %v712
      %715 = vset.pattern.permute.xlu0 0
      %716 = vperm.xlu0 %715, %v595
      %v717 = vpop.permute.xlu0 %716
      %v720 = vunpack.c.l.s4 839922192
      %v721 = vunpack.c.0.s8 %v720
      %v722 = vlaneseq
      %v723 = vshrl.u32 %v722, 7
      %v724 = vsub.s32 %v721, %v723
      %v725 = vrot.slane %v717, %v724
      %727 = vset.pattern.permute.xlu0 0
      %728 = vperm.xlu0 %727, %v596
      %v729 = vpop.permute.xlu0 %728
      %v732 = vunpack.c.l.s4 839922192
      %v733 = vunpack.c.0.s8 %v732
      %v734 = vlaneseq
      %v735 = vshrl.u32 %v734, 7
      %v736 = vsub.s32 %v733, %v735
      %v737 = vrot.slane %v729, %v736
      %739 = vset.pattern.permute.xlu0 0
      %740 = vperm.xlu0 %739, %v597
      %v741 = vpop.permute.xlu0 %740
      %v744 = vunpack.c.l.s4 839922192
      %v745 = vunpack.c.0.s8 %v744
      %v746 = vlaneseq
      %v747 = vshrl.u32 %v746, 7
      %v748 = vsub.s32 %v745, %v747
      %v749 = vrot.slane %v741, %v748
      %751 = vset.pattern.permute.xlu0 0
      %752 = vperm.xlu0 %751, %v598
      %v753 = vpop.permute.xlu0 %752
      %v756 = vunpack.c.l.s4 839922192
      %v757 = vunpack.c.0.s8 %v756
      %v758 = vlaneseq
      %v759 = vshrl.u32 %v758, 7
      %v760 = vsub.s32 %v757, %v759
      %v761 = vrot.slane %v753, %v760
      %763 = vset.pattern.permute.xlu0 0
      %764 = vperm.xlu0 %763, %v599
      %v765 = vpop.permute.xlu0 %764
      %v768 = vunpack.c.l.s4 839922192
      %v769 = vunpack.c.0.s8 %v768
      %v770 = vlaneseq
      %v771 = vshrl.u32 %v770, 7
      %v772 = vsub.s32 %v769, %v771
      %v773 = vrot.slane %v765, %v772
      %775 = vset.pattern.permute.xlu0 0
      %776 = vperm.xlu0 %775, %v600
      %v777 = vpop.permute.xlu0 %776
      %v780 = vunpack.c.l.s4 839922192
      %v781 = vunpack.c.0.s8 %v780
      %v782 = vlaneseq
      %v783 = vshrl.u32 %v782, 7
      %v784 = vsub.s32 %v781, %v783
      %v785 = vrot.slane %v777, %v784
      %787 = vset.pattern.permute.xlu0 0
      %788 = vperm.xlu0 %787, %v601
      %v789 = vpop.permute.xlu0 %788
      %v792 = vunpack.c.l.s4 839922192
      %v793 = vunpack.c.0.s8 %v792
      %v794 = vlaneseq
      %v795 = vshrl.u32 %v794, 7
      %v796 = vsub.s32 %v793, %v795
      %v797 = vrot.slane %v789, %v796
      %799 = vset.pattern.permute.xlu0 0
      %800 = vperm.xlu0 %799, %v602
      %v801 = vpop.permute.xlu0 %800
      %v804 = vunpack.c.l.s4 839922192
      %v805 = vunpack.c.0.s8 %v804
      %v806 = vlaneseq
      %v807 = vshrl.u32 %v806, 7
      %v808 = vsub.s32 %v805, %v807
      %v809 = vrot.slane %v801, %v808
      %811 = vset.pattern.permute.xlu0 0
      %812 = vperm.xlu0 %811, %v603
      %v813 = vpop.permute.xlu0 %812
      %v816 = vunpack.c.l.s4 839922192
      %v817 = vunpack.c.0.s8 %v816
      %v818 = vlaneseq
      %v819 = vshrl.u32 %v818, 7
      %v820 = vsub.s32 %v817, %v819
      %v821 = vrot.slane %v813, %v820
      %823 = vset.pattern.permute.xlu0 0
      %824 = vperm.xlu0 %823, %v604
      %v825 = vpop.permute.xlu0 %824
      %v828 = vunpack.c.l.s4 839922192
      %v829 = vunpack.c.0.s8 %v828
      %v830 = vlaneseq
      %v831 = vshrl.u32 %v830, 7
      %v832 = vsub.s32 %v829, %v831
      %v833 = vrot.slane %v825, %v832
      %835 = vset.pattern.permute.xlu0 0
      %836 = vperm.xlu0 %835, %v605
      %v837 = vpop.permute.xlu0 %836
      %v840 = vunpack.c.l.s4 839922192
      %v841 = vunpack.c.0.s8 %v840
      %v842 = vlaneseq
      %v843 = vshrl.u32 %v842, 7
      %v844 = vsub.s32 %v841, %v843
      %v845 = vrot.slane %v837, %v844
      %847 = vset.pattern.permute.xlu0 0
      %848 = vperm.xlu0 %847, %v606
      %v849 = vpop.permute.xlu0 %848
      %v852 = vunpack.c.l.s4 839922192
      %v853 = vunpack.c.0.s8 %v852
      %v854 = vlaneseq
      %v855 = vshrl.u32 %v854, 7
      %v856 = vsub.s32 %v853, %v855
      %v857 = vrot.slane %v849, %v856
      %859 = vset.pattern.permute.xlu0 0
      %860 = vperm.xlu0 %859, %v607
      %v861 = vpop.permute.xlu0 %860
      %v864 = vunpack.c.l.s4 839922192
      %v865 = vunpack.c.0.s8 %v864
      %v866 = vlaneseq
      %v867 = vshrl.u32 %v866, 7
      %v868 = vsub.s32 %v865, %v867
      %v869 = vrot.slane %v861, %v868
      %871 = vset.pattern.permute.xlu0 0
      %872 = vperm.xlu0 %871, %v608
      %v873 = vpop.permute.xlu0 %872
      %v876 = vunpack.c.l.s4 839922192
      %v877 = vunpack.c.0.s8 %v876
      %v878 = vlaneseq
      %v879 = vshrl.u32 %v878, 7
      %v880 = vsub.s32 %v877, %v879
      %v881 = vrot.slane %v873, %v880
      %883 = vset.pattern.permute.xlu0 0
      %884 = vperm.xlu0 %883, %v609
      %v885 = vpop.permute.xlu0 %884
      %v888 = vunpack.c.l.s4 839922192
      %v889 = vunpack.c.0.s8 %v888
      %v890 = vlaneseq
      %v891 = vshrl.u32 %v890, 7
      %v892 = vsub.s32 %v889, %v891
      %v893 = vrot.slane %v885, %v892
      %895 = vset.pattern.permute.xlu0 0
      %896 = vperm.xlu0 %895, %v610
      %v897 = vpop.permute.xlu0 %896
      %v900 = vunpack.c.l.s4 839922192
      %v901 = vunpack.c.0.s8 %v900
      %v902 = vlaneseq
      %v903 = vshrl.u32 %v902, 7
      %v904 = vsub.s32 %v901, %v903
      %v905 = vrot.slane %v897, %v904
      %907 = vset.pattern.permute.xlu0 0
      %908 = vperm.xlu0 %907, %v611
      %v909 = vpop.permute.xlu0 %908
      %v912 = vunpack.c.l.s4 839922192
      %v913 = vunpack.c.0.s8 %v912
      %v914 = vlaneseq
      %v915 = vshrl.u32 %v914, 7
      %v916 = vsub.s32 %v913, %v915
      %v917 = vrot.slane %v909, %v916
      %919 = vset.pattern.permute.xlu0 0
      %920 = vperm.xlu0 %919, %v612
      %v921 = vpop.permute.xlu0 %920
      %v924 = vunpack.c.l.s4 839922192
      %v925 = vunpack.c.0.s8 %v924
      %v926 = vlaneseq
      %v927 = vshrl.u32 %v926, 7
      %v928 = vsub.s32 %v925, %v927
      %v929 = vrot.slane %v921, %v928
      %931 = vset.pattern.permute.xlu0 0
      %932 = vperm.xlu0 %931, %v613
      %v933 = vpop.permute.xlu0 %932
      %v936 = vunpack.c.l.s4 839922192
      %v937 = vunpack.c.0.s8 %v936
      %v938 = vlaneseq
      %v939 = vshrl.u32 %v938, 7
      %v940 = vsub.s32 %v937, %v939
      %v941 = vrot.slane %v933, %v940
      %943 = vset.pattern.permute.xlu0 0
      %944 = vperm.xlu0 %943, %v614
      %v945 = vpop.permute.xlu0 %944
      %v948 = vunpack.c.l.s4 839922192
      %v949 = vunpack.c.0.s8 %v948
      %v950 = vlaneseq
      %v951 = vshrl.u32 %v950, 7
      %v952 = vsub.s32 %v949, %v951
      %v953 = vrot.slane %v945, %v952
      %955 = vset.pattern.permute.xlu0 0
      %956 = vperm.xlu0 %955, %v615
      %v957 = vpop.permute.xlu0 %956
      %v960 = vunpack.c.l.s4 839922192
      %v961 = vunpack.c.0.s8 %v960
      %v962 = vlaneseq
      %v963 = vshrl.u32 %v962, 7
      %v964 = vsub.s32 %v961, %v963
      %v965 = vrot.slane %v957, %v964
      %967 = vset.pattern.permute.xlu0 0
      %968 = vperm.xlu0 %967, %v616
      %v969 = vpop.permute.xlu0 %968
      %v972 = vunpack.c.l.s4 839922192
      %v973 = vunpack.c.0.s8 %v972
      %v974 = vlaneseq
      %v975 = vshrl.u32 %v974, 7
      %v976 = vsub.s32 %v973, %v975
      %v977 = vrot.slane %v969, %v976
      %979 = vset.pattern.permute.xlu0 0
      %980 = vperm.xlu0 %979, %v617
      %v981 = vpop.permute.xlu0 %980
      %v984 = vunpack.c.l.s4 839922192
      %v985 = vunpack.c.0.s8 %v984
      %v986 = vlaneseq
      %v987 = vshrl.u32 %v986, 7
      %v988 = vsub.s32 %v985, %v987
      %v989 = vrot.slane %v981, %v988
      %991 = vset.pattern.permute.xlu0 0
      %992 = vperm.xlu0 %991, %v618
      %v993 = vpop.permute.xlu0 %992
      %v996 = vunpack.c.l.s4 839922192
      %v997 = vunpack.c.0.s8 %v996
      %v998 = vlaneseq
      %v999 = vshrl.u32 %v998, 7
      %v1000 = vsub.s32 %v997, %v999
      %v1001 = vrot.slane %v993, %v1000
      %1003 = vset.pattern.permute.xlu0 0
      %1004 = vperm.xlu0 %1003, %v619
      %v1005 = vpop.permute.xlu0 %1004
      %v1008 = vunpack.c.l.s4 839922192
      %v1009 = vunpack.c.0.s8 %v1008
      %v1010 = vlaneseq
      %v1011 = vshrl.u32 %v1010, 7
      %v1012 = vsub.s32 %v1009, %v1011
      %v1013 = vrot.slane %v1005, %v1012
      %1015 = vset.pattern.permute.xlu0 0
      %1016 = vperm.xlu0 %1015, %v620
      %v1017 = vpop.permute.xlu0 %1016
      %v1020 = vunpack.c.l.s4 839922192
      %v1021 = vunpack.c.0.s8 %v1020
      %v1022 = vlaneseq
      %v1023 = vshrl.u32 %v1022, 7
      %v1024 = vsub.s32 %v1021, %v1023
      %v1025 = vrot.slane %v1017, %v1024
      %1027 = vset.pattern.permute.xlu0 0
      %1028 = vperm.xlu0 %1027, %v621
      %v1029 = vpop.permute.xlu0 %1028
      %v1032 = vunpack.c.l.s4 839922192
      %v1033 = vunpack.c.0.s8 %v1032
      %v1034 = vlaneseq
      %v1035 = vshrl.u32 %v1034, 7
      %v1036 = vsub.s32 %v1033, %v1035
      %v1037 = vrot.slane %v1029, %v1036
      %v1038 = vmul.bf16 %v516, %v665
      %v1039 = vmul.bf16 %v517, %v677
      %v1040 = vmul.bf16 %v518, %v689
      %v1041 = vmul.bf16 %v519, %v701
      %v1042 = vmul.bf16 %v520, %v713
      %v1043 = vmul.bf16 %v521, %v725
      %v1044 = vmul.bf16 %v522, %v737
      %v1045 = vmul.bf16 %v523, %v749
      %v1046 = vmul.bf16 %v524, %v761
      %v1047 = vmul.bf16 %v525, %v773
      %v1048 = vmul.bf16 %v526, %v785
      %v1049 = vmul.bf16 %v527, %v797
      %v1050 = vmul.bf16 %v528, %v809
      %v1051 = vmul.bf16 %v529, %v821
      %v1052 = vmul.bf16 %v530, %v833
      %v1053 = vmul.bf16 %v531, %v845
      %v1054 = vmul.bf16 %v532, %v857
      %v1055 = vmul.bf16 %v533, %v869
      %v1056 = vmul.bf16 %v534, %v881
      %v1057 = vmul.bf16 %v535, %v893
      %v1058 = vmul.bf16 %v536, %v905
      %v1059 = vmul.bf16 %v537, %v917
      %v1060 = vmul.bf16 %v538, %v929
      %v1061 = vmul.bf16 %v539, %v941
      %v1062 = vmul.bf16 %v540, %v953
      %v1063 = vmul.bf16 %v541, %v965
      %v1064 = vmul.bf16 %v542, %v977
      %v1065 = vmul.bf16 %v543, %v989
      %v1066 = vmul.bf16 %v544, %v1001
      %v1067 = vmul.bf16 %v545, %v1013
      %v1068 = vmul.bf16 %v546, %v1025
      %v1069 = vmul.bf16 %v547, %v1037
      %v1070 = vmul.bf16 %v553, %v665
      %v1071 = vmul.bf16 %v554, %v677
      %v1072 = vmul.bf16 %v555, %v689
      %v1073 = vmul.bf16 %v556, %v701
      %v1074 = vmul.bf16 %v557, %v713
      %v1075 = vmul.bf16 %v558, %v725
      %v1076 = vmul.bf16 %v559, %v737
      %v1077 = vmul.bf16 %v560, %v749
      %v1078 = vmul.bf16 %v561, %v761
      %v1079 = vmul.bf16 %v562, %v773
      %v1080 = vmul.bf16 %v563, %v785
      %v1081 = vmul.bf16 %v564, %v797
      %v1082 = vmul.bf16 %v565, %v809
      %v1083 = vmul.bf16 %v566, %v821
      %v1084 = vmul.bf16 %v567, %v833
      %v1085 = vmul.bf16 %v568, %v845
      %v1086 = vmul.bf16 %v569, %v857
      %v1087 = vmul.bf16 %v570, %v869
      %v1088 = vmul.bf16 %v571, %v881
      %v1089 = vmul.bf16 %v572, %v893
      %v1090 = vmul.bf16 %v573, %v905
      %v1091 = vmul.bf16 %v574, %v917
      %v1092 = vmul.bf16 %v575, %v929
      %v1093 = vmul.bf16 %v576, %v941
      %v1094 = vmul.bf16 %v577, %v953
      %v1095 = vmul.bf16 %v578, %v965
      %v1096 = vmul.bf16 %v579, %v977
      %v1097 = vmul.bf16 %v580, %v989
      %v1098 = vmul.bf16 %v581, %v1001
      %v1099 = vmul.bf16 %v582, %v1013
      %v1100 = vmul.bf16 %v583, %v1025
      %v1101 = vmul.bf16 %v584, %v1037
      %1103 = vset.pattern.permute.xlu0 0
      %1104 = vperm.xlu0 %1103, %v622
      %v1105 = vpop.permute.xlu0 %1104
      %v1108 = vunpack.c.l.s4 839922192
      %v1109 = vunpack.c.0.s8 %v1108
      %v1110 = vlaneseq
      %v1111 = vshrl.u32 %v1110, 7
      %v1112 = vsub.s32 %v1109, %v1111
      %v1113 = vrot.slane %v1105, %v1112
      %1115 = vset.pattern.permute.xlu0 0
      %1116 = vperm.xlu0 %1115, %v623
      %v1117 = vpop.permute.xlu0 %1116
      %v1120 = vunpack.c.l.s4 839922192
      %v1121 = vunpack.c.0.s8 %v1120
      %v1122 = vlaneseq
      %v1123 = vshrl.u32 %v1122, 7
      %v1124 = vsub.s32 %v1121, %v1123
      %v1125 = vrot.slane %v1117, %v1124
      %1127 = vset.pattern.permute.xlu0 0
      %1128 = vperm.xlu0 %1127, %v624
      %v1129 = vpop.permute.xlu0 %1128
      %v1132 = vunpack.c.l.s4 839922192
      %v1133 = vunpack.c.0.s8 %v1132
      %v1134 = vlaneseq
      %v1135 = vshrl.u32 %v1134, 7
      %v1136 = vsub.s32 %v1133, %v1135
      %v1137 = vrot.slane %v1129, %v1136
      %1139 = vset.pattern.permute.xlu0 0
      %1140 = vperm.xlu0 %1139, %v625
      %v1141 = vpop.permute.xlu0 %1140
      %v1144 = vunpack.c.l.s4 839922192
      %v1145 = vunpack.c.0.s8 %v1144
      %v1146 = vlaneseq
      %v1147 = vshrl.u32 %v1146, 7
      %v1148 = vsub.s32 %v1145, %v1147
      %v1149 = vrot.slane %v1141, %v1148
      %1151 = vset.pattern.permute.xlu0 0
      %1152 = vperm.xlu0 %1151, %v626
      %v1153 = vpop.permute.xlu0 %1152
      %v1156 = vunpack.c.l.s4 839922192
      %v1157 = vunpack.c.0.s8 %v1156
      %v1158 = vlaneseq
      %v1159 = vshrl.u32 %v1158, 7
      %v1160 = vsub.s32 %v1157, %v1159
      %v1161 = vrot.slane %v1153, %v1160
      %1163 = vset.pattern.permute.xlu0 0
      %1164 = vperm.xlu0 %1163, %v627
      %v1165 = vpop.permute.xlu0 %1164
      %v1168 = vunpack.c.l.s4 839922192
      %v1169 = vunpack.c.0.s8 %v1168
      %v1170 = vlaneseq
      %v1171 = vshrl.u32 %v1170, 7
      %v1172 = vsub.s32 %v1169, %v1171
      %v1173 = vrot.slane %v1165, %v1172
      %1175 = vset.pattern.permute.xlu0 0
      %1176 = vperm.xlu0 %1175, %v628
      %v1177 = vpop.permute.xlu0 %1176
      %v1180 = vunpack.c.l.s4 839922192
      %v1181 = vunpack.c.0.s8 %v1180
      %v1182 = vlaneseq
      %v1183 = vshrl.u32 %v1182, 7
      %v1184 = vsub.s32 %v1181, %v1183
      %v1185 = vrot.slane %v1177, %v1184
      %1187 = vset.pattern.permute.xlu0 0
      %1188 = vperm.xlu0 %1187, %v629
      %v1189 = vpop.permute.xlu0 %1188
      %v1192 = vunpack.c.l.s4 839922192
      %v1193 = vunpack.c.0.s8 %v1192
      %v1194 = vlaneseq
      %v1195 = vshrl.u32 %v1194, 7
      %v1196 = vsub.s32 %v1193, %v1195
      %v1197 = vrot.slane %v1189, %v1196
      %1199 = vset.pattern.permute.xlu0 0
      %1200 = vperm.xlu0 %1199, %v630
      %v1201 = vpop.permute.xlu0 %1200
      %v1204 = vunpack.c.l.s4 839922192
      %v1205 = vunpack.c.0.s8 %v1204
      %v1206 = vlaneseq
      %v1207 = vshrl.u32 %v1206, 7
      %v1208 = vsub.s32 %v1205, %v1207
      %v1209 = vrot.slane %v1201, %v1208
      %1211 = vset.pattern.permute.xlu0 0
      %1212 = vperm.xlu0 %1211, %v631
      %v1213 = vpop.permute.xlu0 %1212
      %v1216 = vunpack.c.l.s4 839922192
      %v1217 = vunpack.c.0.s8 %v1216
      %v1218 = vlaneseq
      %v1219 = vshrl.u32 %v1218, 7
      %v1220 = vsub.s32 %v1217, %v1219
      %v1221 = vrot.slane %v1213, %v1220
      %1223 = vset.pattern.permute.xlu0 0
      %1224 = vperm.xlu0 %1223, %v632
      %v1225 = vpop.permute.xlu0 %1224
      %v1228 = vunpack.c.l.s4 839922192
      %v1229 = vunpack.c.0.s8 %v1228
      %v1230 = vlaneseq
      %v1231 = vshrl.u32 %v1230, 7
      %v1232 = vsub.s32 %v1229, %v1231
      %v1233 = vrot.slane %v1225, %v1232
      %1235 = vset.pattern.permute.xlu0 0
      %1236 = vperm.xlu0 %1235, %v633
      %v1237 = vpop.permute.xlu0 %1236
      %v1240 = vunpack.c.l.s4 839922192
      %v1241 = vunpack.c.0.s8 %v1240
      %v1242 = vlaneseq
      %v1243 = vshrl.u32 %v1242, 7
      %v1244 = vsub.s32 %v1241, %v1243
      %v1245 = vrot.slane %v1237, %v1244
      %1247 = vset.pattern.permute.xlu0 0
      %1248 = vperm.xlu0 %1247, %v634
      %v1249 = vpop.permute.xlu0 %1248
      %v1252 = vunpack.c.l.s4 839922192
      %v1253 = vunpack.c.0.s8 %v1252
      %v1254 = vlaneseq
      %v1255 = vshrl.u32 %v1254, 7
      %v1256 = vsub.s32 %v1253, %v1255
      %v1257 = vrot.slane %v1249, %v1256
      %1259 = vset.pattern.permute.xlu0 0
      %1260 = vperm.xlu0 %1259, %v635
      %v1261 = vpop.permute.xlu0 %1260
      %v1264 = vunpack.c.l.s4 839922192
      %v1265 = vunpack.c.0.s8 %v1264
      %v1266 = vlaneseq
      %v1267 = vshrl.u32 %v1266, 7
      %v1268 = vsub.s32 %v1265, %v1267
      %v1269 = vrot.slane %v1261, %v1268
      %1271 = vset.pattern.permute.xlu0 0
      %1272 = vperm.xlu0 %1271, %v636
      %v1273 = vpop.permute.xlu0 %1272
      %v1276 = vunpack.c.l.s4 839922192
      %v1277 = vunpack.c.0.s8 %v1276
      %v1278 = vlaneseq
      %v1279 = vshrl.u32 %v1278, 7
      %v1280 = vsub.s32 %v1277, %v1279
      %v1281 = vrot.slane %v1273, %v1280
      %1283 = vset.pattern.permute.xlu0 0
      %1284 = vperm.xlu0 %1283, %v637
      %v1285 = vpop.permute.xlu0 %1284
      %v1288 = vunpack.c.l.s4 839922192
      %v1289 = vunpack.c.0.s8 %v1288
      %v1290 = vlaneseq
      %v1291 = vshrl.u32 %v1290, 7
      %v1292 = vsub.s32 %v1289, %v1291
      %v1293 = vrot.slane %v1285, %v1292
      %1295 = vset.pattern.permute.xlu0 0
      %1296 = vperm.xlu0 %1295, %v638
      %v1297 = vpop.permute.xlu0 %1296
      %v1300 = vunpack.c.l.s4 839922192
      %v1301 = vunpack.c.0.s8 %v1300
      %v1302 = vlaneseq
      %v1303 = vshrl.u32 %v1302, 7
      %v1304 = vsub.s32 %v1301, %v1303
      %v1305 = vrot.slane %v1297, %v1304
      %1307 = vset.pattern.permute.xlu0 0
      %1308 = vperm.xlu0 %1307, %v639
      %v1309 = vpop.permute.xlu0 %1308
      %v1312 = vunpack.c.l.s4 839922192
      %v1313 = vunpack.c.0.s8 %v1312
      %v1314 = vlaneseq
      %v1315 = vshrl.u32 %v1314, 7
      %v1316 = vsub.s32 %v1313, %v1315
      %v1317 = vrot.slane %v1309, %v1316
      %1319 = vset.pattern.permute.xlu0 0
      %1320 = vperm.xlu0 %1319, %v640
      %v1321 = vpop.permute.xlu0 %1320
      %v1324 = vunpack.c.l.s4 839922192
      %v1325 = vunpack.c.0.s8 %v1324
      %v1326 = vlaneseq
      %v1327 = vshrl.u32 %v1326, 7
      %v1328 = vsub.s32 %v1325, %v1327
      %v1329 = vrot.slane %v1321, %v1328
      %1331 = vset.pattern.permute.xlu0 0
      %1332 = vperm.xlu0 %1331, %v641
      %v1333 = vpop.permute.xlu0 %1332
      %v1336 = vunpack.c.l.s4 839922192
      %v1337 = vunpack.c.0.s8 %v1336
      %v1338 = vlaneseq
      %v1339 = vshrl.u32 %v1338, 7
      %v1340 = vsub.s32 %v1337, %v1339
      %v1341 = vrot.slane %v1333, %v1340
      %1343 = vset.pattern.permute.xlu0 0
      %1344 = vperm.xlu0 %1343, %v642
      %v1345 = vpop.permute.xlu0 %1344
      %v1348 = vunpack.c.l.s4 839922192
      %v1349 = vunpack.c.0.s8 %v1348
      %v1350 = vlaneseq
      %v1351 = vshrl.u32 %v1350, 7
      %v1352 = vsub.s32 %v1349, %v1351
      %v1353 = vrot.slane %v1345, %v1352
      %1355 = vset.pattern.permute.xlu0 0
      %1356 = vperm.xlu0 %1355, %v643
      %v1357 = vpop.permute.xlu0 %1356
      %v1360 = vunpack.c.l.s4 839922192
      %v1361 = vunpack.c.0.s8 %v1360
      %v1362 = vlaneseq
      %v1363 = vshrl.u32 %v1362, 7
      %v1364 = vsub.s32 %v1361, %v1363
      %v1365 = vrot.slane %v1357, %v1364
      %1367 = vset.pattern.permute.xlu0 0
      %1368 = vperm.xlu0 %1367, %v644
      %v1369 = vpop.permute.xlu0 %1368
      %v1372 = vunpack.c.l.s4 839922192
      %v1373 = vunpack.c.0.s8 %v1372
      %v1374 = vlaneseq
      %v1375 = vshrl.u32 %v1374, 7
      %v1376 = vsub.s32 %v1373, %v1375
      %v1377 = vrot.slane %v1369, %v1376
      %1379 = vset.pattern.permute.xlu0 0
      %1380 = vperm.xlu0 %1379, %v645
      %v1381 = vpop.permute.xlu0 %1380
      %v1384 = vunpack.c.l.s4 839922192
      %v1385 = vunpack.c.0.s8 %v1384
      %v1386 = vlaneseq
      %v1387 = vshrl.u32 %v1386, 7
      %v1388 = vsub.s32 %v1385, %v1387
      %v1389 = vrot.slane %v1381, %v1388
      %1391 = vset.pattern.permute.xlu0 0
      %1392 = vperm.xlu0 %1391, %v646
      %v1393 = vpop.permute.xlu0 %1392
      %v1396 = vunpack.c.l.s4 839922192
      %v1397 = vunpack.c.0.s8 %v1396
      %v1398 = vlaneseq
      %v1399 = vshrl.u32 %v1398, 7
      %v1400 = vsub.s32 %v1397, %v1399
      %v1401 = vrot.slane %v1393, %v1400
      %1403 = vset.pattern.permute.xlu0 0
      %1404 = vperm.xlu0 %1403, %v647
      %v1405 = vpop.permute.xlu0 %1404
      %v1408 = vunpack.c.l.s4 839922192
      %v1409 = vunpack.c.0.s8 %v1408
      %v1410 = vlaneseq
      %v1411 = vshrl.u32 %v1410, 7
      %v1412 = vsub.s32 %v1409, %v1411
      %v1413 = vrot.slane %v1405, %v1412
      %1415 = vset.pattern.permute.xlu0 0
      %1416 = vperm.xlu0 %1415, %v648
      %v1417 = vpop.permute.xlu0 %1416
      %v1420 = vunpack.c.l.s4 839922192
      %v1421 = vunpack.c.0.s8 %v1420
      %v1422 = vlaneseq
      %v1423 = vshrl.u32 %v1422, 7
      %v1424 = vsub.s32 %v1421, %v1423
      %v1425 = vrot.slane %v1417, %v1424
      %1427 = vset.pattern.permute.xlu0 0
      %1428 = vperm.xlu0 %1427, %v649
      %v1429 = vpop.permute.xlu0 %1428
      %v1432 = vunpack.c.l.s4 839922192
      %v1433 = vunpack.c.0.s8 %v1432
      %v1434 = vlaneseq
      %v1435 = vshrl.u32 %v1434, 7
      %v1436 = vsub.s32 %v1433, %v1435
      %v1437 = vrot.slane %v1429, %v1436
      %1439 = vset.pattern.permute.xlu0 0
      %1440 = vperm.xlu0 %1439, %v650
      %v1441 = vpop.permute.xlu0 %1440
      %v1444 = vunpack.c.l.s4 839922192
      %v1445 = vunpack.c.0.s8 %v1444
      %v1446 = vlaneseq
      %v1447 = vshrl.u32 %v1446, 7
      %v1448 = vsub.s32 %v1445, %v1447
      %v1449 = vrot.slane %v1441, %v1448
      %1451 = vset.pattern.permute.xlu0 0
      %1452 = vperm.xlu0 %1451, %v651
      %v1453 = vpop.permute.xlu0 %1452
      %v1456 = vunpack.c.l.s4 839922192
      %v1457 = vunpack.c.0.s8 %v1456
      %v1458 = vlaneseq
      %v1459 = vshrl.u32 %v1458, 7
      %v1460 = vsub.s32 %v1457, %v1459
      %v1461 = vrot.slane %v1453, %v1460
      %1463 = vset.pattern.permute.xlu0 0
      %1464 = vperm.xlu0 %1463, %v652
      %v1465 = vpop.permute.xlu0 %1464
      %v1468 = vunpack.c.l.s4 839922192
      %v1469 = vunpack.c.0.s8 %v1468
      %v1470 = vlaneseq
      %v1471 = vshrl.u32 %v1470, 7
      %v1472 = vsub.s32 %v1469, %v1471
      %v1473 = vrot.slane %v1465, %v1472
      %1475 = vset.pattern.permute.xlu0 0
      %1476 = vperm.xlu0 %1475, %v653
      %v1477 = vpop.permute.xlu0 %1476
      %v1480 = vunpack.c.l.s4 839922192
      %v1481 = vunpack.c.0.s8 %v1480
      %v1482 = vlaneseq
      %v1483 = vshrl.u32 %v1482, 7
      %v1484 = vsub.s32 %v1481, %v1483
      %v1485 = vrot.slane %v1477, %v1484
      %vm1518 = vcmask 1040384
      %vm1519 = vcmask 1044484
      %vm1520 = vmor %vm1518, %vm1519
      %v1521 = vrot.slane %v1113, 7
      %v1522 = vrot.slane %v1521, 4
      %v1523 = vrot.slane %v1125, 7
      %v1524 = vsel %vm1520, %v1522, %v1523
      %v1525 = vrot.slane %v1523, 4
      %v1526 = vrot.slane %v1137, 7
      %v1527 = vsel %vm1520, %v1525, %v1526
      %v1528 = vrot.slane %v1526, 4
      %v1529 = vrot.slane %v1149, 7
      %v1530 = vsel %vm1520, %v1528, %v1529
      %v1531 = vrot.slane %v1529, 4
      %v1532 = vrot.slane %v1161, 7
      %v1533 = vsel %vm1520, %v1531, %v1532
      %v1534 = vrot.slane %v1532, 4
      %v1535 = vrot.slane %v1173, 7
      %v1536 = vsel %vm1520, %v1534, %v1535
      %v1537 = vrot.slane %v1535, 4
      %v1538 = vrot.slane %v1185, 7
      %v1539 = vsel %vm1520, %v1537, %v1538
      %v1540 = vrot.slane %v1538, 4
      %v1541 = vrot.slane %v1197, 7
      %v1542 = vsel %vm1520, %v1540, %v1541
      %v1543 = vrot.slane %v1541, 4
      %v1544 = vrot.slane %v1209, 7
      %v1545 = vsel %vm1520, %v1543, %v1544
      %v1546 = vrot.slane %v1544, 4
      %v1547 = vrot.slane %v1221, 7
      %v1548 = vsel %vm1520, %v1546, %v1547
      %v1549 = vrot.slane %v1547, 4
      %v1550 = vrot.slane %v1233, 7
      %v1551 = vsel %vm1520, %v1549, %v1550
      %v1552 = vrot.slane %v1550, 4
      %v1553 = vrot.slane %v1245, 7
      %v1554 = vsel %vm1520, %v1552, %v1553
      %v1555 = vrot.slane %v1553, 4
      %v1556 = vrot.slane %v1257, 7
      %v1557 = vsel %vm1520, %v1555, %v1556
      %v1558 = vrot.slane %v1556, 4
      %v1559 = vrot.slane %v1269, 7
      %v1560 = vsel %vm1520, %v1558, %v1559
      %v1561 = vrot.slane %v1559, 4
      %v1562 = vrot.slane %v1281, 7
      %v1563 = vsel %vm1520, %v1561, %v1562
      %v1564 = vrot.slane %v1562, 4
      %v1565 = vrot.slane %v1293, 7
      %v1566 = vsel %vm1520, %v1564, %v1565
      %v1567 = vrot.slane %v1565, 4
      %v1568 = vrot.slane %v1305, 7
      %v1569 = vsel %vm1520, %v1567, %v1568
      %v1570 = vrot.slane %v1568, 4
      %v1571 = vrot.slane %v1317, 7
      %v1572 = vsel %vm1520, %v1570, %v1571
      %v1573 = vrot.slane %v1571, 4
      %v1574 = vrot.slane %v1329, 7
      %v1575 = vsel %vm1520, %v1573, %v1574
      %v1576 = vrot.slane %v1574, 4
      %v1577 = vrot.slane %v1341, 7
      %v1578 = vsel %vm1520, %v1576, %v1577
      %v1579 = vrot.slane %v1577, 4
      %v1580 = vrot.slane %v1353, 7
      %v1581 = vsel %vm1520, %v1579, %v1580
      %v1582 = vrot.slane %v1580, 4
      %v1583 = vrot.slane %v1365, 7
      %v1584 = vsel %vm1520, %v1582, %v1583
      %v1585 = vrot.slane %v1583, 4
      %v1586 = vrot.slane %v1377, 7
      %v1587 = vsel %vm1520, %v1585, %v1586
      %v1588 = vrot.slane %v1586, 4
      %v1589 = vrot.slane %v1389, 7
      %v1590 = vsel %vm1520, %v1588, %v1589
      %v1591 = vrot.slane %v1589, 4
      %v1592 = vrot.slane %v1401, 7
      %v1593 = vsel %vm1520, %v1591, %v1592
      %v1594 = vrot.slane %v1592, 4
      %v1595 = vrot.slane %v1413, 7
      %v1596 = vsel %vm1520, %v1594, %v1595
      %v1597 = vrot.slane %v1595, 4
      %v1598 = vrot.slane %v1425, 7
      %v1599 = vsel %vm1520, %v1597, %v1598
      %v1600 = vrot.slane %v1598, 4
      %v1601 = vrot.slane %v1437, 7
      %v1602 = vsel %vm1520, %v1600, %v1601
      %v1603 = vrot.slane %v1601, 4
      %v1604 = vrot.slane %v1449, 7
      %v1605 = vsel %vm1520, %v1603, %v1604
      %v1606 = vrot.slane %v1604, 4
      %v1607 = vrot.slane %v1461, 7
      %v1608 = vsel %vm1520, %v1606, %v1607
      %v1609 = vrot.slane %v1607, 4
      %v1610 = vrot.slane %v1473, 7
      %v1611 = vsel %vm1520, %v1609, %v1610
      %v1612 = vrot.slane %v1610, 4
      %v1613 = vrot.slane %v1485, 7
      %v1614 = vsel %vm1520, %v1612, %v1613
      %v1615 = vrot.slane %v1613, 4
      %v1649 = vmul.bf16 %v516, %v1521
      %v1650 = vmul.bf16 %v517, %v1524
      %v1651 = vmul.bf16 %v518, %v1527
      %v1652 = vmul.bf16 %v519, %v1530
      %v1653 = vmul.bf16 %v520, %v1533
      %v1654 = vmul.bf16 %v521, %v1536
      %v1655 = vmul.bf16 %v522, %v1539
      %v1656 = vmul.bf16 %v523, %v1542
      %v1657 = vmul.bf16 %v524, %v1545
      %v1658 = vmul.bf16 %v525, %v1548
      %v1659 = vmul.bf16 %v526, %v1551
      %v1660 = vmul.bf16 %v527, %v1554
      %v1661 = vmul.bf16 %v528, %v1557
      %v1662 = vmul.bf16 %v529, %v1560
      %v1663 = vmul.bf16 %v530, %v1563
      %v1664 = vmul.bf16 %v531, %v1566
      %v1665 = vmul.bf16 %v532, %v1569
      %v1666 = vmul.bf16 %v533, %v1572
      %v1667 = vmul.bf16 %v534, %v1575
      %v1668 = vmul.bf16 %v535, %v1578
      %v1669 = vmul.bf16 %v536, %v1581
      %v1670 = vmul.bf16 %v537, %v1584
      %v1671 = vmul.bf16 %v538, %v1587
      %v1672 = vmul.bf16 %v539, %v1590
      %v1673 = vmul.bf16 %v540, %v1593
      %v1674 = vmul.bf16 %v541, %v1596
      %v1675 = vmul.bf16 %v542, %v1599
      %v1676 = vmul.bf16 %v543, %v1602
      %v1677 = vmul.bf16 %v544, %v1605
      %v1678 = vmul.bf16 %v545, %v1608
      %v1679 = vmul.bf16 %v546, %v1611
      %v1680 = vmul.bf16 %v547, %v1614
      %v1681 = vmul.bf16 %v548, %v1615
      %v1682 = vmul.bf16 %v553, %v1521
      %v1683 = vmul.bf16 %v554, %v1524
      %v1684 = vmul.bf16 %v555, %v1527
      %v1685 = vmul.bf16 %v556, %v1530
      %v1686 = vmul.bf16 %v557, %v1533
      %v1687 = vmul.bf16 %v558, %v1536
      %v1688 = vmul.bf16 %v559, %v1539
      %v1689 = vmul.bf16 %v560, %v1542
      %v1690 = vmul.bf16 %v561, %v1545
      %v1691 = vmul.bf16 %v562, %v1548
      %v1692 = vmul.bf16 %v563, %v1551
      %v1693 = vmul.bf16 %v564, %v1554
      %v1694 = vmul.bf16 %v565, %v1557
      %v1695 = vmul.bf16 %v566, %v1560
      %v1696 = vmul.bf16 %v567, %v1563
      %v1697 = vmul.bf16 %v568, %v1566
      %v1698 = vmul.bf16 %v569, %v1569
      %v1699 = vmul.bf16 %v570, %v1572
      %v1700 = vmul.bf16 %v571, %v1575
      %v1701 = vmul.bf16 %v572, %v1578
      %v1702 = vmul.bf16 %v573, %v1581
      %v1703 = vmul.bf16 %v574, %v1584
      %v1704 = vmul.bf16 %v575, %v1587
      %v1705 = vmul.bf16 %v576, %v1590
      %v1706 = vmul.bf16 %v577, %v1593
      %v1707 = vmul.bf16 %v578, %v1596
      %v1708 = vmul.bf16 %v579, %v1599
      %v1709 = vmul.bf16 %v580, %v1602
      %v1710 = vmul.bf16 %v581, %v1605
      %v1711 = vmul.bf16 %v582, %v1608
      %v1712 = vmul.bf16 %v583, %v1611
      %v1713 = vmul.bf16 %v584, %v1614
      %v1714 = vmul.bf16 %v585, %v1615
      %v1715 = vmul.bf16 %v518, %v665
      %v1716 = vmul.bf16 %v519, %v677
      %v1717 = vmul.bf16 %v520, %v689
      %v1718 = vmul.bf16 %v521, %v701
      %v1719 = vmul.bf16 %v522, %v713
      %v1720 = vmul.bf16 %v523, %v725
      %v1721 = vmul.bf16 %v524, %v737
      %v1722 = vmul.bf16 %v525, %v749
      %v1723 = vmul.bf16 %v526, %v761
      %v1724 = vmul.bf16 %v527, %v773
      %v1725 = vmul.bf16 %v528, %v785
      %v1726 = vmul.bf16 %v529, %v797
      %v1727 = vmul.bf16 %v530, %v809
      %v1728 = vmul.bf16 %v531, %v821
      %v1729 = vmul.bf16 %v532, %v833
      %v1730 = vmul.bf16 %v533, %v845
      %v1731 = vmul.bf16 %v534, %v857
      %v1732 = vmul.bf16 %v535, %v869
      %v1733 = vmul.bf16 %v536, %v881
      %v1734 = vmul.bf16 %v537, %v893
      %v1735 = vmul.bf16 %v538, %v905
      %v1736 = vmul.bf16 %v539, %v917
      %v1737 = vmul.bf16 %v540, %v929
      %v1738 = vmul.bf16 %v541, %v941
      %v1739 = vmul.bf16 %v542, %v953
      %v1740 = vmul.bf16 %v543, %v965
      %v1741 = vmul.bf16 %v544, %v977
      %v1742 = vmul.bf16 %v545, %v989
      %v1743 = vmul.bf16 %v546, %v1001
      %v1744 = vmul.bf16 %v547, %v1013
      %v1745 = vmul.bf16 %v548, %v1025
      %v1746 = vmul.bf16 %v549, %v1037
      %v1747 = vmul.bf16 %v555, %v665
      %v1748 = vmul.bf16 %v556, %v677
      %v1749 = vmul.bf16 %v557, %v689
      %v1750 = vmul.bf16 %v558, %v701
      %v1751 = vmul.bf16 %v559, %v713
      %v1752 = vmul.bf16 %v560, %v725
      %v1753 = vmul.bf16 %v561, %v737
      %v1754 = vmul.bf16 %v562, %v749
      %v1755 = vmul.bf16 %v563, %v761
      %v1756 = vmul.bf16 %v564, %v773
      %v1757 = vmul.bf16 %v565, %v785
      %v1758 = vmul.bf16 %v566, %v797
      %v1759 = vmul.bf16 %v567, %v809
      %v1760 = vmul.bf16 %v568, %v821
      %v1761 = vmul.bf16 %v569, %v833
      %v1762 = vmul.bf16 %v570, %v845
      %v1763 = vmul.bf16 %v571, %v857
      %v1764 = vmul.bf16 %v572, %v869
      %v1765 = vmul.bf16 %v573, %v881
      %v1766 = vmul.bf16 %v574, %v893
      %v1767 = vmul.bf16 %v575, %v905
      %v1768 = vmul.bf16 %v576, %v917
      %v1769 = vmul.bf16 %v577, %v929
      %v1770 = vmul.bf16 %v578, %v941
      %v1771 = vmul.bf16 %v579, %v953
      %v1772 = vmul.bf16 %v580, %v965
      %v1773 = vmul.bf16 %v581, %v977
      %v1774 = vmul.bf16 %v582, %v989
      %v1775 = vmul.bf16 %v583, %v1001
      %v1776 = vmul.bf16 %v584, %v1013
      %v1777 = vmul.bf16 %v585, %v1025
      %v1778 = vmul.bf16 %v586, %v1037
      %v1779 = vmul.bf16 %v518, %v1521
      %v1780 = vmul.bf16 %v519, %v1524
      %v1781 = vmul.bf16 %v520, %v1527
      %v1782 = vmul.bf16 %v521, %v1530
      %v1783 = vmul.bf16 %v522, %v1533
      %v1784 = vmul.bf16 %v523, %v1536
      %v1785 = vmul.bf16 %v524, %v1539
      %v1786 = vmul.bf16 %v525, %v1542
      %v1787 = vmul.bf16 %v526, %v1545
      %v1788 = vmul.bf16 %v527, %v1548
      %v1789 = vmul.bf16 %v528, %v1551
      %v1790 = vmul.bf16 %v529, %v1554
      %v1791 = vmul.bf16 %v530, %v1557
      %v1792 = vmul.bf16 %v531, %v1560
      %v1793 = vmul.bf16 %v532, %v1563
      %v1794 = vmul.bf16 %v533, %v1566
      %v1795 = vmul.bf16 %v534, %v1569
      %v1796 = vmul.bf16 %v535, %v1572
      %v1797 = vmul.bf16 %v536, %v1575
      %v1798 = vmul.bf16 %v537, %v1578
      %v1799 = vmul.bf16 %v538, %v1581
      %v1800 = vmul.bf16 %v539, %v1584
      %v1801 = vmul.bf16 %v540, %v1587
      %v1802 = vmul.bf16 %v541, %v1590
      %v1803 = vmul.bf16 %v542, %v1593
      %v1804 = vmul.bf16 %v543, %v1596
      %v1805 = vmul.bf16 %v544, %v1599
      %v1806 = vmul.bf16 %v545, %v1602
      %v1807 = vmul.bf16 %v546, %v1605
      %v1808 = vmul.bf16 %v547, %v1608
      %v1809 = vmul.bf16 %v548, %v1611
      %v1810 = vmul.bf16 %v549, %v1614
      %v1811 = vmul.bf16 %v550, %v1615
      %v1812 = vmul.bf16 %v555, %v1521
      %v1813 = vmul.bf16 %v556, %v1524
      %v1814 = vmul.bf16 %v557, %v1527
      %v1815 = vmul.bf16 %v558, %v1530
      %v1816 = vmul.bf16 %v559, %v1533
      %v1817 = vmul.bf16 %v560, %v1536
      %v1818 = vmul.bf16 %v561, %v1539
      %v1819 = vmul.bf16 %v562, %v1542
      %v1820 = vmul.bf16 %v563, %v1545
      %v1821 = vmul.bf16 %v564, %v1548
      %v1822 = vmul.bf16 %v565, %v1551
      %v1823 = vmul.bf16 %v566, %v1554
      %v1824 = vmul.bf16 %v567, %v1557
      %v1825 = vmul.bf16 %v568, %v1560
      %v1826 = vmul.bf16 %v569, %v1563
      %v1827 = vmul.bf16 %v570, %v1566
      %v1828 = vmul.bf16 %v571, %v1569
      %v1829 = vmul.bf16 %v572, %v1572
      %v1830 = vmul.bf16 %v573, %v1575
      %v1831 = vmul.bf16 %v574, %v1578
      %v1832 = vmul.bf16 %v575, %v1581
      %v1833 = vmul.bf16 %v576, %v1584
      %v1834 = vmul.bf16 %v577, %v1587
      %v1835 = vmul.bf16 %v578, %v1590
      %v1836 = vmul.bf16 %v579, %v1593
      %v1837 = vmul.bf16 %v580, %v1596
      %v1838 = vmul.bf16 %v581, %v1599
      %v1839 = vmul.bf16 %v582, %v1602
      %v1840 = vmul.bf16 %v583, %v1605
      %v1841 = vmul.bf16 %v584, %v1608
      %v1842 = vmul.bf16 %v585, %v1611
      %v1843 = vmul.bf16 %v586, %v1614
      %v1844 = vmul.bf16 %v587, %v1615
      %v1845 = vmul.bf16 %v520, %v665
      %v1846 = vmul.bf16 %v521, %v677
      %v1847 = vmul.bf16 %v522, %v689
      %v1848 = vmul.bf16 %v523, %v701
      %v1849 = vmul.bf16 %v524, %v713
      %v1850 = vmul.bf16 %v525, %v725
      %v1851 = vmul.bf16 %v526, %v737
      %v1852 = vmul.bf16 %v527, %v749
      %v1853 = vmul.bf16 %v528, %v761
      %v1854 = vmul.bf16 %v529, %v773
      %v1855 = vmul.bf16 %v530, %v785
      %v1856 = vmul.bf16 %v531, %v797
      %v1857 = vmul.bf16 %v532, %v809
      %v1858 = vmul.bf16 %v533, %v821
      %v1859 = vmul.bf16 %v534, %v833
      %v1860 = vmul.bf16 %v535, %v845
      %v1861 = vmul.bf16 %v536, %v857
      %v1862 = vmul.bf16 %v537, %v869
      %v1863 = vmul.bf16 %v538, %v881
      %v1864 = vmul.bf16 %v539, %v893
      %v1865 = vmul.bf16 %v540, %v905
      %v1866 = vmul.bf16 %v541, %v917
      %v1867 = vmul.bf16 %v542, %v929
      %v1868 = vmul.bf16 %v543, %v941
      %v1869 = vmul.bf16 %v544, %v953
      %v1870 = vmul.bf16 %v545, %v965
      %v1871 = vmul.bf16 %v546, %v977
      %v1872 = vmul.bf16 %v547, %v989
      %v1873 = vmul.bf16 %v548, %v1001
      %v1874 = vmul.bf16 %v549, %v1013
      %v1875 = vmul.bf16 %v550, %v1025
      %v1876 = vmul.bf16 %v551, %v1037
      %v1877 = vmul.bf16 %v557, %v665
      %v1878 = vmul.bf16 %v558, %v677
      %v1879 = vmul.bf16 %v559, %v689
      %v1880 = vmul.bf16 %v560, %v701
      %v1881 = vmul.bf16 %v561, %v713
      %v1882 = vmul.bf16 %v562, %v725
      %v1883 = vmul.bf16 %v563, %v737
      %v1884 = vmul.bf16 %v564, %v749
      %v1885 = vmul.bf16 %v565, %v761
      %v1886 = vmul.bf16 %v566, %v773
      %v1887 = vmul.bf16 %v567, %v785
      %v1888 = vmul.bf16 %v568, %v797
      %v1889 = vmul.bf16 %v569, %v809
      %v1890 = vmul.bf16 %v570, %v821
      %v1891 = vmul.bf16 %v571, %v833
      %v1892 = vmul.bf16 %v572, %v845
      %v1893 = vmul.bf16 %v573, %v857
      %v1894 = vmul.bf16 %v574, %v869
      %v1895 = vmul.bf16 %v575, %v881
      %v1896 = vmul.bf16 %v576, %v893
      %v1897 = vmul.bf16 %v577, %v905
      %v1898 = vmul.bf16 %v578, %v917
      %v1899 = vmul.bf16 %v579, %v929
      %v1900 = vmul.bf16 %v580, %v941
      %v1901 = vmul.bf16 %v581, %v953
      %v1902 = vmul.bf16 %v582, %v965
      %v1903 = vmul.bf16 %v583, %v977
      %v1904 = vmul.bf16 %v584, %v989
      %v1905 = vmul.bf16 %v585, %v1001
      %v1906 = vmul.bf16 %v586, %v1013
      %v1907 = vmul.bf16 %v587, %v1025
      %v1908 = vmul.bf16 %v588, %v1037
      %v1909 = vmul.bf16 %v520, %v1521
      %v1910 = vmul.bf16 %v521, %v1524
      %v1911 = vmul.bf16 %v522, %v1527
      %v1912 = vmul.bf16 %v523, %v1530
      %v1913 = vmul.bf16 %v524, %v1533
      %v1914 = vmul.bf16 %v525, %v1536
      %v1915 = vmul.bf16 %v526, %v1539
      %v1916 = vmul.bf16 %v527, %v1542
      %v1917 = vmul.bf16 %v528, %v1545
      %v1918 = vmul.bf16 %v529, %v1548
      %v1919 = vmul.bf16 %v530, %v1551
      %v1920 = vmul.bf16 %v531, %v1554
      %v1921 = vmul.bf16 %v532, %v1557
      %v1922 = vmul.bf16 %v533, %v1560
      %v1923 = vmul.bf16 %v534, %v1563
      %v1924 = vmul.bf16 %v535, %v1566
      %v1925 = vmul.bf16 %v536, %v1569
      %v1926 = vmul.bf16 %v537, %v1572
      %v1927 = vmul.bf16 %v538, %v1575
      %v1928 = vmul.bf16 %v539, %v1578
      %v1929 = vmul.bf16 %v540, %v1581
      %v1930 = vmul.bf16 %v541, %v1584
      %v1931 = vmul.bf16 %v542, %v1587
      %v1932 = vmul.bf16 %v543, %v1590
      %v1933 = vmul.bf16 %v544, %v1593
      %v1934 = vmul.bf16 %v545, %v1596
      %v1935 = vmul.bf16 %v546, %v1599
      %v1936 = vmul.bf16 %v547, %v1602
      %v1937 = vmul.bf16 %v548, %v1605
      %v1938 = vmul.bf16 %v549, %v1608
      %v1939 = vmul.bf16 %v550, %v1611
      %v1940 = vmul.bf16 %v551, %v1614
      %v1941 = vmul.bf16 %v552, %v1615
      %v1942 = vmul.bf16 %v557, %v1521
      %v1943 = vmul.bf16 %v558, %v1524
      %v1944 = vmul.bf16 %v559, %v1527
      %v1945 = vmul.bf16 %v560, %v1530
      %v1946 = vmul.bf16 %v561, %v1533
      %v1947 = vmul.bf16 %v562, %v1536
      %v1948 = vmul.bf16 %v563, %v1539
      %v1949 = vmul.bf16 %v564, %v1542
      %v1950 = vmul.bf16 %v565, %v1545
      %v1951 = vmul.bf16 %v566, %v1548
      %v1952 = vmul.bf16 %v567, %v1551
      %v1953 = vmul.bf16 %v568, %v1554
      %v1954 = vmul.bf16 %v569, %v1557
      %v1955 = vmul.bf16 %v570, %v1560
      %v1956 = vmul.bf16 %v571, %v1563
      %v1957 = vmul.bf16 %v572, %v1566
      %v1958 = vmul.bf16 %v573, %v1569
      %v1959 = vmul.bf16 %v574, %v1572
      %v1960 = vmul.bf16 %v575, %v1575
      %v1961 = vmul.bf16 %v576, %v1578
      %v1962 = vmul.bf16 %v577, %v1581
      %v1963 = vmul.bf16 %v578, %v1584
      %v1964 = vmul.bf16 %v579, %v1587
      %v1965 = vmul.bf16 %v580, %v1590
      %v1966 = vmul.bf16 %v581, %v1593
      %v1967 = vmul.bf16 %v582, %v1596
      %v1968 = vmul.bf16 %v583, %v1599
      %v1969 = vmul.bf16 %v584, %v1602
      %v1970 = vmul.bf16 %v585, %v1605
      %v1971 = vmul.bf16 %v586, %v1608
      %v1972 = vmul.bf16 %v587, %v1611
      %v1973 = vmul.bf16 %v588, %v1614
      %v1974 = vmul.bf16 %v589, %v1615
      %v2039 = vunpack.c.l.b16 %v1038
      %v2040 = vunpack.c.l.b16 %v1039
      %v2041 = vunpack.c.l.b16 %v1040
      %v2042 = vunpack.c.l.b16 %v1041
      %v2043 = vunpack.c.l.b16 %v1042
      %v2044 = vunpack.c.l.b16 %v1043
      %v2045 = vunpack.c.l.b16 %v1044
      %v2046 = vunpack.c.l.b16 %v1045
      %v2047 = vunpack.c.l.b16 %v1046
      %v2048 = vunpack.c.l.b16 %v1047
      %v2049 = vunpack.c.l.b16 %v1048
      %v2050 = vunpack.c.l.b16 %v1049
      %v2051 = vunpack.c.l.b16 %v1050
      %v2052 = vunpack.c.l.b16 %v1051
      %v2053 = vunpack.c.l.b16 %v1052
      %v2054 = vunpack.c.l.b16 %v1053
      %v2055 = vunpack.c.l.b16 %v1054
      %v2056 = vunpack.c.l.b16 %v1055
      %v2057 = vunpack.c.l.b16 %v1056
      %v2058 = vunpack.c.l.b16 %v1057
      %v2059 = vunpack.c.l.b16 %v1058
      %v2060 = vunpack.c.l.b16 %v1059
      %v2061 = vunpack.c.l.b16 %v1060
      %v2062 = vunpack.c.l.b16 %v1061
      %v2063 = vunpack.c.l.b16 %v1062
      %v2064 = vunpack.c.l.b16 %v1063
      %v2065 = vunpack.c.l.b16 %v1064
      %v2066 = vunpack.c.l.b16 %v1065
      %v2067 = vunpack.c.l.b16 %v1066
      %v2068 = vunpack.c.l.b16 %v1067
      %v2069 = vunpack.c.l.b16 %v1068
      %v2070 = vunpack.c.l.b16 %v1069
      %v2071 = vunpack.c.l.b16 %v1070
      %v2072 = vunpack.c.l.b16 %v1071
      %v2073 = vunpack.c.l.b16 %v1072
      %v2074 = vunpack.c.l.b16 %v1073
      %v2075 = vunpack.c.l.b16 %v1074
      %v2076 = vunpack.c.l.b16 %v1075
      %v2077 = vunpack.c.l.b16 %v1076
      %v2078 = vunpack.c.l.b16 %v1077
      %v2079 = vunpack.c.l.b16 %v1078
      %v2080 = vunpack.c.l.b16 %v1079
      %v2081 = vunpack.c.l.b16 %v1080
      %v2082 = vunpack.c.l.b16 %v1081
      %v2083 = vunpack.c.l.b16 %v1082
      %v2084 = vunpack.c.l.b16 %v1083
      %v2085 = vunpack.c.l.b16 %v1084
      %v2086 = vunpack.c.l.b16 %v1085
      %v2087 = vunpack.c.l.b16 %v1086
      %v2088 = vunpack.c.l.b16 %v1087
      %v2089 = vunpack.c.l.b16 %v1088
      %v2090 = vunpack.c.l.b16 %v1089
      %v2091 = vunpack.c.l.b16 %v1090
      %v2092 = vunpack.c.l.b16 %v1091
      %v2093 = vunpack.c.l.b16 %v1092
      %v2094 = vunpack.c.l.b16 %v1093
      %v2095 = vunpack.c.l.b16 %v1094
      %v2096 = vunpack.c.l.b16 %v1095
      %v2097 = vunpack.c.l.b16 %v1096
      %v2098 = vunpack.c.l.b16 %v1097
      %v2099 = vunpack.c.l.b16 %v1098
      %v2100 = vunpack.c.l.b16 %v1099
      %v2101 = vunpack.c.l.b16 %v1100
      %v2102 = vunpack.c.l.b16 %v1101
      %v2103 = vpack.c.b16 %v2040, %v2039
      %v2104 = vpack.c.b16 %v2042, %v2041
      %v2105 = vpack.c.b16 %v2044, %v2043
      %v2106 = vpack.c.b16 %v2046, %v2045
      %v2107 = vpack.c.b16 %v2048, %v2047
      %v2108 = vpack.c.b16 %v2050, %v2049
      %v2109 = vpack.c.b16 %v2052, %v2051
      %v2110 = vpack.c.b16 %v2054, %v2053
      %v2111 = vpack.c.b16 %v2056, %v2055
      %v2112 = vpack.c.b16 %v2058, %v2057
      %v2113 = vpack.c.b16 %v2060, %v2059
      %v2114 = vpack.c.b16 %v2062, %v2061
      %v2115 = vpack.c.b16 %v2064, %v2063
      %v2116 = vpack.c.b16 %v2066, %v2065
      %v2117 = vpack.c.b16 %v2068, %v2067
      %v2118 = vpack.c.b16 %v2070, %v2069
      %v2119 = vpack.c.b16 %v2072, %v2071
      %v2120 = vpack.c.b16 %v2074, %v2073
      %v2121 = vpack.c.b16 %v2076, %v2075
      %v2122 = vpack.c.b16 %v2078, %v2077
      %v2123 = vpack.c.b16 %v2080, %v2079
      %v2124 = vpack.c.b16 %v2082, %v2081
      %v2125 = vpack.c.b16 %v2084, %v2083
      %v2126 = vpack.c.b16 %v2086, %v2085
      %v2127 = vpack.c.b16 %v2088, %v2087
      %v2128 = vpack.c.b16 %v2090, %v2089
      %v2129 = vpack.c.b16 %v2092, %v2091
      %v2130 = vpack.c.b16 %v2094, %v2093
      %v2131 = vpack.c.b16 %v2096, %v2095
      %v2132 = vpack.c.b16 %v2098, %v2097
      %v2133 = vpack.c.b16 %v2100, %v2099
      %v2134 = vpack.c.b16 %v2102, %v2101
      %v2201 = vunpack.c.l.b16 %v516
      %v2202 = vunpack.c.l.b16 %v517
      %v2203 = vunpack.c.l.b16 %v518
      %v2204 = vunpack.c.l.b16 %v519
      %v2205 = vunpack.c.l.b16 %v520
      %v2206 = vunpack.c.l.b16 %v521
      %v2207 = vunpack.c.l.b16 %v522
      %v2208 = vunpack.c.l.b16 %v523
      %v2209 = vunpack.c.l.b16 %v524
      %v2210 = vunpack.c.l.b16 %v525
      %v2211 = vunpack.c.l.b16 %v526
      %v2212 = vunpack.c.l.b16 %v527
      %v2213 = vunpack.c.l.b16 %v528
      %v2214 = vunpack.c.l.b16 %v529
      %v2215 = vunpack.c.l.b16 %v530
      %v2216 = vunpack.c.l.b16 %v531
      %v2217 = vunpack.c.l.b16 %v532
      %v2218 = vunpack.c.l.b16 %v533
      %v2219 = vunpack.c.l.b16 %v534
      %v2220 = vunpack.c.l.b16 %v535
      %v2221 = vunpack.c.l.b16 %v536
      %v2222 = vunpack.c.l.b16 %v537
      %v2223 = vunpack.c.l.b16 %v538
      %v2224 = vunpack.c.l.b16 %v539
      %v2225 = vunpack.c.l.b16 %v540
      %v2226 = vunpack.c.l.b16 %v541
      %v2227 = vunpack.c.l.b16 %v542
      %v2228 = vunpack.c.l.b16 %v543
      %v2229 = vunpack.c.l.b16 %v544
      %v2230 = vunpack.c.l.b16 %v545
      %v2231 = vunpack.c.l.b16 %v546
      %v2232 = vunpack.c.l.b16 %v547
      %v2233 = vunpack.c.l.b16 %v548
      %v2234 = vunpack.c.l.b16 %v553
      %v2235 = vunpack.c.l.b16 %v554
      %v2236 = vunpack.c.l.b16 %v555
      %v2237 = vunpack.c.l.b16 %v556
      %v2238 = vunpack.c.l.b16 %v557
      %v2239 = vunpack.c.l.b16 %v558
      %v2240 = vunpack.c.l.b16 %v559
      %v2241 = vunpack.c.l.b16 %v560
      %v2242 = vunpack.c.l.b16 %v561
      %v2243 = vunpack.c.l.b16 %v562
      %v2244 = vunpack.c.l.b16 %v563
      %v2245 = vunpack.c.l.b16 %v564
      %v2246 = vunpack.c.l.b16 %v565
      %v2247 = vunpack.c.l.b16 %v566
      %v2248 = vunpack.c.l.b16 %v567
      %v2249 = vunpack.c.l.b16 %v568
      %v2250 = vunpack.c.l.b16 %v569
      %v2251 = vunpack.c.l.b16 %v570
      %v2252 = vunpack.c.l.b16 %v571
      %v2253 = vunpack.c.l.b16 %v572
      %v2254 = vunpack.c.l.b16 %v573
      %v2255 = vunpack.c.l.b16 %v574
      %v2256 = vunpack.c.l.b16 %v575
      %v2257 = vunpack.c.l.b16 %v576
      %v2258 = vunpack.c.l.b16 %v577
      %v2259 = vunpack.c.l.b16 %v578
      %v2260 = vunpack.c.l.b16 %v579
      %v2261 = vunpack.c.l.b16 %v580
      %v2262 = vunpack.c.l.b16 %v581
      %v2263 = vunpack.c.l.b16 %v582
      %v2264 = vunpack.c.l.b16 %v583
      %v2265 = vunpack.c.l.b16 %v584
      %v2266 = vunpack.c.l.b16 %v585
      %v2267 = vpack.c.b16 %v2202, %v2201
      %v2268 = vpack.c.b16 %v2204, %v2203
      %v2269 = vpack.c.b16 %v2206, %v2205
      %v2270 = vpack.c.b16 %v2208, %v2207
      %v2271 = vpack.c.b16 %v2210, %v2209
      %v2272 = vpack.c.b16 %v2212, %v2211
      %v2273 = vpack.c.b16 %v2214, %v2213
      %v2274 = vpack.c.b16 %v2216, %v2215
      %v2275 = vpack.c.b16 %v2218, %v2217
      %v2276 = vpack.c.b16 %v2220, %v2219
      %v2277 = vpack.c.b16 %v2222, %v2221
      %v2278 = vpack.c.b16 %v2224, %v2223
      %v2279 = vpack.c.b16 %v2226, %v2225
      %v2280 = vpack.c.b16 %v2228, %v2227
      %v2281 = vpack.c.b16 %v2230, %v2229
      %v2282 = vpack.c.b16 %v2232, %v2231
      %v2283 = vpack.c.b16 %v2233, %v2233
      %v2284 = vpack.c.b16 %v2235, %v2234
      %v2285 = vpack.c.b16 %v2237, %v2236
      %v2286 = vpack.c.b16 %v2239, %v2238
      %v2287 = vpack.c.b16 %v2241, %v2240
      %v2288 = vpack.c.b16 %v2243, %v2242
      %v2289 = vpack.c.b16 %v2245, %v2244
      %v2290 = vpack.c.b16 %v2247, %v2246
      %v2291 = vpack.c.b16 %v2249, %v2248
      %v2292 = vpack.c.b16 %v2251, %v2250
      %v2293 = vpack.c.b16 %v2253, %v2252
      %v2294 = vpack.c.b16 %v2255, %v2254
      %v2295 = vpack.c.b16 %v2257, %v2256
      %v2296 = vpack.c.b16 %v2259, %v2258
      %v2297 = vpack.c.b16 %v2261, %v2260
      %v2298 = vpack.c.b16 %v2263, %v2262
      %v2299 = vpack.c.b16 %v2265, %v2264
      %v2300 = vpack.c.b16 %v2266, %v2266
      %vm2301 = vsmask.f32 7424
      %v2303 = vshrl.u32 %v2267, 16
      %v2305 = vshll.u32 %v2267, 16
      %v2307 = vrot.slane %v2305, 1
      %v2308 = vor.u32 %v2303, %v2307
      %v2310 = vshll.u32 %v2268, 16
      %v2312 = vrot.slane %v2310, 1
      %v2313 = vsel %vm2301, %v2308, %v2312
      %v2314 = vshrl.u32 %v2268, 16
      %v2316 = vor.u32 %v2314, %v2312
      %v2318 = vshll.u32 %v2269, 16
      %v2320 = vrot.slane %v2318, 1
      %v2321 = vsel %vm2301, %v2316, %v2320
      %v2322 = vshrl.u32 %v2269, 16
      %v2324 = vor.u32 %v2322, %v2320
      %v2326 = vshll.u32 %v2270, 16
      %v2328 = vrot.slane %v2326, 1
      %v2329 = vsel %vm2301, %v2324, %v2328
      %v2330 = vshrl.u32 %v2270, 16
      %v2332 = vor.u32 %v2330, %v2328
      %v2334 = vshll.u32 %v2271, 16
      %v2336 = vrot.slane %v2334, 1
      %v2337 = vsel %vm2301, %v2332, %v2336
      %v2338 = vshrl.u32 %v2271, 16
      %v2340 = vor.u32 %v2338, %v2336
      %v2342 = vshll.u32 %v2272, 16
      %v2344 = vrot.slane %v2342, 1
      %v2345 = vsel %vm2301, %v2340, %v2344
      %v2346 = vshrl.u32 %v2272, 16
      %v2348 = vor.u32 %v2346, %v2344
      %v2350 = vshll.u32 %v2273, 16
      %v2352 = vrot.slane %v2350, 1
      %v2353 = vsel %vm2301, %v2348, %v2352
      %v2354 = vshrl.u32 %v2273, 16
      %v2356 = vor.u32 %v2354, %v2352
      %v2358 = vshll.u32 %v2274, 16
      %v2360 = vrot.slane %v2358, 1
      %v2361 = vsel %vm2301, %v2356, %v2360
      %v2362 = vshrl.u32 %v2274, 16
      %v2364 = vor.u32 %v2362, %v2360
      %v2366 = vshll.u32 %v2275, 16
      %v2368 = vrot.slane %v2366, 1
      %v2369 = vsel %vm2301, %v2364, %v2368
      %v2370 = vshrl.u32 %v2275, 16
      %v2372 = vor.u32 %v2370, %v2368
      %v2374 = vshll.u32 %v2276, 16
      %v2376 = vrot.slane %v2374, 1
      %v2377 = vsel %vm2301, %v2372, %v2376
      %v2378 = vshrl.u32 %v2276, 16
      %v2380 = vor.u32 %v2378, %v2376
      %v2382 = vshll.u32 %v2277, 16
      %v2384 = vrot.slane %v2382, 1
      %v2385 = vsel %vm2301, %v2380, %v2384
      %v2386 = vshrl.u32 %v2277, 16
      %v2388 = vor.u32 %v2386, %v2384
      %v2390 = vshll.u32 %v2278, 16
      %v2392 = vrot.slane %v2390, 1
      %v2393 = vsel %vm2301, %v2388, %v2392
      %v2394 = vshrl.u32 %v2278, 16
      %v2396 = vor.u32 %v2394, %v2392
      %v2398 = vshll.u32 %v2279, 16
      %v2400 = vrot.slane %v2398, 1
      %v2401 = vsel %vm2301, %v2396, %v2400
      %v2402 = vshrl.u32 %v2279, 16
      %v2404 = vor.u32 %v2402, %v2400
      %v2406 = vshll.u32 %v2280, 16
      %v2408 = vrot.slane %v2406, 1
      %v2409 = vsel %vm2301, %v2404, %v2408
      %v2410 = vshrl.u32 %v2280, 16
      %v2412 = vor.u32 %v2410, %v2408
      %v2414 = vshll.u32 %v2281, 16
      %v2416 = vrot.slane %v2414, 1
      %v2417 = vsel %vm2301, %v2412, %v2416
      %v2418 = vshrl.u32 %v2281, 16
      %v2420 = vor.u32 %v2418, %v2416
      %v2422 = vshll.u32 %v2282, 16
      %v2424 = vrot.slane %v2422, 1
      %v2425 = vsel %vm2301, %v2420, %v2424
      %v2426 = vshrl.u32 %v2282, 16
      %v2428 = vor.u32 %v2426, %v2424
      %v2430 = vshll.u32 %v2283, 16
      %v2432 = vrot.slane %v2430, 1
      %v2433 = vsel %vm2301, %v2428, %v2432
      %v2435 = vshrl.u32 %v2284, 16
      %v2437 = vshll.u32 %v2284, 16
      %v2439 = vrot.slane %v2437, 1
      %v2440 = vor.u32 %v2435, %v2439
      %v2442 = vshll.u32 %v2285, 16
      %v2444 = vrot.slane %v2442, 1
      %v2445 = vsel %vm2301, %v2440, %v2444
      %v2446 = vshrl.u32 %v2285, 16
      %v2448 = vor.u32 %v2446, %v2444
      %v2450 = vshll.u32 %v2286, 16
      %v2452 = vrot.slane %v2450, 1
      %v2453 = vsel %vm2301, %v2448, %v2452
      %v2454 = vshrl.u32 %v2286, 16
      %v2456 = vor.u32 %v2454, %v2452
      %v2458 = vshll.u32 %v2287, 16
      %v2460 = vrot.slane %v2458, 1
      %v2461 = vsel %vm2301, %v2456, %v2460
      %v2462 = vshrl.u32 %v2287, 16
      %v2464 = vor.u32 %v2462, %v2460
      %v2466 = vshll.u32 %v2288, 16
      %v2468 = vrot.slane %v2466, 1
      %v2469 = vsel %vm2301, %v2464, %v2468
      %v2470 = vshrl.u32 %v2288, 16
      %v2472 = vor.u32 %v2470, %v2468
      %v2474 = vshll.u32 %v2289, 16
      %v2476 = vrot.slane %v2474, 1
      %v2477 = vsel %vm2301, %v2472, %v2476
      %v2478 = vshrl.u32 %v2289, 16
      %v2480 = vor.u32 %v2478, %v2476
      %v2482 = vshll.u32 %v2290, 16
      %v2484 = vrot.slane %v2482, 1
      %v2485 = vsel %vm2301, %v2480, %v2484
      %v2486 = vshrl.u32 %v2290, 16
      %v2488 = vor.u32 %v2486, %v2484
      %v2490 = vshll.u32 %v2291, 16
      %v2492 = vrot.slane %v2490, 1
      %v2493 = vsel %vm2301, %v2488, %v2492
      %v2494 = vshrl.u32 %v2291, 16
      %v2496 = vor.u32 %v2494, %v2492
      %v2498 = vshll.u32 %v2292, 16
      %v2500 = vrot.slane %v2498, 1
      %v2501 = vsel %vm2301, %v2496, %v2500
      %v2502 = vshrl.u32 %v2292, 16
      %v2504 = vor.u32 %v2502, %v2500
      %v2506 = vshll.u32 %v2293, 16
      %v2508 = vrot.slane %v2506, 1
      %v2509 = vsel %vm2301, %v2504, %v2508
      %v2510 = vshrl.u32 %v2293, 16
      %v2512 = vor.u32 %v2510, %v2508
      %v2514 = vshll.u32 %v2294, 16
      %v2516 = vrot.slane %v2514, 1
      %v2517 = vsel %vm2301, %v2512, %v2516
      %v2518 = vshrl.u32 %v2294, 16
      %v2520 = vor.u32 %v2518, %v2516
      %v2522 = vshll.u32 %v2295, 16
      %v2524 = vrot.slane %v2522, 1
      %v2525 = vsel %vm2301, %v2520, %v2524
      %v2526 = vshrl.u32 %v2295, 16
      %v2528 = vor.u32 %v2526, %v2524
      %v2530 = vshll.u32 %v2296, 16
      %v2532 = vrot.slane %v2530, 1
      %v2533 = vsel %vm2301, %v2528, %v2532
      %v2534 = vshrl.u32 %v2296, 16
      %v2536 = vor.u32 %v2534, %v2532
      %v2538 = vshll.u32 %v2297, 16
      %v2540 = vrot.slane %v2538, 1
      %v2541 = vsel %vm2301, %v2536, %v2540
      %v2542 = vshrl.u32 %v2297, 16
      %v2544 = vor.u32 %v2542, %v2540
      %v2546 = vshll.u32 %v2298, 16
      %v2548 = vrot.slane %v2546, 1
      %v2549 = vsel %vm2301, %v2544, %v2548
      %v2550 = vshrl.u32 %v2298, 16
      %v2552 = vor.u32 %v2550, %v2548
      %v2554 = vshll.u32 %v2299, 16
      %v2556 = vrot.slane %v2554, 1
      %v2557 = vsel %vm2301, %v2552, %v2556
      %v2558 = vshrl.u32 %v2299, 16
      %v2560 = vor.u32 %v2558, %v2556
      %v2562 = vshll.u32 %v2300, 16
      %v2564 = vrot.slane %v2562, 1
      %v2565 = vsel %vm2301, %v2560, %v2564
      %2566 = vrot.lane.b32.xlu0 %v2313, 8
      %v2567 = vpop.permute.xlu0 %2566
      %2568 = vrot.lane.b32.xlu0 %v2321, 8
      %v2569 = vpop.permute.xlu0 %2568
      %2570 = vrot.lane.b32.xlu0 %v2329, 8
      %v2571 = vpop.permute.xlu0 %2570
      %2572 = vrot.lane.b32.xlu0 %v2337, 8
      %v2573 = vpop.permute.xlu0 %2572
      %2574 = vrot.lane.b32.xlu0 %v2345, 8
      %v2575 = vpop.permute.xlu0 %2574
      %2576 = vrot.lane.b32.xlu0 %v2353, 8
      %v2577 = vpop.permute.xlu0 %2576
      %2578 = vrot.lane.b32.xlu0 %v2361, 8
      %v2579 = vpop.permute.xlu0 %2578
      %2580 = vrot.lane.b32.xlu0 %v2369, 8
      %v2581 = vpop.permute.xlu0 %2580
      %2582 = vrot.lane.b32.xlu0 %v2377, 8
      %v2583 = vpop.permute.xlu0 %2582
      %2584 = vrot.lane.b32.xlu0 %v2385, 8
      %v2585 = vpop.permute.xlu0 %2584
      %2586 = vrot.lane.b32.xlu0 %v2393, 8
      %v2587 = vpop.permute.xlu0 %2586
      %2588 = vrot.lane.b32.xlu0 %v2401, 8
      %v2589 = vpop.permute.xlu0 %2588
      %2590 = vrot.lane.b32.xlu0 %v2409, 8
      %v2591 = vpop.permute.xlu0 %2590
      %2592 = vrot.lane.b32.xlu0 %v2417, 8
      %v2593 = vpop.permute.xlu0 %2592
      %2594 = vrot.lane.b32.xlu0 %v2425, 8
      %v2595 = vpop.permute.xlu0 %2594
      %2596 = vrot.lane.b32.xlu0 %v2433, 8
      %v2597 = vpop.permute.xlu0 %2596
      %2598 = vrot.lane.b32.xlu0 %v2445, 8
      %v2599 = vpop.permute.xlu0 %2598
      %2600 = vrot.lane.b32.xlu0 %v2453, 8
      %v2601 = vpop.permute.xlu0 %2600
      %2602 = vrot.lane.b32.xlu0 %v2461, 8
      %v2603 = vpop.permute.xlu0 %2602
      %2604 = vrot.lane.b32.xlu0 %v2469, 8
      %v2605 = vpop.permute.xlu0 %2604
      %2606 = vrot.lane.b32.xlu0 %v2477, 8
      %v2607 = vpop.permute.xlu0 %2606
      %2608 = vrot.lane.b32.xlu0 %v2485, 8
      %v2609 = vpop.permute.xlu0 %2608
      %2610 = vrot.lane.b32.xlu0 %v2493, 8
      %v2611 = vpop.permute.xlu0 %2610
      %2612 = vrot.lane.b32.xlu0 %v2501, 8
      %v2613 = vpop.permute.xlu0 %2612
      %2614 = vrot.lane.b32.xlu0 %v2509, 8
      %v2615 = vpop.permute.xlu0 %2614
      %2616 = vrot.lane.b32.xlu0 %v2517, 8
      %v2617 = vpop.permute.xlu0 %2616
      %2618 = vrot.lane.b32.xlu0 %v2525, 8
      %v2619 = vpop.permute.xlu0 %2618
      %2620 = vrot.lane.b32.xlu0 %v2533, 8
      %v2621 = vpop.permute.xlu0 %2620
      %2622 = vrot.lane.b32.xlu0 %v2541, 8
      %v2623 = vpop.permute.xlu0 %2622
      %2624 = vrot.lane.b32.xlu0 %v2549, 8
      %v2625 = vpop.permute.xlu0 %2624
      %2626 = vrot.lane.b32.xlu0 %v2557, 8
      %v2627 = vpop.permute.xlu0 %2626
      %2628 = vrot.lane.b32.xlu0 %v2565, 8
      %v2629 = vpop.permute.xlu0 %2628
      %v2696 = vunpack.c.l.b16 %v1649
      %v2697 = vunpack.c.l.b16 %v1650
      %v2698 = vunpack.c.l.b16 %v1651
      %v2699 = vunpack.c.l.b16 %v1652
      %v2700 = vunpack.c.l.b16 %v1653
      %v2701 = vunpack.c.l.b16 %v1654
      %v2702 = vunpack.c.l.b16 %v1655
      %v2703 = vunpack.c.l.b16 %v1656
      %v2704 = vunpack.c.l.b16 %v1657
      %v2705 = vunpack.c.l.b16 %v1658
      %v2706 = vunpack.c.l.b16 %v1659
      %v2707 = vunpack.c.l.b16 %v1660
      %v2708 = vunpack.c.l.b16 %v1661
      %v2709 = vunpack.c.l.b16 %v1662
      %v2710 = vunpack.c.l.b16 %v1663
      %v2711 = vunpack.c.l.b16 %v1664
      %v2712 = vunpack.c.l.b16 %v1665
      %v2713 = vunpack.c.l.b16 %v1666
      %v2714 = vunpack.c.l.b16 %v1667
      %v2715 = vunpack.c.l.b16 %v1668
      %v2716 = vunpack.c.l.b16 %v1669
      %v2717 = vunpack.c.l.b16 %v1670
      %v2718 = vunpack.c.l.b16 %v1671
      %v2719 = vunpack.c.l.b16 %v1672
      %v2720 = vunpack.c.l.b16 %v1673
      %v2721 = vunpack.c.l.b16 %v1674
      %v2722 = vunpack.c.l.b16 %v1675
      %v2723 = vunpack.c.l.b16 %v1676
      %v2724 = vunpack.c.l.b16 %v1677
      %v2725 = vunpack.c.l.b16 %v1678
      %v2726 = vunpack.c.l.b16 %v1679
      %v2727 = vunpack.c.l.b16 %v1680
      %v2728 = vunpack.c.l.b16 %v1681
      %v2729 = vunpack.c.l.b16 %v1682
      %v2730 = vunpack.c.l.b16 %v1683
      %v2731 = vunpack.c.l.b16 %v1684
      %v2732 = vunpack.c.l.b16 %v1685
      %v2733 = vunpack.c.l.b16 %v1686
      %v2734 = vunpack.c.l.b16 %v1687
      %v2735 = vunpack.c.l.b16 %v1688
      %v2736 = vunpack.c.l.b16 %v1689
      %v2737 = vunpack.c.l.b16 %v1690
      %v2738 = vunpack.c.l.b16 %v1691
      %v2739 = vunpack.c.l.b16 %v1692
      %v2740 = vunpack.c.l.b16 %v1693
      %v2741 = vunpack.c.l.b16 %v1694
      %v2742 = vunpack.c.l.b16 %v1695
      %v2743 = vunpack.c.l.b16 %v1696
      %v2744 = vunpack.c.l.b16 %v1697
      %v2745 = vunpack.c.l.b16 %v1698
      %v2746 = vunpack.c.l.b16 %v1699
      %v2747 = vunpack.c.l.b16 %v1700
      %v2748 = vunpack.c.l.b16 %v1701
      %v2749 = vunpack.c.l.b16 %v1702
      %v2750 = vunpack.c.l.b16 %v1703
      %v2751 = vunpack.c.l.b16 %v1704
      %v2752 = vunpack.c.l.b16 %v1705
      %v2753 = vunpack.c.l.b16 %v1706
      %v2754 = vunpack.c.l.b16 %v1707
      %v2755 = vunpack.c.l.b16 %v1708
      %v2756 = vunpack.c.l.b16 %v1709
      %v2757 = vunpack.c.l.b16 %v1710
      %v2758 = vunpack.c.l.b16 %v1711
      %v2759 = vunpack.c.l.b16 %v1712
      %v2760 = vunpack.c.l.b16 %v1713
      %v2761 = vunpack.c.l.b16 %v1714
      %v2762 = vpack.c.b16 %v2697, %v2696
      %v2763 = vpack.c.b16 %v2699, %v2698
      %v2764 = vpack.c.b16 %v2701, %v2700
      %v2765 = vpack.c.b16 %v2703, %v2702
      %v2766 = vpack.c.b16 %v2705, %v2704
      %v2767 = vpack.c.b16 %v2707, %v2706
      %v2768 = vpack.c.b16 %v2709, %v2708
      %v2769 = vpack.c.b16 %v2711, %v2710
      %v2770 = vpack.c.b16 %v2713, %v2712
      %v2771 = vpack.c.b16 %v2715, %v2714
      %v2772 = vpack.c.b16 %v2717, %v2716
      %v2773 = vpack.c.b16 %v2719, %v2718
      %v2774 = vpack.c.b16 %v2721, %v2720
      %v2775 = vpack.c.b16 %v2723, %v2722
      %v2776 = vpack.c.b16 %v2725, %v2724
      %v2777 = vpack.c.b16 %v2727, %v2726
      %v2778 = vpack.c.b16 %v2728, %v2728
      %v2779 = vpack.c.b16 %v2730, %v2729
      %v2780 = vpack.c.b16 %v2732, %v2731
      %v2781 = vpack.c.b16 %v2734, %v2733
      %v2782 = vpack.c.b16 %v2736, %v2735
      %v2783 = vpack.c.b16 %v2738, %v2737
      %v2784 = vpack.c.b16 %v2740, %v2739
      %v2785 = vpack.c.b16 %v2742, %v2741
      %v2786 = vpack.c.b16 %v2744, %v2743
      %v2787 = vpack.c.b16 %v2746, %v2745
      %v2788 = vpack.c.b16 %v2748, %v2747
      %v2789 = vpack.c.b16 %v2750, %v2749
      %v2790 = vpack.c.b16 %v2752, %v2751
      %v2791 = vpack.c.b16 %v2754, %v2753
      %v2792 = vpack.c.b16 %v2756, %v2755
      %v2793 = vpack.c.b16 %v2758, %v2757
      %v2794 = vpack.c.b16 %v2760, %v2759
      %v2795 = vpack.c.b16 %v2761, %v2761
      %vm2796 = vcmask 1046528
      %v2797 = vrot.slane %v2762, 1
      %v2798 = vrot.slane %v2763, 1
      %v2799 = vsel %vm2796, %v2797, %v2798
      %v2800 = vrot.slane %v2764, 1
      %v2801 = vsel %vm2796, %v2798, %v2800
      %v2802 = vrot.slane %v2765, 1
      %v2803 = vsel %vm2796, %v2800, %v2802
      %v2804 = vrot.slane %v2766, 1
      %v2805 = vsel %vm2796, %v2802, %v2804
      %v2806 = vrot.slane %v2767, 1
      %v2807 = vsel %vm2796, %v2804, %v2806
      %v2808 = vrot.slane %v2768, 1
      %v2809 = vsel %vm2796, %v2806, %v2808
      %v2810 = vrot.slane %v2769, 1
      %v2811 = vsel %vm2796, %v2808, %v2810
      %v2812 = vrot.slane %v2770, 1
      %v2813 = vsel %vm2796, %v2810, %v2812
      %v2814 = vrot.slane %v2771, 1
      %v2815 = vsel %vm2796, %v2812, %v2814
      %v2816 = vrot.slane %v2772, 1
      %v2817 = vsel %vm2796, %v2814, %v2816
      %v2818 = vrot.slane %v2773, 1
      %v2819 = vsel %vm2796, %v2816, %v2818
      %v2820 = vrot.slane %v2774, 1
      %v2821 = vsel %vm2796, %v2818, %v2820
      %v2822 = vrot.slane %v2775, 1
      %v2823 = vsel %vm2796, %v2820, %v2822
      %v2824 = vrot.slane %v2776, 1
      %v2825 = vsel %vm2796, %v2822, %v2824
      %v2826 = vrot.slane %v2777, 1
      %v2827 = vsel %vm2796, %v2824, %v2826
      %v2828 = vrot.slane %v2778, 1
      %v2829 = vsel %vm2796, %v2826, %v2828
      %v2830 = vrot.slane %v2779, 1
      %v2831 = vrot.slane %v2780, 1
      %v2832 = vsel %vm2796, %v2830, %v2831
      %v2833 = vrot.slane %v2781, 1
      %v2834 = vsel %vm2796, %v2831, %v2833
      %v2835 = vrot.slane %v2782, 1
      %v2836 = vsel %vm2796, %v2833, %v2835
      %v2837 = vrot.slane %v2783, 1
      %v2838 = vsel %vm2796, %v2835, %v2837
      %v2839 = vrot.slane %v2784, 1
      %v2840 = vsel %vm2796, %v2837, %v2839
      %v2841 = vrot.slane %v2785, 1
      %v2842 = vsel %vm2796, %v2839, %v2841
      %v2843 = vrot.slane %v2786, 1
      %v2844 = vsel %vm2796, %v2841, %v2843
      %v2845 = vrot.slane %v2787, 1
      %v2846 = vsel %vm2796, %v2843, %v2845
      %v2847 = vrot.slane %v2788, 1
      %v2848 = vsel %vm2796, %v2845, %v2847
      %v2849 = vrot.slane %v2789, 1
      %v2850 = vsel %vm2796, %v2847, %v2849
      %v2851 = vrot.slane %v2790, 1
      %v2852 = vsel %vm2796, %v2849, %v2851
      %v2853 = vrot.slane %v2791, 1
      %v2854 = vsel %vm2796, %v2851, %v2853
      %v2855 = vrot.slane %v2792, 1
      %v2856 = vsel %vm2796, %v2853, %v2855
      %v2857 = vrot.slane %v2793, 1
      %v2858 = vsel %vm2796, %v2855, %v2857
      %v2859 = vrot.slane %v2794, 1
      %v2860 = vsel %vm2796, %v2857, %v2859
      %v2861 = vrot.slane %v2795, 1
      %v2862 = vsel %vm2796, %v2859, %v2861
      %2863 = vrot.lane.b32.xlu0 %v2799, 16
      %v2864 = vpop.permute.xlu0 %2863
      %2865 = vrot.lane.b32.xlu0 %v2801, 16
      %v2866 = vpop.permute.xlu0 %2865
      %2867 = vrot.lane.b32.xlu0 %v2803, 16
      %v2868 = vpop.permute.xlu0 %2867
      %2869 = vrot.lane.b32.xlu0 %v2805, 16
      %v2870 = vpop.permute.xlu0 %2869
      %2871 = vrot.lane.b32.xlu0 %v2807, 16
      %v2872 = vpop.permute.xlu0 %2871
      %2873 = vrot.lane.b32.xlu0 %v2809, 16
      %v2874 = vpop.permute.xlu0 %2873
      %2875 = vrot.lane.b32.xlu0 %v2811, 16
      %v2876 = vpop.permute.xlu0 %2875
      %2877 = vrot.lane.b32.xlu0 %v2813, 16
      %v2878 = vpop.permute.xlu0 %2877
      %2879 = vrot.lane.b32.xlu0 %v2815, 16
      %v2880 = vpop.permute.xlu0 %2879
      %2881 = vrot.lane.b32.xlu0 %v2817, 16
      %v2882 = vpop.permute.xlu0 %2881
      %2883 = vrot.lane.b32.xlu0 %v2819, 16
      %v2884 = vpop.permute.xlu0 %2883
      %2885 = vrot.lane.b32.xlu0 %v2821, 16
      %v2886 = vpop.permute.xlu0 %2885
      %2887 = vrot.lane.b32.xlu0 %v2823, 16
      %v2888 = vpop.permute.xlu0 %2887
      %2889 = vrot.lane.b32.xlu0 %v2825, 16
      %v2890 = vpop.permute.xlu0 %2889
      %2891 = vrot.lane.b32.xlu0 %v2827, 16
      %v2892 = vpop.permute.xlu0 %2891
      %2893 = vrot.lane.b32.xlu0 %v2829, 16
      %v2894 = vpop.permute.xlu0 %2893
      %2895 = vrot.lane.b32.xlu0 %v2832, 16
      %v2896 = vpop.permute.xlu0 %2895
      %2897 = vrot.lane.b32.xlu0 %v2834, 16
      %v2898 = vpop.permute.xlu0 %2897
      %2899 = vrot.lane.b32.xlu0 %v2836, 16
      %v2900 = vpop.permute.xlu0 %2899
      %2901 = vrot.lane.b32.xlu0 %v2838, 16
      %v2902 = vpop.permute.xlu0 %2901
      %2903 = vrot.lane.b32.xlu0 %v2840, 16
      %v2904 = vpop.permute.xlu0 %2903
      %2905 = vrot.lane.b32.xlu0 %v2842, 16
      %v2906 = vpop.permute.xlu0 %2905
      %2907 = vrot.lane.b32.xlu0 %v2844, 16
      %v2908 = vpop.permute.xlu0 %2907
      %2909 = vrot.lane.b32.xlu0 %v2846, 16
      %v2910 = vpop.permute.xlu0 %2909
      %2911 = vrot.lane.b32.xlu0 %v2848, 16
      %v2912 = vpop.permute.xlu0 %2911
      %2913 = vrot.lane.b32.xlu0 %v2850, 16
      %v2914 = vpop.permute.xlu0 %2913
      %2915 = vrot.lane.b32.xlu0 %v2852, 16
      %v2916 = vpop.permute.xlu0 %2915
      %2917 = vrot.lane.b32.xlu0 %v2854, 16
      %v2918 = vpop.permute.xlu0 %2917
      %2919 = vrot.lane.b32.xlu0 %v2856, 16
      %v2920 = vpop.permute.xlu0 %2919
      %2921 = vrot.lane.b32.xlu0 %v2858, 16
      %v2922 = vpop.permute.xlu0 %2921
      %2923 = vrot.lane.b32.xlu0 %v2860, 16
      %v2924 = vpop.permute.xlu0 %2923
      %2925 = vrot.lane.b32.xlu0 %v2862, 16
      %v2926 = vpop.permute.xlu0 %2925
      %v2991 = vunpack.c.l.b16 %v1715
      %v2992 = vunpack.c.l.b16 %v1716
      %v2993 = vunpack.c.l.b16 %v1717
      %v2994 = vunpack.c.l.b16 %v1718
      %v2995 = vunpack.c.l.b16 %v1719
      %v2996 = vunpack.c.l.b16 %v1720
      %v2997 = vunpack.c.l.b16 %v1721
      %v2998 = vunpack.c.l.b16 %v1722
      %v2999 = vunpack.c.l.b16 %v1723
      %v3000 = vunpack.c.l.b16 %v1724
      %v3001 = vunpack.c.l.b16 %v1725
      %v3002 = vunpack.c.l.b16 %v1726
      %v3003 = vunpack.c.l.b16 %v1727
      %v3004 = vunpack.c.l.b16 %v1728
      %v3005 = vunpack.c.l.b16 %v1729
      %v3006 = vunpack.c.l.b16 %v1730
      %v3007 = vunpack.c.l.b16 %v1731
      %v3008 = vunpack.c.l.b16 %v1732
      %v3009 = vunpack.c.l.b16 %v1733
      %v3010 = vunpack.c.l.b16 %v1734
      %v3011 = vunpack.c.l.b16 %v1735
      %v3012 = vunpack.c.l.b16 %v1736
      %v3013 = vunpack.c.l.b16 %v1737
      %v3014 = vunpack.c.l.b16 %v1738
      %v3015 = vunpack.c.l.b16 %v1739
      %v3016 = vunpack.c.l.b16 %v1740
      %v3017 = vunpack.c.l.b16 %v1741
      %v3018 = vunpack.c.l.b16 %v1742
      %v3019 = vunpack.c.l.b16 %v1743
      %v3020 = vunpack.c.l.b16 %v1744
      %v3021 = vunpack.c.l.b16 %v1745
      %v3022 = vunpack.c.l.b16 %v1746
      %v3023 = vunpack.c.l.b16 %v1747
      %v3024 = vunpack.c.l.b16 %v1748
      %v3025 = vunpack.c.l.b16 %v1749
      %v3026 = vunpack.c.l.b16 %v1750
      %v3027 = vunpack.c.l.b16 %v1751
      %v3028 = vunpack.c.l.b16 %v1752
      %v3029 = vunpack.c.l.b16 %v1753
      %v3030 = vunpack.c.l.b16 %v1754
      %v3031 = vunpack.c.l.b16 %v1755
      %v3032 = vunpack.c.l.b16 %v1756
      %v3033 = vunpack.c.l.b16 %v1757
      %v3034 = vunpack.c.l.b16 %v1758
      %v3035 = vunpack.c.l.b16 %v1759
      %v3036 = vunpack.c.l.b16 %v1760
      %v3037 = vunpack.c.l.b16 %v1761
      %v3038 = vunpack.c.l.b16 %v1762
      %v3039 = vunpack.c.l.b16 %v1763
      %v3040 = vunpack.c.l.b16 %v1764
      %v3041 = vunpack.c.l.b16 %v1765
      %v3042 = vunpack.c.l.b16 %v1766
      %v3043 = vunpack.c.l.b16 %v1767
      %v3044 = vunpack.c.l.b16 %v1768
      %v3045 = vunpack.c.l.b16 %v1769
      %v3046 = vunpack.c.l.b16 %v1770
      %v3047 = vunpack.c.l.b16 %v1771
      %v3048 = vunpack.c.l.b16 %v1772
      %v3049 = vunpack.c.l.b16 %v1773
      %v3050 = vunpack.c.l.b16 %v1774
      %v3051 = vunpack.c.l.b16 %v1775
      %v3052 = vunpack.c.l.b16 %v1776
      %v3053 = vunpack.c.l.b16 %v1777
      %v3054 = vunpack.c.l.b16 %v1778
      %v3055 = vpack.c.b16 %v2992, %v2991
      %v3056 = vpack.c.b16 %v2994, %v2993
      %v3057 = vpack.c.b16 %v2996, %v2995
      %v3058 = vpack.c.b16 %v2998, %v2997
      %v3059 = vpack.c.b16 %v3000, %v2999
      %v3060 = vpack.c.b16 %v3002, %v3001
      %v3061 = vpack.c.b16 %v3004, %v3003
      %v3062 = vpack.c.b16 %v3006, %v3005
      %v3063 = vpack.c.b16 %v3008, %v3007
      %v3064 = vpack.c.b16 %v3010, %v3009
      %v3065 = vpack.c.b16 %v3012, %v3011
      %v3066 = vpack.c.b16 %v3014, %v3013
      %v3067 = vpack.c.b16 %v3016, %v3015
      %v3068 = vpack.c.b16 %v3018, %v3017
      %v3069 = vpack.c.b16 %v3020, %v3019
      %v3070 = vpack.c.b16 %v3022, %v3021
      %v3071 = vpack.c.b16 %v3024, %v3023
      %v3072 = vpack.c.b16 %v3026, %v3025
      %v3073 = vpack.c.b16 %v3028, %v3027
      %v3074 = vpack.c.b16 %v3030, %v3029
      %v3075 = vpack.c.b16 %v3032, %v3031
      %v3076 = vpack.c.b16 %v3034, %v3033
      %v3077 = vpack.c.b16 %v3036, %v3035
      %v3078 = vpack.c.b16 %v3038, %v3037
      %v3079 = vpack.c.b16 %v3040, %v3039
      %v3080 = vpack.c.b16 %v3042, %v3041
      %v3081 = vpack.c.b16 %v3044, %v3043
      %v3082 = vpack.c.b16 %v3046, %v3045
      %v3083 = vpack.c.b16 %v3048, %v3047
      %v3084 = vpack.c.b16 %v3050, %v3049
      %v3085 = vpack.c.b16 %v3052, %v3051
      %v3086 = vpack.c.b16 %v3054, %v3053
      %3087 = vrot.lane.b32.xlu0 %v3055, 24
      %v3088 = vpop.permute.xlu0 %3087
      %3089 = vrot.lane.b32.xlu0 %v3056, 24
      %v3090 = vpop.permute.xlu0 %3089
      %3091 = vrot.lane.b32.xlu0 %v3057, 24
      %v3092 = vpop.permute.xlu0 %3091
      %3093 = vrot.lane.b32.xlu0 %v3058, 24
      %v3094 = vpop.permute.xlu0 %3093
      %3095 = vrot.lane.b32.xlu0 %v3059, 24
      %v3096 = vpop.permute.xlu0 %3095
      %3097 = vrot.lane.b32.xlu0 %v3060, 24
      %v3098 = vpop.permute.xlu0 %3097
      %3099 = vrot.lane.b32.xlu0 %v3061, 24
      %v3100 = vpop.permute.xlu0 %3099
      %3101 = vrot.lane.b32.xlu0 %v3062, 24
      %v3102 = vpop.permute.xlu0 %3101
      %3103 = vrot.lane.b32.xlu0 %v3063, 24
      %v3104 = vpop.permute.xlu0 %3103
      %3105 = vrot.lane.b32.xlu0 %v3064, 24
      %v3106 = vpop.permute.xlu0 %3105
      %3107 = vrot.lane.b32.xlu0 %v3065, 24
      %v3108 = vpop.permute.xlu0 %3107
      %3109 = vrot.lane.b32.xlu0 %v3066, 24
      %v3110 = vpop.permute.xlu0 %3109
      %3111 = vrot.lane.b32.xlu0 %v3067, 24
      %v3112 = vpop.permute.xlu0 %3111
      %3113 = vrot.lane.b32.xlu0 %v3068, 24
      %v3114 = vpop.permute.xlu0 %3113
      %3115 = vrot.lane.b32.xlu0 %v3069, 24
      %v3116 = vpop.permute.xlu0 %3115
      %3117 = vrot.lane.b32.xlu0 %v3070, 24
      %v3118 = vpop.permute.xlu0 %3117
      %3119 = vrot.lane.b32.xlu0 %v3071, 24
      %v3120 = vpop.permute.xlu0 %3119
      %3121 = vrot.lane.b32.xlu0 %v3072, 24
      %v3122 = vpop.permute.xlu0 %3121
      %3123 = vrot.lane.b32.xlu0 %v3073, 24
      %v3124 = vpop.permute.xlu0 %3123
      %3125 = vrot.lane.b32.xlu0 %v3074, 24
      %v3126 = vpop.permute.xlu0 %3125
      %3127 = vrot.lane.b32.xlu0 %v3075, 24
      %v3128 = vpop.permute.xlu0 %3127
      %3129 = vrot.lane.b32.xlu0 %v3076, 24
      %v3130 = vpop.permute.xlu0 %3129
      %3131 = vrot.lane.b32.xlu0 %v3077, 24
      %v3132 = vpop.permute.xlu0 %3131
      %3133 = vrot.lane.b32.xlu0 %v3078, 24
      %v3134 = vpop.permute.xlu0 %3133
      %3135 = vrot.lane.b32.xlu0 %v3079, 24
      %v3136 = vpop.permute.xlu0 %3135
      %3137 = vrot.lane.b32.xlu0 %v3080, 24
      %v3138 = vpop.permute.xlu0 %3137
      %3139 = vrot.lane.b32.xlu0 %v3081, 24
      %v3140 = vpop.permute.xlu0 %3139
      %3141 = vrot.lane.b32.xlu0 %v3082, 24
      %v3142 = vpop.permute.xlu0 %3141
      %3143 = vrot.lane.b32.xlu0 %v3083, 24
      %v3144 = vpop.permute.xlu0 %3143
      %3145 = vrot.lane.b32.xlu0 %v3084, 24
      %v3146 = vpop.permute.xlu0 %3145
      %3147 = vrot.lane.b32.xlu0 %v3085, 24
      %v3148 = vpop.permute.xlu0 %3147
      %3149 = vrot.lane.b32.xlu0 %v3086, 24
      %v3150 = vpop.permute.xlu0 %3149
      %v3155 = vunpack.c.l.b16 %v549
      %v3156 = vunpack.c.l.b16 %v550
      %v3157 = vunpack.c.l.b16 %v586
      %v3158 = vunpack.c.l.b16 %v587
      %v3159 = vpack.c.b16 %v3155, %v2233
      %v3160 = vpack.c.b16 %v3156, %v3156
      %v3161 = vpack.c.b16 %v3157, %v2266
      %v3162 = vpack.c.b16 %v3158, %v3158
      %v3164 = vshll.u32 %v3159, 16
      %v3166 = vrot.slane %v3164, 1
      %v3167 = vsel %vm2301, %v2428, %v3166
      %v3168 = vshrl.u32 %v3159, 16
      %v3170 = vor.u32 %v3168, %v3166
      %v3172 = vshll.u32 %v3160, 16
      %v3174 = vrot.slane %v3172, 1
      %v3175 = vsel %vm2301, %v3170, %v3174
      %v3177 = vshll.u32 %v3161, 16
      %v3179 = vrot.slane %v3177, 1
      %v3180 = vsel %vm2301, %v2560, %v3179
      %v3181 = vshrl.u32 %v3161, 16
      %v3183 = vor.u32 %v3181, %v3179
      %v3185 = vshll.u32 %v3162, 16
      %v3187 = vrot.slane %v3185, 1
      %v3188 = vsel %vm2301, %v3183, %v3187
      %3189 = vrot.lane.b32.xlu0 %v2321, 32
      %v3190 = vpop.permute.xlu0 %3189
      %3191 = vrot.lane.b32.xlu0 %v2329, 32
      %v3192 = vpop.permute.xlu0 %3191
      %3193 = vrot.lane.b32.xlu0 %v2337, 32
      %v3194 = vpop.permute.xlu0 %3193
      %3195 = vrot.lane.b32.xlu0 %v2345, 32
      %v3196 = vpop.permute.xlu0 %3195
      %3197 = vrot.lane.b32.xlu0 %v2353, 32
      %v3198 = vpop.permute.xlu0 %3197
      %3199 = vrot.lane.b32.xlu0 %v2361, 32
      %v3200 = vpop.permute.xlu0 %3199
      %3201 = vrot.lane.b32.xlu0 %v2369, 32
      %v3202 = vpop.permute.xlu0 %3201
      %3203 = vrot.lane.b32.xlu0 %v2377, 32
      %v3204 = vpop.permute.xlu0 %3203
      %3205 = vrot.lane.b32.xlu0 %v2385, 32
      %v3206 = vpop.permute.xlu0 %3205
      %3207 = vrot.lane.b32.xlu0 %v2393, 32
      %v3208 = vpop.permute.xlu0 %3207
      %3209 = vrot.lane.b32.xlu0 %v2401, 32
      %v3210 = vpop.permute.xlu0 %3209
      %3211 = vrot.lane.b32.xlu0 %v2409, 32
      %v3212 = vpop.permute.xlu0 %3211
      %3213 = vrot.lane.b32.xlu0 %v2417, 32
      %v3214 = vpop.permute.xlu0 %3213
      %3215 = vrot.lane.b32.xlu0 %v2425, 32
      %v3216 = vpop.permute.xlu0 %3215
      %3217 = vrot.lane.b32.xlu0 %v3167, 32
      %v3218 = vpop.permute.xlu0 %3217
      %3219 = vrot.lane.b32.xlu0 %v3175, 32
      %v3220 = vpop.permute.xlu0 %3219
      %3221 = vrot.lane.b32.xlu0 %v2453, 32
      %v3222 = vpop.permute.xlu0 %3221
      %3223 = vrot.lane.b32.xlu0 %v2461, 32
      %v3224 = vpop.permute.xlu0 %3223
      %3225 = vrot.lane.b32.xlu0 %v2469, 32
      %v3226 = vpop.permute.xlu0 %3225
      %3227 = vrot.lane.b32.xlu0 %v2477, 32
      %v3228 = vpop.permute.xlu0 %3227
      %3229 = vrot.lane.b32.xlu0 %v2485, 32
      %v3230 = vpop.permute.xlu0 %3229
      %3231 = vrot.lane.b32.xlu0 %v2493, 32
      %v3232 = vpop.permute.xlu0 %3231
      %3233 = vrot.lane.b32.xlu0 %v2501, 32
      %v3234 = vpop.permute.xlu0 %3233
      %3235 = vrot.lane.b32.xlu0 %v2509, 32
      %v3236 = vpop.permute.xlu0 %3235
      %3237 = vrot.lane.b32.xlu0 %v2517, 32
      %v3238 = vpop.permute.xlu0 %3237
      %3239 = vrot.lane.b32.xlu0 %v2525, 32
      %v3240 = vpop.permute.xlu0 %3239
      %3241 = vrot.lane.b32.xlu0 %v2533, 32
      %v3242 = vpop.permute.xlu0 %3241
      %3243 = vrot.lane.b32.xlu0 %v2541, 32
      %v3244 = vpop.permute.xlu0 %3243
      %3245 = vrot.lane.b32.xlu0 %v2549, 32
      %v3246 = vpop.permute.xlu0 %3245
      %3247 = vrot.lane.b32.xlu0 %v2557, 32
      %v3248 = vpop.permute.xlu0 %3247
      %3249 = vrot.lane.b32.xlu0 %v3180, 32
      %v3250 = vpop.permute.xlu0 %3249
      %3251 = vrot.lane.b32.xlu0 %v3188, 32
      %v3252 = vpop.permute.xlu0 %3251
      %v3319 = vunpack.c.l.b16 %v1779
      %v3320 = vunpack.c.l.b16 %v1780
      %v3321 = vunpack.c.l.b16 %v1781
      %v3322 = vunpack.c.l.b16 %v1782
      %v3323 = vunpack.c.l.b16 %v1783
      %v3324 = vunpack.c.l.b16 %v1784
      %v3325 = vunpack.c.l.b16 %v1785
      %v3326 = vunpack.c.l.b16 %v1786
      %v3327 = vunpack.c.l.b16 %v1787
      %v3328 = vunpack.c.l.b16 %v1788
      %v3329 = vunpack.c.l.b16 %v1789
      %v3330 = vunpack.c.l.b16 %v1790
      %v3331 = vunpack.c.l.b16 %v1791
      %v3332 = vunpack.c.l.b16 %v1792
      %v3333 = vunpack.c.l.b16 %v1793
      %v3334 = vunpack.c.l.b16 %v1794
      %v3335 = vunpack.c.l.b16 %v1795
      %v3336 = vunpack.c.l.b16 %v1796
      %v3337 = vunpack.c.l.b16 %v1797
      %v3338 = vunpack.c.l.b16 %v1798
      %v3339 = vunpack.c.l.b16 %v1799
      %v3340 = vunpack.c.l.b16 %v1800
      %v3341 = vunpack.c.l.b16 %v1801
      %v3342 = vunpack.c.l.b16 %v1802
      %v3343 = vunpack.c.l.b16 %v1803
      %v3344 = vunpack.c.l.b16 %v1804
      %v3345 = vunpack.c.l.b16 %v1805
      %v3346 = vunpack.c.l.b16 %v1806
      %v3347 = vunpack.c.l.b16 %v1807
      %v3348 = vunpack.c.l.b16 %v1808
      %v3349 = vunpack.c.l.b16 %v1809
      %v3350 = vunpack.c.l.b16 %v1810
      %v3351 = vunpack.c.l.b16 %v1811
      %v3352 = vunpack.c.l.b16 %v1812
      %v3353 = vunpack.c.l.b16 %v1813
      %v3354 = vunpack.c.l.b16 %v1814
      %v3355 = vunpack.c.l.b16 %v1815
      %v3356 = vunpack.c.l.b16 %v1816
      %v3357 = vunpack.c.l.b16 %v1817
      %v3358 = vunpack.c.l.b16 %v1818
      %v3359 = vunpack.c.l.b16 %v1819
      %v3360 = vunpack.c.l.b16 %v1820
      %v3361 = vunpack.c.l.b16 %v1821
      %v3362 = vunpack.c.l.b16 %v1822
      %v3363 = vunpack.c.l.b16 %v1823
      %v3364 = vunpack.c.l.b16 %v1824
      %v3365 = vunpack.c.l.b16 %v1825
      %v3366 = vunpack.c.l.b16 %v1826
      %v3367 = vunpack.c.l.b16 %v1827
      %v3368 = vunpack.c.l.b16 %v1828
      %v3369 = vunpack.c.l.b16 %v1829
      %v3370 = vunpack.c.l.b16 %v1830
      %v3371 = vunpack.c.l.b16 %v1831
      %v3372 = vunpack.c.l.b16 %v1832
      %v3373 = vunpack.c.l.b16 %v1833
      %v3374 = vunpack.c.l.b16 %v1834
      %v3375 = vunpack.c.l.b16 %v1835
      %v3376 = vunpack.c.l.b16 %v1836
      %v3377 = vunpack.c.l.b16 %v1837
      %v3378 = vunpack.c.l.b16 %v1838
      %v3379 = vunpack.c.l.b16 %v1839
      %v3380 = vunpack.c.l.b16 %v1840
      %v3381 = vunpack.c.l.b16 %v1841
      %v3382 = vunpack.c.l.b16 %v1842
      %v3383 = vunpack.c.l.b16 %v1843
      %v3384 = vunpack.c.l.b16 %v1844
      %v3385 = vpack.c.b16 %v3320, %v3319
      %v3386 = vpack.c.b16 %v3322, %v3321
      %v3387 = vpack.c.b16 %v3324, %v3323
      %v3388 = vpack.c.b16 %v3326, %v3325
      %v3389 = vpack.c.b16 %v3328, %v3327
      %v3390 = vpack.c.b16 %v3330, %v3329
      %v3391 = vpack.c.b16 %v3332, %v3331
      %v3392 = vpack.c.b16 %v3334, %v3333
      %v3393 = vpack.c.b16 %v3336, %v3335
      %v3394 = vpack.c.b16 %v3338, %v3337
      %v3395 = vpack.c.b16 %v3340, %v3339
      %v3396 = vpack.c.b16 %v3342, %v3341
      %v3397 = vpack.c.b16 %v3344, %v3343
      %v3398 = vpack.c.b16 %v3346, %v3345
      %v3399 = vpack.c.b16 %v3348, %v3347
      %v3400 = vpack.c.b16 %v3350, %v3349
      %v3401 = vpack.c.b16 %v3351, %v3351
      %v3402 = vpack.c.b16 %v3353, %v3352
      %v3403 = vpack.c.b16 %v3355, %v3354
      %v3404 = vpack.c.b16 %v3357, %v3356
      %v3405 = vpack.c.b16 %v3359, %v3358
      %v3406 = vpack.c.b16 %v3361, %v3360
      %v3407 = vpack.c.b16 %v3363, %v3362
      %v3408 = vpack.c.b16 %v3365, %v3364
      %v3409 = vpack.c.b16 %v3367, %v3366
      %v3410 = vpack.c.b16 %v3369, %v3368
      %v3411 = vpack.c.b16 %v3371, %v3370
      %v3412 = vpack.c.b16 %v3373, %v3372
      %v3413 = vpack.c.b16 %v3375, %v3374
      %v3414 = vpack.c.b16 %v3377, %v3376
      %v3415 = vpack.c.b16 %v3379, %v3378
      %v3416 = vpack.c.b16 %v3381, %v3380
      %v3417 = vpack.c.b16 %v3383, %v3382
      %v3418 = vpack.c.b16 %v3384, %v3384
      %v3419 = vrot.slane %v3385, 1
      %v3420 = vrot.slane %v3386, 1
      %v3421 = vsel %vm2796, %v3419, %v3420
      %v3422 = vrot.slane %v3387, 1
      %v3423 = vsel %vm2796, %v3420, %v3422
      %v3424 = vrot.slane %v3388, 1
      %v3425 = vsel %vm2796, %v3422, %v3424
      %v3426 = vrot.slane %v3389, 1
      %v3427 = vsel %vm2796, %v3424, %v3426
      %v3428 = vrot.slane %v3390, 1
      %v3429 = vsel %vm2796, %v3426, %v3428
      %v3430 = vrot.slane %v3391, 1
      %v3431 = vsel %vm2796, %v3428, %v3430
      %v3432 = vrot.slane %v3392, 1
      %v3433 = vsel %vm2796, %v3430, %v3432
      %v3434 = vrot.slane %v3393, 1
      %v3435 = vsel %vm2796, %v3432, %v3434
      %v3436 = vrot.slane %v3394, 1
      %v3437 = vsel %vm2796, %v3434, %v3436
      %v3438 = vrot.slane %v3395, 1
      %v3439 = vsel %vm2796, %v3436, %v3438
      %v3440 = vrot.slane %v3396, 1
      %v3441 = vsel %vm2796, %v3438, %v3440
      %v3442 = vrot.slane %v3397, 1
      %v3443 = vsel %vm2796, %v3440, %v3442
      %v3444 = vrot.slane %v3398, 1
      %v3445 = vsel %vm2796, %v3442, %v3444
      %v3446 = vrot.slane %v3399, 1
      %v3447 = vsel %vm2796, %v3444, %v3446
      %v3448 = vrot.slane %v3400, 1
      %v3449 = vsel %vm2796, %v3446, %v3448
      %v3450 = vrot.slane %v3401, 1
      %v3451 = vsel %vm2796, %v3448, %v3450
      %v3452 = vrot.slane %v3402, 1
      %v3453 = vrot.slane %v3403, 1
      %v3454 = vsel %vm2796, %v3452, %v3453
      %v3455 = vrot.slane %v3404, 1
      %v3456 = vsel %vm2796, %v3453, %v3455
      %v3457 = vrot.slane %v3405, 1
      %v3458 = vsel %vm2796, %v3455, %v3457
      %v3459 = vrot.slane %v3406, 1
      %v3460 = vsel %vm2796, %v3457, %v3459
      %v3461 = vrot.slane %v3407, 1
      %v3462 = vsel %vm2796, %v3459, %v3461
      %v3463 = vrot.slane %v3408, 1
      %v3464 = vsel %vm2796, %v3461, %v3463
      %v3465 = vrot.slane %v3409, 1
      %v3466 = vsel %vm2796, %v3463, %v3465
      %v3467 = vrot.slane %v3410, 1
      %v3468 = vsel %vm2796, %v3465, %v3467
      %v3469 = vrot.slane %v3411, 1
      %v3470 = vsel %vm2796, %v3467, %v3469
      %v3471 = vrot.slane %v3412, 1
      %v3472 = vsel %vm2796, %v3469, %v3471
      %v3473 = vrot.slane %v3413, 1
      %v3474 = vsel %vm2796, %v3471, %v3473
      %v3475 = vrot.slane %v3414, 1
      %v3476 = vsel %vm2796, %v3473, %v3475
      %v3477 = vrot.slane %v3415, 1
      %v3478 = vsel %vm2796, %v3475, %v3477
      %v3479 = vrot.slane %v3416, 1
      %v3480 = vsel %vm2796, %v3477, %v3479
      %v3481 = vrot.slane %v3417, 1
      %v3482 = vsel %vm2796, %v3479, %v3481
      %v3483 = vrot.slane %v3418, 1
      %v3484 = vsel %vm2796, %v3481, %v3483
      %3485 = vrot.lane.b32.xlu0 %v3421, 40
      %v3486 = vpop.permute.xlu0 %3485
      %3487 = vrot.lane.b32.xlu0 %v3423, 40
      %v3488 = vpop.permute.xlu0 %3487
      %3489 = vrot.lane.b32.xlu0 %v3425, 40
      %v3490 = vpop.permute.xlu0 %3489
      %3491 = vrot.lane.b32.xlu0 %v3427, 40
      %v3492 = vpop.permute.xlu0 %3491
      %3493 = vrot.lane.b32.xlu0 %v3429, 40
      %v3494 = vpop.permute.xlu0 %3493
      %3495 = vrot.lane.b32.xlu0 %v3431, 40
      %v3496 = vpop.permute.xlu0 %3495
      %3497 = vrot.lane.b32.xlu0 %v3433, 40
      %v3498 = vpop.permute.xlu0 %3497
      %3499 = vrot.lane.b32.xlu0 %v3435, 40
      %v3500 = vpop.permute.xlu0 %3499
      %3501 = vrot.lane.b32.xlu0 %v3437, 40
      %v3502 = vpop.permute.xlu0 %3501
      %3503 = vrot.lane.b32.xlu0 %v3439, 40
      %v3504 = vpop.permute.xlu0 %3503
      %3505 = vrot.lane.b32.xlu0 %v3441, 40
      %v3506 = vpop.permute.xlu0 %3505
      %3507 = vrot.lane.b32.xlu0 %v3443, 40
      %v3508 = vpop.permute.xlu0 %3507
      %3509 = vrot.lane.b32.xlu0 %v3445, 40
      %v3510 = vpop.permute.xlu0 %3509
      %3511 = vrot.lane.b32.xlu0 %v3447, 40
      %v3512 = vpop.permute.xlu0 %3511
      %3513 = vrot.lane.b32.xlu0 %v3449, 40
      %v3514 = vpop.permute.xlu0 %3513
      %3515 = vrot.lane.b32.xlu0 %v3451, 40
      %v3516 = vpop.permute.xlu0 %3515
      %3517 = vrot.lane.b32.xlu0 %v3454, 40
      %v3518 = vpop.permute.xlu0 %3517
      %3519 = vrot.lane.b32.xlu0 %v3456, 40
      %v3520 = vpop.permute.xlu0 %3519
      %3521 = vrot.lane.b32.xlu0 %v3458, 40
      %v3522 = vpop.permute.xlu0 %3521
      %3523 = vrot.lane.b32.xlu0 %v3460, 40
      %v3524 = vpop.permute.xlu0 %3523
      %3525 = vrot.lane.b32.xlu0 %v3462, 40
      %v3526 = vpop.permute.xlu0 %3525
      %3527 = vrot.lane.b32.xlu0 %v3464, 40
      %v3528 = vpop.permute.xlu0 %3527
      %3529 = vrot.lane.b32.xlu0 %v3466, 40
      %v3530 = vpop.permute.xlu0 %3529
      %3531 = vrot.lane.b32.xlu0 %v3468, 40
      %v3532 = vpop.permute.xlu0 %3531
      %3533 = vrot.lane.b32.xlu0 %v3470, 40
      %v3534 = vpop.permute.xlu0 %3533
      %3535 = vrot.lane.b32.xlu0 %v3472, 40
      %v3536 = vpop.permute.xlu0 %3535
      %3537 = vrot.lane.b32.xlu0 %v3474, 40
      %v3538 = vpop.permute.xlu0 %3537
      %3539 = vrot.lane.b32.xlu0 %v3476, 40
      %v3540 = vpop.permute.xlu0 %3539
      %3541 = vrot.lane.b32.xlu0 %v3478, 40
      %v3542 = vpop.permute.xlu0 %3541
      %3543 = vrot.lane.b32.xlu0 %v3480, 40
      %v3544 = vpop.permute.xlu0 %3543
      %3545 = vrot.lane.b32.xlu0 %v3482, 40
      %v3546 = vpop.permute.xlu0 %3545
      %3547 = vrot.lane.b32.xlu0 %v3484, 40
      %v3548 = vpop.permute.xlu0 %3547
      %v3613 = vunpack.c.l.b16 %v1845
      %v3614 = vunpack.c.l.b16 %v1846
      %v3615 = vunpack.c.l.b16 %v1847
      %v3616 = vunpack.c.l.b16 %v1848
      %v3617 = vunpack.c.l.b16 %v1849
      %v3618 = vunpack.c.l.b16 %v1850
      %v3619 = vunpack.c.l.b16 %v1851
      %v3620 = vunpack.c.l.b16 %v1852
      %v3621 = vunpack.c.l.b16 %v1853
      %v3622 = vunpack.c.l.b16 %v1854
      %v3623 = vunpack.c.l.b16 %v1855
      %v3624 = vunpack.c.l.b16 %v1856
      %v3625 = vunpack.c.l.b16 %v1857
      %v3626 = vunpack.c.l.b16 %v1858
      %v3627 = vunpack.c.l.b16 %v1859
      %v3628 = vunpack.c.l.b16 %v1860
      %v3629 = vunpack.c.l.b16 %v1861
      %v3630 = vunpack.c.l.b16 %v1862
      %v3631 = vunpack.c.l.b16 %v1863
      %v3632 = vunpack.c.l.b16 %v1864
      %v3633 = vunpack.c.l.b16 %v1865
      %v3634 = vunpack.c.l.b16 %v1866
      %v3635 = vunpack.c.l.b16 %v1867
      %v3636 = vunpack.c.l.b16 %v1868
      %v3637 = vunpack.c.l.b16 %v1869
      %v3638 = vunpack.c.l.b16 %v1870
      %v3639 = vunpack.c.l.b16 %v1871
      %v3640 = vunpack.c.l.b16 %v1872
      %v3641 = vunpack.c.l.b16 %v1873
      %v3642 = vunpack.c.l.b16 %v1874
      %v3643 = vunpack.c.l.b16 %v1875
      %v3644 = vunpack.c.l.b16 %v1876
      %v3645 = vunpack.c.l.b16 %v1877
      %v3646 = vunpack.c.l.b16 %v1878
      %v3647 = vunpack.c.l.b16 %v1879
      %v3648 = vunpack.c.l.b16 %v1880
      %v3649 = vunpack.c.l.b16 %v1881
      %v3650 = vunpack.c.l.b16 %v1882
      %v3651 = vunpack.c.l.b16 %v1883
      %v3652 = vunpack.c.l.b16 %v1884
      %v3653 = vunpack.c.l.b16 %v1885
      %v3654 = vunpack.c.l.b16 %v1886
      %v3655 = vunpack.c.l.b16 %v1887
      %v3656 = vunpack.c.l.b16 %v1888
      %v3657 = vunpack.c.l.b16 %v1889
      %v3658 = vunpack.c.l.b16 %v1890
      %v3659 = vunpack.c.l.b16 %v1891
      %v3660 = vunpack.c.l.b16 %v1892
      %v3661 = vunpack.c.l.b16 %v1893
      %v3662 = vunpack.c.l.b16 %v1894
      %v3663 = vunpack.c.l.b16 %v1895
      %v3664 = vunpack.c.l.b16 %v1896
      %v3665 = vunpack.c.l.b16 %v1897
      %v3666 = vunpack.c.l.b16 %v1898
      %v3667 = vunpack.c.l.b16 %v1899
      %v3668 = vunpack.c.l.b16 %v1900
      %v3669 = vunpack.c.l.b16 %v1901
      %v3670 = vunpack.c.l.b16 %v1902
      %v3671 = vunpack.c.l.b16 %v1903
      %v3672 = vunpack.c.l.b16 %v1904
      %v3673 = vunpack.c.l.b16 %v1905
      %v3674 = vunpack.c.l.b16 %v1906
      %v3675 = vunpack.c.l.b16 %v1907
      %v3676 = vunpack.c.l.b16 %v1908
      %v3677 = vpack.c.b16 %v3614, %v3613
      %v3678 = vpack.c.b16 %v3616, %v3615
      %v3679 = vpack.c.b16 %v3618, %v3617
      %v3680 = vpack.c.b16 %v3620, %v3619
      %v3681 = vpack.c.b16 %v3622, %v3621
      %v3682 = vpack.c.b16 %v3624, %v3623
      %v3683 = vpack.c.b16 %v3626, %v3625
      %v3684 = vpack.c.b16 %v3628, %v3627
      %v3685 = vpack.c.b16 %v3630, %v3629
      %v3686 = vpack.c.b16 %v3632, %v3631
      %v3687 = vpack.c.b16 %v3634, %v3633
      %v3688 = vpack.c.b16 %v3636, %v3635
      %v3689 = vpack.c.b16 %v3638, %v3637
      %v3690 = vpack.c.b16 %v3640, %v3639
      %v3691 = vpack.c.b16 %v3642, %v3641
      %v3692 = vpack.c.b16 %v3644, %v3643
      %v3693 = vpack.c.b16 %v3646, %v3645
      %v3694 = vpack.c.b16 %v3648, %v3647
      %v3695 = vpack.c.b16 %v3650, %v3649
      %v3696 = vpack.c.b16 %v3652, %v3651
      %v3697 = vpack.c.b16 %v3654, %v3653
      %v3698 = vpack.c.b16 %v3656, %v3655
      %v3699 = vpack.c.b16 %v3658, %v3657
      %v3700 = vpack.c.b16 %v3660, %v3659
      %v3701 = vpack.c.b16 %v3662, %v3661
      %v3702 = vpack.c.b16 %v3664, %v3663
      %v3703 = vpack.c.b16 %v3666, %v3665
      %v3704 = vpack.c.b16 %v3668, %v3667
      %v3705 = vpack.c.b16 %v3670, %v3669
      %v3706 = vpack.c.b16 %v3672, %v3671
      %v3707 = vpack.c.b16 %v3674, %v3673
      %v3708 = vpack.c.b16 %v3676, %v3675
      %3709 = vrot.lane.b32.xlu0 %v3677, 48
      %v3710 = vpop.permute.xlu0 %3709
      %3711 = vrot.lane.b32.xlu0 %v3678, 48
      %v3712 = vpop.permute.xlu0 %3711
      %3713 = vrot.lane.b32.xlu0 %v3679, 48
      %v3714 = vpop.permute.xlu0 %3713
      %3715 = vrot.lane.b32.xlu0 %v3680, 48
      %v3716 = vpop.permute.xlu0 %3715
      %3717 = vrot.lane.b32.xlu0 %v3681, 48
      %v3718 = vpop.permute.xlu0 %3717
      %3719 = vrot.lane.b32.xlu0 %v3682, 48
      %v3720 = vpop.permute.xlu0 %3719
      %3721 = vrot.lane.b32.xlu0 %v3683, 48
      %v3722 = vpop.permute.xlu0 %3721
      %3723 = vrot.lane.b32.xlu0 %v3684, 48
      %v3724 = vpop.permute.xlu0 %3723
      %3725 = vrot.lane.b32.xlu0 %v3685, 48
      %v3726 = vpop.permute.xlu0 %3725
      %3727 = vrot.lane.b32.xlu0 %v3686, 48
      %v3728 = vpop.permute.xlu0 %3727
      %3729 = vrot.lane.b32.xlu0 %v3687, 48
      %v3730 = vpop.permute.xlu0 %3729
      %3731 = vrot.lane.b32.xlu0 %v3688, 48
      %v3732 = vpop.permute.xlu0 %3731
      %3733 = vrot.lane.b32.xlu0 %v3689, 48
      %v3734 = vpop.permute.xlu0 %3733
      %3735 = vrot.lane.b32.xlu0 %v3690, 48
      %v3736 = vpop.permute.xlu0 %3735
      %3737 = vrot.lane.b32.xlu0 %v3691, 48
      %v3738 = vpop.permute.xlu0 %3737
      %3739 = vrot.lane.b32.xlu0 %v3692, 48
      %v3740 = vpop.permute.xlu0 %3739
      %3741 = vrot.lane.b32.xlu0 %v3693, 48
      %v3742 = vpop.permute.xlu0 %3741
      %3743 = vrot.lane.b32.xlu0 %v3694, 48
      %v3744 = vpop.permute.xlu0 %3743
      %3745 = vrot.lane.b32.xlu0 %v3695, 48
      %v3746 = vpop.permute.xlu0 %3745
      %3747 = vrot.lane.b32.xlu0 %v3696, 48
      %v3748 = vpop.permute.xlu0 %3747
      %3749 = vrot.lane.b32.xlu0 %v3697, 48
      %v3750 = vpop.permute.xlu0 %3749
      %3751 = vrot.lane.b32.xlu0 %v3698, 48
      %v3752 = vpop.permute.xlu0 %3751
      %3753 = vrot.lane.b32.xlu0 %v3699, 48
      %v3754 = vpop.permute.xlu0 %3753
      %3755 = vrot.lane.b32.xlu0 %v3700, 48
      %v3756 = vpop.permute.xlu0 %3755
      %3757 = vrot.lane.b32.xlu0 %v3701, 48
      %v3758 = vpop.permute.xlu0 %3757
      %3759 = vrot.lane.b32.xlu0 %v3702, 48
      %v3760 = vpop.permute.xlu0 %3759
      %3761 = vrot.lane.b32.xlu0 %v3703, 48
      %v3762 = vpop.permute.xlu0 %3761
      %3763 = vrot.lane.b32.xlu0 %v3704, 48
      %v3764 = vpop.permute.xlu0 %3763
      %3765 = vrot.lane.b32.xlu0 %v3705, 48
      %v3766 = vpop.permute.xlu0 %3765
      %3767 = vrot.lane.b32.xlu0 %v3706, 48
      %v3768 = vpop.permute.xlu0 %3767
      %3769 = vrot.lane.b32.xlu0 %v3707, 48
      %v3770 = vpop.permute.xlu0 %3769
      %3771 = vrot.lane.b32.xlu0 %v3708, 48
      %v3772 = vpop.permute.xlu0 %3771
      %v3777 = vunpack.c.l.b16 %v551
      %v3778 = vunpack.c.l.b16 %v552
      %v3779 = vunpack.c.l.b16 %v588
      %v3780 = vunpack.c.l.b16 %v589
      %v3781 = vpack.c.b16 %v3777, %v3156
      %v3782 = vpack.c.b16 %v3778, %v3778
      %v3783 = vpack.c.b16 %v3779, %v3158
      %v3784 = vpack.c.b16 %v3780, %v3780
      %v3786 = vshll.u32 %v3781, 16
      %v3788 = vrot.slane %v3786, 1
      %v3789 = vsel %vm2301, %v3170, %v3788
      %v3790 = vshrl.u32 %v3781, 16
      %v3792 = vor.u32 %v3790, %v3788
      %v3794 = vshll.u32 %v3782, 16
      %v3796 = vrot.slane %v3794, 1
      %v3797 = vsel %vm2301, %v3792, %v3796
      %v3799 = vshll.u32 %v3783, 16
      %v3801 = vrot.slane %v3799, 1
      %v3802 = vsel %vm2301, %v3183, %v3801
      %v3803 = vshrl.u32 %v3783, 16
      %v3805 = vor.u32 %v3803, %v3801
      %v3807 = vshll.u32 %v3784, 16
      %v3809 = vrot.slane %v3807, 1
      %v3810 = vsel %vm2301, %v3805, %v3809
      %3811 = vrot.lane.b32.xlu0 %v2329, 56
      %v3812 = vpop.permute.xlu0 %3811
      %3813 = vrot.lane.b32.xlu0 %v2337, 56
      %v3814 = vpop.permute.xlu0 %3813
      %3815 = vrot.lane.b32.xlu0 %v2345, 56
      %v3816 = vpop.permute.xlu0 %3815
      %3817 = vrot.lane.b32.xlu0 %v2353, 56
      %v3818 = vpop.permute.xlu0 %3817
      %3819 = vrot.lane.b32.xlu0 %v2361, 56
      %v3820 = vpop.permute.xlu0 %3819
      %3821 = vrot.lane.b32.xlu0 %v2369, 56
      %v3822 = vpop.permute.xlu0 %3821
      %3823 = vrot.lane.b32.xlu0 %v2377, 56
      %v3824 = vpop.permute.xlu0 %3823
      %3825 = vrot.lane.b32.xlu0 %v2385, 56
      %v3826 = vpop.permute.xlu0 %3825
      %3827 = vrot.lane.b32.xlu0 %v2393, 56
      %v3828 = vpop.permute.xlu0 %3827
      %3829 = vrot.lane.b32.xlu0 %v2401, 56
      %v3830 = vpop.permute.xlu0 %3829
      %3831 = vrot.lane.b32.xlu0 %v2409, 56
      %v3832 = vpop.permute.xlu0 %3831
      %3833 = vrot.lane.b32.xlu0 %v2417, 56
      %v3834 = vpop.permute.xlu0 %3833
      %3835 = vrot.lane.b32.xlu0 %v2425, 56
      %v3836 = vpop.permute.xlu0 %3835
      %3837 = vrot.lane.b32.xlu0 %v3167, 56
      %v3838 = vpop.permute.xlu0 %3837
      %3839 = vrot.lane.b32.xlu0 %v3789, 56
      %v3840 = vpop.permute.xlu0 %3839
      %3841 = vrot.lane.b32.xlu0 %v3797, 56
      %v3842 = vpop.permute.xlu0 %3841
      %3843 = vrot.lane.b32.xlu0 %v2461, 56
      %v3844 = vpop.permute.xlu0 %3843
      %3845 = vrot.lane.b32.xlu0 %v2469, 56
      %v3846 = vpop.permute.xlu0 %3845
      %3847 = vrot.lane.b32.xlu0 %v2477, 56
      %v3848 = vpop.permute.xlu0 %3847
      %3849 = vrot.lane.b32.xlu0 %v2485, 56
      %v3850 = vpop.permute.xlu0 %3849
      %3851 = vrot.lane.b32.xlu0 %v2493, 56
      %v3852 = vpop.permute.xlu0 %3851
      %3853 = vrot.lane.b32.xlu0 %v2501, 56
      %v3854 = vpop.permute.xlu0 %3853
      %3855 = vrot.lane.b32.xlu0 %v2509, 56
      %v3856 = vpop.permute.xlu0 %3855
      %3857 = vrot.lane.b32.xlu0 %v2517, 56
      %v3858 = vpop.permute.xlu0 %3857
      %3859 = vrot.lane.b32.xlu0 %v2525, 56
      %v3860 = vpop.permute.xlu0 %3859
      %3861 = vrot.lane.b32.xlu0 %v2533, 56
      %v3862 = vpop.permute.xlu0 %3861
      %3863 = vrot.lane.b32.xlu0 %v2541, 56
      %v3864 = vpop.permute.xlu0 %3863
      %3865 = vrot.lane.b32.xlu0 %v2549, 56
      %v3866 = vpop.permute.xlu0 %3865
      %3867 = vrot.lane.b32.xlu0 %v2557, 56
      %v3868 = vpop.permute.xlu0 %3867
      %3869 = vrot.lane.b32.xlu0 %v3180, 56
      %v3870 = vpop.permute.xlu0 %3869
      %3871 = vrot.lane.b32.xlu0 %v3802, 56
      %v3872 = vpop.permute.xlu0 %3871
      %3873 = vrot.lane.b32.xlu0 %v3810, 56
      %v3874 = vpop.permute.xlu0 %3873
      %v3941 = vunpack.c.l.b16 %v1909
      %v3942 = vunpack.c.l.b16 %v1910
      %v3943 = vunpack.c.l.b16 %v1911
      %v3944 = vunpack.c.l.b16 %v1912
      %v3945 = vunpack.c.l.b16 %v1913
      %v3946 = vunpack.c.l.b16 %v1914
      %v3947 = vunpack.c.l.b16 %v1915
      %v3948 = vunpack.c.l.b16 %v1916
      %v3949 = vunpack.c.l.b16 %v1917
      %v3950 = vunpack.c.l.b16 %v1918
      %v3951 = vunpack.c.l.b16 %v1919
      %v3952 = vunpack.c.l.b16 %v1920
      %v3953 = vunpack.c.l.b16 %v1921
      %v3954 = vunpack.c.l.b16 %v1922
      %v3955 = vunpack.c.l.b16 %v1923
      %v3956 = vunpack.c.l.b16 %v1924
      %v3957 = vunpack.c.l.b16 %v1925
      %v3958 = vunpack.c.l.b16 %v1926
      %v3959 = vunpack.c.l.b16 %v1927
      %v3960 = vunpack.c.l.b16 %v1928
      %v3961 = vunpack.c.l.b16 %v1929
      %v3962 = vunpack.c.l.b16 %v1930
      %v3963 = vunpack.c.l.b16 %v1931
      %v3964 = vunpack.c.l.b16 %v1932
      %v3965 = vunpack.c.l.b16 %v1933
      %v3966 = vunpack.c.l.b16 %v1934
      %v3967 = vunpack.c.l.b16 %v1935
      %v3968 = vunpack.c.l.b16 %v1936
      %v3969 = vunpack.c.l.b16 %v1937
      %v3970 = vunpack.c.l.b16 %v1938
      %v3971 = vunpack.c.l.b16 %v1939
      %v3972 = vunpack.c.l.b16 %v1940
      %v3973 = vunpack.c.l.b16 %v1941
      %v3974 = vunpack.c.l.b16 %v1942
      %v3975 = vunpack.c.l.b16 %v1943
      %v3976 = vunpack.c.l.b16 %v1944
      %v3977 = vunpack.c.l.b16 %v1945
      %v3978 = vunpack.c.l.b16 %v1946
      %v3979 = vunpack.c.l.b16 %v1947
      %v3980 = vunpack.c.l.b16 %v1948
      %v3981 = vunpack.c.l.b16 %v1949
      %v3982 = vunpack.c.l.b16 %v1950
      %v3983 = vunpack.c.l.b16 %v1951
      %v3984 = vunpack.c.l.b16 %v1952
      %v3985 = vunpack.c.l.b16 %v1953
      %v3986 = vunpack.c.l.b16 %v1954
      %v3987 = vunpack.c.l.b16 %v1955
      %v3988 = vunpack.c.l.b16 %v1956
      %v3989 = vunpack.c.l.b16 %v1957
      %v3990 = vunpack.c.l.b16 %v1958
      %v3991 = vunpack.c.l.b16 %v1959
      %v3992 = vunpack.c.l.b16 %v1960
      %v3993 = vunpack.c.l.b16 %v1961
      %v3994 = vunpack.c.l.b16 %v1962
      %v3995 = vunpack.c.l.b16 %v1963
      %v3996 = vunpack.c.l.b16 %v1964
      %v3997 = vunpack.c.l.b16 %v1965
      %v3998 = vunpack.c.l.b16 %v1966
      %v3999 = vunpack.c.l.b16 %v1967
      %v4000 = vunpack.c.l.b16 %v1968
      %v4001 = vunpack.c.l.b16 %v1969
      %v4002 = vunpack.c.l.b16 %v1970
      %v4003 = vunpack.c.l.b16 %v1971
      %v4004 = vunpack.c.l.b16 %v1972
      %v4005 = vunpack.c.l.b16 %v1973
      %v4006 = vunpack.c.l.b16 %v1974
      %v4007 = vpack.c.b16 %v3942, %v3941
      %v4008 = vpack.c.b16 %v3944, %v3943
      %v4009 = vpack.c.b16 %v3946, %v3945
      %v4010 = vpack.c.b16 %v3948, %v3947
      %v4011 = vpack.c.b16 %v3950, %v3949
      %v4012 = vpack.c.b16 %v3952, %v3951
      %v4013 = vpack.c.b16 %v3954, %v3953
      %v4014 = vpack.c.b16 %v3956, %v3955
      %v4015 = vpack.c.b16 %v3958, %v3957
      %v4016 = vpack.c.b16 %v3960, %v3959
      %v4017 = vpack.c.b16 %v3962, %v3961
      %v4018 = vpack.c.b16 %v3964, %v3963
      %v4019 = vpack.c.b16 %v3966, %v3965
      %v4020 = vpack.c.b16 %v3968, %v3967
      %v4021 = vpack.c.b16 %v3970, %v3969
      %v4022 = vpack.c.b16 %v3972, %v3971
      %v4023 = vpack.c.b16 %v3973, %v3973
      %v4024 = vpack.c.b16 %v3975, %v3974
      %v4025 = vpack.c.b16 %v3977, %v3976
      %v4026 = vpack.c.b16 %v3979, %v3978
      %v4027 = vpack.c.b16 %v3981, %v3980
      %v4028 = vpack.c.b16 %v3983, %v3982
      %v4029 = vpack.c.b16 %v3985, %v3984
      %v4030 = vpack.c.b16 %v3987, %v3986
      %v4031 = vpack.c.b16 %v3989, %v3988
      %v4032 = vpack.c.b16 %v3991, %v3990
      %v4033 = vpack.c.b16 %v3993, %v3992
      %v4034 = vpack.c.b16 %v3995, %v3994
      %v4035 = vpack.c.b16 %v3997, %v3996
      %v4036 = vpack.c.b16 %v3999, %v3998
      %v4037 = vpack.c.b16 %v4001, %v4000
      %v4038 = vpack.c.b16 %v4003, %v4002
      %v4039 = vpack.c.b16 %v4005, %v4004
      %v4040 = vpack.c.b16 %v4006, %v4006
      %v4041 = vrot.slane %v4007, 1
      %v4042 = vrot.slane %v4008, 1
      %v4043 = vsel %vm2796, %v4041, %v4042
      %v4044 = vrot.slane %v4009, 1
      %v4045 = vsel %vm2796, %v4042, %v4044
      %v4046 = vrot.slane %v4010, 1
      %v4047 = vsel %vm2796, %v4044, %v4046
      %v4048 = vrot.slane %v4011, 1
      %v4049 = vsel %vm2796, %v4046, %v4048
      %v4050 = vrot.slane %v4012, 1
      %v4051 = vsel %vm2796, %v4048, %v4050
      %v4052 = vrot.slane %v4013, 1
      %v4053 = vsel %vm2796, %v4050, %v4052
      %v4054 = vrot.slane %v4014, 1
      %v4055 = vsel %vm2796, %v4052, %v4054
      %v4056 = vrot.slane %v4015, 1
      %v4057 = vsel %vm2796, %v4054, %v4056
      %v4058 = vrot.slane %v4016, 1
      %v4059 = vsel %vm2796, %v4056, %v4058
      %v4060 = vrot.slane %v4017, 1
      %v4061 = vsel %vm2796, %v4058, %v4060
      %v4062 = vrot.slane %v4018, 1
      %v4063 = vsel %vm2796, %v4060, %v4062
      %v4064 = vrot.slane %v4019, 1
      %v4065 = vsel %vm2796, %v4062, %v4064
      %v4066 = vrot.slane %v4020, 1
      %v4067 = vsel %vm2796, %v4064, %v4066
      %v4068 = vrot.slane %v4021, 1
      %v4069 = vsel %vm2796, %v4066, %v4068
      %v4070 = vrot.slane %v4022, 1
      %v4071 = vsel %vm2796, %v4068, %v4070
      %v4072 = vrot.slane %v4023, 1
      %v4073 = vsel %vm2796, %v4070, %v4072
      %v4074 = vrot.slane %v4024, 1
      %v4075 = vrot.slane %v4025, 1
      %v4076 = vsel %vm2796, %v4074, %v4075
      %v4077 = vrot.slane %v4026, 1
      %v4078 = vsel %vm2796, %v4075, %v4077
      %v4079 = vrot.slane %v4027, 1
      %v4080 = vsel %vm2796, %v4077, %v4079
      %v4081 = vrot.slane %v4028, 1
      %v4082 = vsel %vm2796, %v4079, %v4081
      %v4083 = vrot.slane %v4029, 1
      %v4084 = vsel %vm2796, %v4081, %v4083
      %v4085 = vrot.slane %v4030, 1
      %v4086 = vsel %vm2796, %v4083, %v4085
      %v4087 = vrot.slane %v4031, 1
      %v4088 = vsel %vm2796, %v4085, %v4087
      %v4089 = vrot.slane %v4032, 1
      %v4090 = vsel %vm2796, %v4087, %v4089
      %v4091 = vrot.slane %v4033, 1
      %v4092 = vsel %vm2796, %v4089, %v4091
      %v4093 = vrot.slane %v4034, 1
      %v4094 = vsel %vm2796, %v4091, %v4093
      %v4095 = vrot.slane %v4035, 1
      %v4096 = vsel %vm2796, %v4093, %v4095
      %v4097 = vrot.slane %v4036, 1
      %v4098 = vsel %vm2796, %v4095, %v4097
      %v4099 = vrot.slane %v4037, 1
      %v4100 = vsel %vm2796, %v4097, %v4099
      %v4101 = vrot.slane %v4038, 1
      %v4102 = vsel %vm2796, %v4099, %v4101
      %v4103 = vrot.slane %v4039, 1
      %v4104 = vsel %vm2796, %v4101, %v4103
      %v4105 = vrot.slane %v4040, 1
      %v4106 = vsel %vm2796, %v4103, %v4105
      %4107 = vrot.lane.b32.xlu0 %v4043, 64
      %v4108 = vpop.permute.xlu0 %4107
      %4109 = vrot.lane.b32.xlu0 %v4045, 64
      %v4110 = vpop.permute.xlu0 %4109
      %4111 = vrot.lane.b32.xlu0 %v4047, 64
      %v4112 = vpop.permute.xlu0 %4111
      %4113 = vrot.lane.b32.xlu0 %v4049, 64
      %v4114 = vpop.permute.xlu0 %4113
      %4115 = vrot.lane.b32.xlu0 %v4051, 64
      %v4116 = vpop.permute.xlu0 %4115
      %4117 = vrot.lane.b32.xlu0 %v4053, 64
      %v4118 = vpop.permute.xlu0 %4117
      %4119 = vrot.lane.b32.xlu0 %v4055, 64
      %v4120 = vpop.permute.xlu0 %4119
      %4121 = vrot.lane.b32.xlu0 %v4057, 64
      %v4122 = vpop.permute.xlu0 %4121
      %4123 = vrot.lane.b32.xlu0 %v4059, 64
      %v4124 = vpop.permute.xlu0 %4123
      %4125 = vrot.lane.b32.xlu0 %v4061, 64
      %v4126 = vpop.permute.xlu0 %4125
      %4127 = vrot.lane.b32.xlu0 %v4063, 64
      %v4128 = vpop.permute.xlu0 %4127
      %4129 = vrot.lane.b32.xlu0 %v4065, 64
      %v4130 = vpop.permute.xlu0 %4129
      %4131 = vrot.lane.b32.xlu0 %v4067, 64
      %v4132 = vpop.permute.xlu0 %4131
      %4133 = vrot.lane.b32.xlu0 %v4069, 64
      %v4134 = vpop.permute.xlu0 %4133
      %4135 = vrot.lane.b32.xlu0 %v4071, 64
      %v4136 = vpop.permute.xlu0 %4135
      %4137 = vrot.lane.b32.xlu0 %v4073, 64
      %v4138 = vpop.permute.xlu0 %4137
      %4139 = vrot.lane.b32.xlu0 %v4076, 64
      %v4140 = vpop.permute.xlu0 %4139
      %4141 = vrot.lane.b32.xlu0 %v4078, 64
      %v4142 = vpop.permute.xlu0 %4141
      %4143 = vrot.lane.b32.xlu0 %v4080, 64
      %v4144 = vpop.permute.xlu0 %4143
      %4145 = vrot.lane.b32.xlu0 %v4082, 64
      %v4146 = vpop.permute.xlu0 %4145
      %4147 = vrot.lane.b32.xlu0 %v4084, 64
      %v4148 = vpop.permute.xlu0 %4147
      %4149 = vrot.lane.b32.xlu0 %v4086, 64
      %v4150 = vpop.permute.xlu0 %4149
      %4151 = vrot.lane.b32.xlu0 %v4088, 64
      %v4152 = vpop.permute.xlu0 %4151
      %4153 = vrot.lane.b32.xlu0 %v4090, 64
      %v4154 = vpop.permute.xlu0 %4153
      %4155 = vrot.lane.b32.xlu0 %v4092, 64
      %v4156 = vpop.permute.xlu0 %4155
      %4157 = vrot.lane.b32.xlu0 %v4094, 64
      %v4158 = vpop.permute.xlu0 %4157
      %4159 = vrot.lane.b32.xlu0 %v4096, 64
      %v4160 = vpop.permute.xlu0 %4159
      %4161 = vrot.lane.b32.xlu0 %v4098, 64
      %v4162 = vpop.permute.xlu0 %4161
      %4163 = vrot.lane.b32.xlu0 %v4100, 64
      %v4164 = vpop.permute.xlu0 %4163
      %4165 = vrot.lane.b32.xlu0 %v4102, 64
      %v4166 = vpop.permute.xlu0 %4165
      %4167 = vrot.lane.b32.xlu0 %v4104, 64
      %v4168 = vpop.permute.xlu0 %4167
      %4169 = vrot.lane.b32.xlu0 %v4106, 64
      %v4170 = vpop.permute.xlu0 %4169
      %vm4171 = vcmask 64512
      %v4174 = vsel %vm4171, %v2103, %v2567
      %v4177 = vsel %vm4171, %v2104, %v2569
      %v4180 = vsel %vm4171, %v2105, %v2571
      %v4183 = vsel %vm4171, %v2106, %v2573
      %v4186 = vsel %vm4171, %v2107, %v2575
      %v4189 = vsel %vm4171, %v2108, %v2577
      %v4192 = vsel %vm4171, %v2109, %v2579
      %v4195 = vsel %vm4171, %v2110, %v2581
      %v4198 = vsel %vm4171, %v2111, %v2583
      %v4201 = vsel %vm4171, %v2112, %v2585
      %v4204 = vsel %vm4171, %v2113, %v2587
      %v4207 = vsel %vm4171, %v2114, %v2589
      %v4210 = vsel %vm4171, %v2115, %v2591
      %v4213 = vsel %vm4171, %v2116, %v2593
      %v4216 = vsel %vm4171, %v2117, %v2595
      %v4219 = vsel %vm4171, %v2118, %v2597
      %v4222 = vsel %vm4171, %v2119, %v2599
      %v4225 = vsel %vm4171, %v2120, %v2601
      %v4228 = vsel %vm4171, %v2121, %v2603
      %v4231 = vsel %vm4171, %v2122, %v2605
      %v4234 = vsel %vm4171, %v2123, %v2607
      %v4237 = vsel %vm4171, %v2124, %v2609
      %v4240 = vsel %vm4171, %v2125, %v2611
      %v4243 = vsel %vm4171, %v2126, %v2613
      %v4246 = vsel %vm4171, %v2127, %v2615
      %v4249 = vsel %vm4171, %v2128, %v2617
      %v4252 = vsel %vm4171, %v2129, %v2619
      %v4255 = vsel %vm4171, %v2130, %v2621
      %v4258 = vsel %vm4171, %v2131, %v2623
      %v4261 = vsel %vm4171, %v2132, %v2625
      %v4264 = vsel %vm4171, %v2133, %v2627
      %v4267 = vsel %vm4171, %v2134, %v2629
      %vm4268 = vcmask 130048
      %v4270 = vsel %vm4268, %v4174, %v2864
      %v4272 = vsel %vm4268, %v4177, %v2866
      %v4274 = vsel %vm4268, %v4180, %v2868
      %v4276 = vsel %vm4268, %v4183, %v2870
      %v4278 = vsel %vm4268, %v4186, %v2872
      %v4280 = vsel %vm4268, %v4189, %v2874
      %v4282 = vsel %vm4268, %v4192, %v2876
      %v4284 = vsel %vm4268, %v4195, %v2878
      %v4286 = vsel %vm4268, %v4198, %v2880
      %v4288 = vsel %vm4268, %v4201, %v2882
      %v4290 = vsel %vm4268, %v4204, %v2884
      %v4292 = vsel %vm4268, %v4207, %v2886
      %v4294 = vsel %vm4268, %v4210, %v2888
      %v4296 = vsel %vm4268, %v4213, %v2890
      %v4298 = vsel %vm4268, %v4216, %v2892
      %v4300 = vsel %vm4268, %v4219, %v2894
      %v4302 = vsel %vm4268, %v4222, %v2896
      %v4304 = vsel %vm4268, %v4225, %v2898
      %v4306 = vsel %vm4268, %v4228, %v2900
      %v4308 = vsel %vm4268, %v4231, %v2902
      %v4310 = vsel %vm4268, %v4234, %v2904
      %v4312 = vsel %vm4268, %v4237, %v2906
      %v4314 = vsel %vm4268, %v4240, %v2908
      %v4316 = vsel %vm4268, %v4243, %v2910
      %v4318 = vsel %vm4268, %v4246, %v2912
      %v4320 = vsel %vm4268, %v4249, %v2914
      %v4322 = vsel %vm4268, %v4252, %v2916
      %v4324 = vsel %vm4268, %v4255, %v2918
      %v4326 = vsel %vm4268, %v4258, %v2920
      %v4328 = vsel %vm4268, %v4261, %v2922
      %v4330 = vsel %vm4268, %v4264, %v2924
      %v4332 = vsel %vm4268, %v4267, %v2926
      %vm4333 = vcmask 195584
      %v4335 = vsel %vm4333, %v4270, %v3088
      %v4337 = vsel %vm4333, %v4272, %v3090
      %v4339 = vsel %vm4333, %v4274, %v3092
      %v4341 = vsel %vm4333, %v4276, %v3094
      %v4343 = vsel %vm4333, %v4278, %v3096
      %v4345 = vsel %vm4333, %v4280, %v3098
      %v4347 = vsel %vm4333, %v4282, %v3100
      %v4349 = vsel %vm4333, %v4284, %v3102
      %v4351 = vsel %vm4333, %v4286, %v3104
      %v4353 = vsel %vm4333, %v4288, %v3106
      %v4355 = vsel %vm4333, %v4290, %v3108
      %v4357 = vsel %vm4333, %v4292, %v3110
      %v4359 = vsel %vm4333, %v4294, %v3112
      %v4361 = vsel %vm4333, %v4296, %v3114
      %v4363 = vsel %vm4333, %v4298, %v3116
      %v4365 = vsel %vm4333, %v4300, %v3118
      %v4367 = vsel %vm4333, %v4302, %v3120
      %v4369 = vsel %vm4333, %v4304, %v3122
      %v4371 = vsel %vm4333, %v4306, %v3124
      %v4373 = vsel %vm4333, %v4308, %v3126
      %v4375 = vsel %vm4333, %v4310, %v3128
      %v4377 = vsel %vm4333, %v4312, %v3130
      %v4379 = vsel %vm4333, %v4314, %v3132
      %v4381 = vsel %vm4333, %v4316, %v3134
      %v4383 = vsel %vm4333, %v4318, %v3136
      %v4385 = vsel %vm4333, %v4320, %v3138
      %v4387 = vsel %vm4333, %v4322, %v3140
      %v4389 = vsel %vm4333, %v4324, %v3142
      %v4391 = vsel %vm4333, %v4326, %v3144
      %v4393 = vsel %vm4333, %v4328, %v3146
      %v4395 = vsel %vm4333, %v4330, %v3148
      %v4397 = vsel %vm4333, %v4332, %v3150
      %vm4398 = vcmask 261120
      %v4400 = vsel %vm4398, %v4335, %v3190
      %v4402 = vsel %vm4398, %v4337, %v3192
      %v4404 = vsel %vm4398, %v4339, %v3194
      %v4406 = vsel %vm4398, %v4341, %v3196
      %v4408 = vsel %vm4398, %v4343, %v3198
      %v4410 = vsel %vm4398, %v4345, %v3200
      %v4412 = vsel %vm4398, %v4347, %v3202
      %v4414 = vsel %vm4398, %v4349, %v3204
      %v4416 = vsel %vm4398, %v4351, %v3206
      %v4418 = vsel %vm4398, %v4353, %v3208
      %v4420 = vsel %vm4398, %v4355, %v3210
      %v4422 = vsel %vm4398, %v4357, %v3212
      %v4424 = vsel %vm4398, %v4359, %v3214
      %v4426 = vsel %vm4398, %v4361, %v3216
      %v4428 = vsel %vm4398, %v4363, %v3218
      %v4430 = vsel %vm4398, %v4365, %v3220
      %v4432 = vsel %vm4398, %v4367, %v3222
      %v4434 = vsel %vm4398, %v4369, %v3224
      %v4436 = vsel %vm4398, %v4371, %v3226
      %v4438 = vsel %vm4398, %v4373, %v3228
      %v4440 = vsel %vm4398, %v4375, %v3230
      %v4442 = vsel %vm4398, %v4377, %v3232
      %v4444 = vsel %vm4398, %v4379, %v3234
      %v4446 = vsel %vm4398, %v4381, %v3236
      %v4448 = vsel %vm4398, %v4383, %v3238
      %v4450 = vsel %vm4398, %v4385, %v3240
      %v4452 = vsel %vm4398, %v4387, %v3242
      %v4454 = vsel %vm4398, %v4389, %v3244
      %v4456 = vsel %vm4398, %v4391, %v3246
      %v4458 = vsel %vm4398, %v4393, %v3248
      %v4460 = vsel %vm4398, %v4395, %v3250
      %v4462 = vsel %vm4398, %v4397, %v3252
      %vm4463 = vcmask 326656
      %v4465 = vsel %vm4463, %v4400, %v3486
      %v4467 = vsel %vm4463, %v4402, %v3488
      %v4469 = vsel %vm4463, %v4404, %v3490
      %v4471 = vsel %vm4463, %v4406, %v3492
      %v4473 = vsel %vm4463, %v4408, %v3494
      %v4475 = vsel %vm4463, %v4410, %v3496
      %v4477 = vsel %vm4463, %v4412, %v3498
      %v4479 = vsel %vm4463, %v4414, %v3500
      %v4481 = vsel %vm4463, %v4416, %v3502
      %v4483 = vsel %vm4463, %v4418, %v3504
      %v4485 = vsel %vm4463, %v4420, %v3506
      %v4487 = vsel %vm4463, %v4422, %v3508
      %v4489 = vsel %vm4463, %v4424, %v3510
      %v4491 = vsel %vm4463, %v4426, %v3512
      %v4493 = vsel %vm4463, %v4428, %v3514
      %v4495 = vsel %vm4463, %v4430, %v3516
      %v4497 = vsel %vm4463, %v4432, %v3518
      %v4499 = vsel %vm4463, %v4434, %v3520
      %v4501 = vsel %vm4463, %v4436, %v3522
      %v4503 = vsel %vm4463, %v4438, %v3524
      %v4505 = vsel %vm4463, %v4440, %v3526
      %v4507 = vsel %vm4463, %v4442, %v3528
      %v4509 = vsel %vm4463, %v4444, %v3530
      %v4511 = vsel %vm4463, %v4446, %v3532
      %v4513 = vsel %vm4463, %v4448, %v3534
      %v4515 = vsel %vm4463, %v4450, %v3536
      %v4517 = vsel %vm4463, %v4452, %v3538
      %v4519 = vsel %vm4463, %v4454, %v3540
      %v4521 = vsel %vm4463, %v4456, %v3542
      %v4523 = vsel %vm4463, %v4458, %v3544
      %v4525 = vsel %vm4463, %v4460, %v3546
      %v4527 = vsel %vm4463, %v4462, %v3548
      %vm4528 = vcmask 392192
      %v4530 = vsel %vm4528, %v4465, %v3710
      %v4532 = vsel %vm4528, %v4467, %v3712
      %v4534 = vsel %vm4528, %v4469, %v3714
      %v4536 = vsel %vm4528, %v4471, %v3716
      %v4538 = vsel %vm4528, %v4473, %v3718
      %v4540 = vsel %vm4528, %v4475, %v3720
      %v4542 = vsel %vm4528, %v4477, %v3722
      %v4544 = vsel %vm4528, %v4479, %v3724
      %v4546 = vsel %vm4528, %v4481, %v3726
      %v4548 = vsel %vm4528, %v4483, %v3728
      %v4550 = vsel %vm4528, %v4485, %v3730
      %v4552 = vsel %vm4528, %v4487, %v3732
      %v4554 = vsel %vm4528, %v4489, %v3734
      %v4556 = vsel %vm4528, %v4491, %v3736
      %v4558 = vsel %vm4528, %v4493, %v3738
      %v4560 = vsel %vm4528, %v4495, %v3740
      %v4562 = vsel %vm4528, %v4497, %v3742
      %v4564 = vsel %vm4528, %v4499, %v3744
      %v4566 = vsel %vm4528, %v4501, %v3746
      %v4568 = vsel %vm4528, %v4503, %v3748
      %v4570 = vsel %vm4528, %v4505, %v3750
      %v4572 = vsel %vm4528, %v4507, %v3752
      %v4574 = vsel %vm4528, %v4509, %v3754
      %v4576 = vsel %vm4528, %v4511, %v3756
      %v4578 = vsel %vm4528, %v4513, %v3758
      %v4580 = vsel %vm4528, %v4515, %v3760
      %v4582 = vsel %vm4528, %v4517, %v3762
      %v4584 = vsel %vm4528, %v4519, %v3764
      %v4586 = vsel %vm4528, %v4521, %v3766
      %v4588 = vsel %vm4528, %v4523, %v3768
      %v4590 = vsel %vm4528, %v4525, %v3770
      %v4592 = vsel %vm4528, %v4527, %v3772
      %vm4593 = vcmask 457728
      %v4595 = vsel %vm4593, %v4530, %v3812
      %v4597 = vsel %vm4593, %v4532, %v3814
      %v4599 = vsel %vm4593, %v4534, %v3816
      %v4601 = vsel %vm4593, %v4536, %v3818
      %v4603 = vsel %vm4593, %v4538, %v3820
      %v4605 = vsel %vm4593, %v4540, %v3822
      %v4607 = vsel %vm4593, %v4542, %v3824
      %v4609 = vsel %vm4593, %v4544, %v3826
      %v4611 = vsel %vm4593, %v4546, %v3828
      %v4613 = vsel %vm4593, %v4548, %v3830
      %v4615 = vsel %vm4593, %v4550, %v3832
      %v4617 = vsel %vm4593, %v4552, %v3834
      %v4619 = vsel %vm4593, %v4554, %v3836
      %v4621 = vsel %vm4593, %v4556, %v3838
      %v4623 = vsel %vm4593, %v4558, %v3840
      %v4625 = vsel %vm4593, %v4560, %v3842
      %v4627 = vsel %vm4593, %v4562, %v3844
      %v4629 = vsel %vm4593, %v4564, %v3846
      %v4631 = vsel %vm4593, %v4566, %v3848
      %v4633 = vsel %vm4593, %v4568, %v3850
      %v4635 = vsel %vm4593, %v4570, %v3852
      %v4637 = vsel %vm4593, %v4572, %v3854
      %v4639 = vsel %vm4593, %v4574, %v3856
      %v4641 = vsel %vm4593, %v4576, %v3858
      %v4643 = vsel %vm4593, %v4578, %v3860
      %v4645 = vsel %vm4593, %v4580, %v3862
      %v4647 = vsel %vm4593, %v4582, %v3864
      %v4649 = vsel %vm4593, %v4584, %v3866
      %v4651 = vsel %vm4593, %v4586, %v3868
      %v4653 = vsel %vm4593, %v4588, %v3870
      %v4655 = vsel %vm4593, %v4590, %v3872
      %v4657 = vsel %vm4593, %v4592, %v3874
      %vm4658 = vcmask 523264
      %v4660 = vsel %vm4658, %v4595, %v4108
      %v4662 = vsel %vm4658, %v4597, %v4110
      %v4664 = vsel %vm4658, %v4599, %v4112
      %v4666 = vsel %vm4658, %v4601, %v4114
      %v4668 = vsel %vm4658, %v4603, %v4116
      %v4670 = vsel %vm4658, %v4605, %v4118
      %v4672 = vsel %vm4658, %v4607, %v4120
      %v4674 = vsel %vm4658, %v4609, %v4122
      %v4676 = vsel %vm4658, %v4611, %v4124
      %v4678 = vsel %vm4658, %v4613, %v4126
      %v4680 = vsel %vm4658, %v4615, %v4128
      %v4682 = vsel %vm4658, %v4617, %v4130
      %v4684 = vsel %vm4658, %v4619, %v4132
      %v4686 = vsel %vm4658, %v4621, %v4134
      %v4688 = vsel %vm4658, %v4623, %v4136
      %v4690 = vsel %vm4658, %v4625, %v4138
      %v4692 = vsel %vm4658, %v4627, %v4140
      %v4694 = vsel %vm4658, %v4629, %v4142
      %v4696 = vsel %vm4658, %v4631, %v4144
      %v4698 = vsel %vm4658, %v4633, %v4146
      %v4700 = vsel %vm4658, %v4635, %v4148
      %v4702 = vsel %vm4658, %v4637, %v4150
      %v4704 = vsel %vm4658, %v4639, %v4152
      %v4706 = vsel %vm4658, %v4641, %v4154
      %v4708 = vsel %vm4658, %v4643, %v4156
      %v4710 = vsel %vm4658, %v4645, %v4158
      %v4712 = vsel %vm4658, %v4647, %v4160
      %v4714 = vsel %vm4658, %v4649, %v4162
      %v4716 = vsel %vm4658, %v4651, %v4164
      %v4718 = vsel %vm4658, %v4653, %v4166
      %v4720 = vsel %vm4658, %v4655, %v4168
      %v4722 = vsel %vm4658, %v4657, %v4170
      %v4723 = vld [vmem:[%s485] sm:$0xf]
      %v4724 = vld [vmem:[%s485 + $0x4] sm:$0xf]
      %v4725 = vld [vmem:[%s485 + $0x8] sm:$0xf]
      %v4726 = vld [vmem:[%s485 + $0xc] sm:$0xf]
      %v4727 = vld [vmem:[%s485 + $0x10] sm:$0xf]
      %v4728 = vld [vmem:[%s485 + $0x14] sm:$0xf]
      %v4729 = vld [vmem:[%s485 + $0x18] sm:$0xf]
      %v4730 = vld [vmem:[%s485 + $0x1c] sm:$0xf]
      %v4731 = vld [vmem:[%s485 + $0x20] sm:$0xf]
      %v4732 = vld [vmem:[%s488] sm:$0x1]
      %v4734 = vlaneseq
      %v4735 = vshrl.u32 %v4734, 7
      %v4736 = vsub.s32 0, %v4735
      %v4737 = vrot.slane %v4732, %v4736
      %v4748 = vunpack.c.l.b16 %v4723
      %v4749 = vunpack.c.l.b16 %v4724
      %v4750 = vunpack.c.l.b16 %v4725
      %v4751 = vunpack.c.l.b16 %v4726
      %v4752 = vunpack.c.l.b16 %v4727
      %v4753 = vunpack.c.l.b16 %v4728
      %v4754 = vunpack.c.l.b16 %v4729
      %v4755 = vunpack.c.l.b16 %v4730
      %v4756 = vunpack.c.l.b16 %v4731
      %v4757 = vpack.c.b16 %v4749, %v4748
      %v4758 = vpack.c.b16 %v4751, %v4750
      %v4759 = vpack.c.b16 %v4753, %v4752
      %v4760 = vpack.c.b16 %v4755, %v4754
      %v4761 = vpack.c.b16 %v4756, %v4756
      %vm4766 = vcmask 588800
      %v4767 = vsel %vm4766, %v4660, 0
      %v4769 = vsel %vm4766, %v4662, 0
      %v4771 = vsel %vm4766, %v4664, 0
      %v4773 = vsel %vm4766, %v4666, 0
      %v4775 = vsel %vm4766, %v4668, 0
      %v4777 = vsel %vm4766, %v4670, 0
      %v4779 = vsel %vm4766, %v4672, 0
      %v4781 = vsel %vm4766, %v4674, 0
      %v4783 = vsel %vm4766, %v4676, 0
      %v4785 = vsel %vm4766, %v4678, 0
      %v4787 = vsel %vm4766, %v4680, 0
      %v4789 = vsel %vm4766, %v4682, 0
      %v4791 = vsel %vm4766, %v4684, 0
      %v4793 = vsel %vm4766, %v4686, 0
      %v4795 = vsel %vm4766, %v4688, 0
      %v4797 = vsel %vm4766, %v4690, 0
      %v4799 = vsel %vm4766, %v4692, 0
      %v4801 = vsel %vm4766, %v4694, 0
      %v4803 = vsel %vm4766, %v4696, 0
      %v4805 = vsel %vm4766, %v4698, 0
      %v4807 = vsel %vm4766, %v4700, 0
      %v4809 = vsel %vm4766, %v4702, 0
      %v4811 = vsel %vm4766, %v4704, 0
      %v4813 = vsel %vm4766, %v4706, 0
      %v4815 = vsel %vm4766, %v4708, 0
      %v4817 = vsel %vm4766, %v4710, 0
      %v4819 = vsel %vm4766, %v4712, 0
      %v4821 = vsel %vm4766, %v4714, 0
      %v4823 = vsel %vm4766, %v4716, 0
      %v4825 = vsel %vm4766, %v4718, 0
      %v4827 = vsel %vm4766, %v4720, 0
      %v4829 = vsel %vm4766, %v4722, 0
      %vm4831 = vcmask 1043456
      %v4833 = vsel %vm4831, %v4761, 0
      %4835 = vmatprep.subr.bf16.mxu0 0
      %4836 = vmatpush1.bf16.msra.mxu0 %v4757
      %4837 = vmatprep.subr.bf16.mxu0 0
      %4838 = vmatpush1.bf16.msra.mxu0 %v4758
      %4839 = vmatprep.subr.bf16.mxu0 0
      %4840 = vmatpush1.bf16.msra.mxu0 %v4759
      %4841 = vmatprep.subr.bf16.mxu0 0
      %4842 = vmatpush1.bf16.msra.mxu0 %v4760
      %4843 = vmatprep.subr.bf16.mxu0 0
      %4844 = vmatpush1.bf16.msra.mxu0 %v4833
      %4845 = vmatprep.subr.bf16.mxu0 0
      %4846 = vmatpush1.bf16.msra.mxu0 0
      %4847 = vmatprep.subr.bf16.mxu0 0
      %4848 = vmatpush1.bf16.msra.mxu0 0
      %4849 = vmatprep.subr.bf16.mxu0 0
      %4850 = vmatpush1.bf16.msra.mxu0 0
      %4851 = vmatprep.subr.bf16.mxu0 0
      %4852 = vmatpush1.bf16.msra.mxu0 0
      %4853 = vmatprep.subr.bf16.mxu0 0
      %4854 = vmatpush1.bf16.msra.mxu0 0
      %4855 = vmatprep.subr.bf16.mxu0 0
      %4856 = vmatpush1.bf16.msra.mxu0 0
      %4857 = vmatprep.subr.bf16.mxu0 0
      %4858 = vmatpush1.bf16.msra.mxu0 0
      %4859 = vmatprep.subr.bf16.mxu0 0
      %4860 = vmatpush1.bf16.msra.mxu0 0
      %4861 = vmatprep.subr.bf16.mxu0 0
      %4862 = vmatpush1.bf16.msra.mxu0 0
      %4863 = vmatprep.subr.bf16.mxu0 0
      %4864 = vmatpush1.bf16.msra.mxu0 0
      %4865 = vmatprep.subr.bf16.mxu0 0
      %4866 = vmatpush1.bf16.msra.mxu0 0
      %4867 = vmatprep.mubr.bf16.mxu0 0
      %4868 = vmatmul.mubr.bf16.gmra.mrb[0].mxu0 %v4767
      %v4869 = vpop.f32.mrb[0].mxu0
      %v4870 = vadd.f32 %v4737, %v4869
      %v4871 = vpop.f32.mrb[0].mxu0
      %v4872 = vpop.f32.mrb[0].mxu0
      %v4873 = vadd.f32 %v4737, %v4872
      %v4874 = vpop.f32.mrb[0].mxu0
      %4875 = vmatprep.mubr.bf16.mxu0 0
      %4876 = vmatmul.mubr.bf16.gmra.mrb[0].mxu0 %v4769
      %v4877 = vpop.f32.mrb[0].mxu0
      %v4878 = vadd.f32 %v4737, %v4877
      %v4879 = vpop.f32.mrb[0].mxu0
      %v4880 = vpop.f32.mrb[0].mxu0
      %v4881 = vadd.f32 %v4737, %v4880
      %v4882 = vpop.f32.mrb[0].mxu0
      %4883 = vmatprep.mubr.bf16.mxu0 0
      %4884 = vmatmul.mubr.bf16.gmra.mrb[0].mxu0 %v4771
      %v4885 = vpop.f32.mrb[0].mxu0
      %v4886 = vadd.f32 %v4737, %v4885
      %v4887 = vpop.f32.mrb[0].mxu0
      %v4888 = vpop.f32.mrb[0].mxu0
      %v4889 = vadd.f32 %v4737, %v4888
      %v4890 = vpop.f32.mrb[0].mxu0
      %4891 = vmatprep.mubr.bf16.mxu0 0
      %4892 = vmatmul.mubr.bf16.gmra.mrb[0].mxu0 %v4773
      %v4893 = vpop.f32.mrb[0].mxu0
      %v4894 = vadd.f32 %v4737, %v4893
      %v4895 = vpop.f32.mrb[0].mxu0
      %v4896 = vpop.f32.mrb[0].mxu0
      %v4897 = vadd.f32 %v4737, %v4896
      %v4898 = vpop.f32.mrb[0].mxu0
      %4899 = vmatprep.mubr.bf16.mxu0 0
      %4900 = vmatmul.mubr.bf16.gmra.mrb[0].mxu0 %v4775
      %v4901 = vpop.f32.mrb[0].mxu0
      %v4902 = vadd.f32 %v4737, %v4901
      %v4903 = vpop.f32.mrb[0].mxu0
      %v4904 = vpop.f32.mrb[0].mxu0
      %v4905 = vadd.f32 %v4737, %v4904
      %v4906 = vpop.f32.mrb[0].mxu0
      %4907 = vmatprep.mubr.bf16.mxu0 0
      %4908 = vmatmul.mubr.bf16.gmra.mrb[0].mxu0 %v4777
      %v4909 = vpop.f32.mrb[0].mxu0
      %v4910 = vadd.f32 %v4737, %v4909
      %v4911 = vpop.f32.mrb[0].mxu0
      %v4912 = vpop.f32.mrb[0].mxu0
      %v4913 = vadd.f32 %v4737, %v4912
      %v4914 = vpop.f32.mrb[0].mxu0
      %4915 = vmatprep.mubr.bf16.mxu0 0
      %4916 = vmatmul.mubr.bf16.gmra.mrb[0].mxu0 %v4779
      %v4917 = vpop.f32.mrb[0].mxu0
      %v4918 = vadd.f32 %v4737, %v4917
      %v4919 = vpop.f32.mrb[0].mxu0
      %v4920 = vpop.f32.mrb[0].mxu0
      %v4921 = vadd.f32 %v4737, %v4920
      %v4922 = vpop.f32.mrb[0].mxu0
      %4923 = vmatprep.mubr.bf16.mxu0 0
      %4924 = vmatmul.mubr.bf16.gmra.mrb[0].mxu0 %v4781
      %v4925 = vpop.f32.mrb[0].mxu0
      %v4926 = vadd.f32 %v4737, %v4925
      %v4927 = vpop.f32.mrb[0].mxu0
      %v4928 = vpop.f32.mrb[0].mxu0
      %v4929 = vadd.f32 %v4737, %v4928
      %v4930 = vpop.f32.mrb[0].mxu0
      %4931 = vmatprep.mubr.bf16.mxu0 0
      %4932 = vmatmul.mubr.bf16.gmra.mrb[0].mxu0 %v4783
      %v4933 = vpop.f32.mrb[0].mxu0
      %v4934 = vadd.f32 %v4737, %v4933
      %v4935 = vpop.f32.mrb[0].mxu0
      %v4936 = vpop.f32.mrb[0].mxu0
      %v4937 = vadd.f32 %v4737, %v4936
      %v4938 = vpop.f32.mrb[0].mxu0
      %4939 = vmatprep.mubr.bf16.mxu0 0
      %4940 = vmatmul.mubr.bf16.gmra.mrb[0].mxu0 %v4785
      %v4941 = vpop.f32.mrb[0].mxu0
      %v4942 = vadd.f32 %v4737, %v4941
      %v4943 = vpop.f32.mrb[0].mxu0
      %v4944 = vpop.f32.mrb[0].mxu0
      %v4945 = vadd.f32 %v4737, %v4944
      %v4946 = vpop.f32.mrb[0].mxu0
      %4947 = vmatprep.mubr.bf16.mxu0 0
      %4948 = vmatmul.mubr.bf16.gmra.mrb[0].mxu0 %v4787
      %v4949 = vpop.f32.mrb[0].mxu0
      %v4950 = vadd.f32 %v4737, %v4949
      %v4951 = vpop.f32.mrb[0].mxu0
      %v4952 = vpop.f32.mrb[0].mxu0
      %v4953 = vadd.f32 %v4737, %v4952
      %v4954 = vpop.f32.mrb[0].mxu0
      %4955 = vmatprep.mubr.bf16.mxu0 0
      %4956 = vmatmul.mubr.bf16.gmra.mrb[0].mxu0 %v4789
      %v4957 = vpop.f32.mrb[0].mxu0
      %v4958 = vadd.f32 %v4737, %v4957
      %v4959 = vpop.f32.mrb[0].mxu0
      %v4960 = vpop.f32.mrb[0].mxu0
      %v4961 = vadd.f32 %v4737, %v4960
      %v4962 = vpop.f32.mrb[0].mxu0
      %4963 = vmatprep.mubr.bf16.mxu0 0
      %4964 = vmatmul.mubr.bf16.gmra.mrb[0].mxu0 %v4791
      %v4965 = vpop.f32.mrb[0].mxu0
      %v4966 = vadd.f32 %v4737, %v4965
      %v4967 = vpop.f32.mrb[0].mxu0
      %v4968 = vpop.f32.mrb[0].mxu0
      %v4969 = vadd.f32 %v4737, %v4968
      %v4970 = vpop.f32.mrb[0].mxu0
      %4971 = vmatprep.mubr.bf16.mxu0 0
      %4972 = vmatmul.mubr.bf16.gmra.mrb[0].mxu0 %v4793
      %v4973 = vpop.f32.mrb[0].mxu0
      %v4974 = vadd.f32 %v4737, %v4973
      %v4975 = vpop.f32.mrb[0].mxu0
      %v4976 = vpop.f32.mrb[0].mxu0
      %v4977 = vadd.f32 %v4737, %v4976
      %v4978 = vpop.f32.mrb[0].mxu0
      %4979 = vmatprep.mubr.bf16.mxu0 0
      %4980 = vmatmul.mubr.bf16.gmra.mrb[0].mxu0 %v4795
      %v4981 = vpop.f32.mrb[0].mxu0
      %v4982 = vadd.f32 %v4737, %v4981
      %v4983 = vpop.f32.mrb[0].mxu0
      %v4984 = vpop.f32.mrb[0].mxu0
      %v4985 = vadd.f32 %v4737, %v4984
      %v4986 = vpop.f32.mrb[0].mxu0
      %4987 = vmatprep.mubr.bf16.mxu0 0
      %4988 = vmatmul.mubr.bf16.gmra.mrb[0].mxu0 %v4797
      %v4989 = vpop.f32.mrb[0].mxu0
      %v4990 = vadd.f32 %v4737, %v4989
      %v4991 = vpop.f32.mrb[0].mxu0
      %v4992 = vpop.f32.mrb[0].mxu0
      %v4993 = vadd.f32 %v4737, %v4992
      %v4994 = vpop.f32.mrb[0].mxu0
      %4995 = vmatprep.mubr.bf16.mxu0 0
      %4996 = vmatmul.mubr.bf16.gmra.mrb[0].mxu0 %v4799
      %v4997 = vpop.f32.mrb[0].mxu0
      %v4998 = vadd.f32 %v4737, %v4997
      %v4999 = vpop.f32.mrb[0].mxu0
      %v5000 = vpop.f32.mrb[0].mxu0
      %v5001 = vadd.f32 %v4737, %v5000
      %v5002 = vpop.f32.mrb[0].mxu0
      %5003 = vmatprep.mubr.bf16.mxu0 0
      %5004 = vmatmul.mubr.bf16.gmra.mrb[0].mxu0 %v4801
      %v5005 = vpop.f32.mrb[0].mxu0
      %v5006 = vadd.f32 %v4737, %v5005
      %v5007 = vpop.f32.mrb[0].mxu0
      %v5008 = vpop.f32.mrb[0].mxu0
      %v5009 = vadd.f32 %v4737, %v5008
      %v5010 = vpop.f32.mrb[0].mxu0
      %5011 = vmatprep.mubr.bf16.mxu0 0
      %5012 = vmatmul.mubr.bf16.gmra.mrb[0].mxu0 %v4803
      %v5013 = vpop.f32.mrb[0].mxu0
      %v5014 = vadd.f32 %v4737, %v5013
      %v5015 = vpop.f32.mrb[0].mxu0
      %v5016 = vpop.f32.mrb[0].mxu0
      %v5017 = vadd.f32 %v4737, %v5016
      %v5018 = vpop.f32.mrb[0].mxu0
      %5019 = vmatprep.mubr.bf16.mxu0 0
      %5020 = vmatmul.mubr.bf16.gmra.mrb[0].mxu0 %v4805
      %v5021 = vpop.f32.mrb[0].mxu0
      %v5022 = vadd.f32 %v4737, %v5021
      %v5023 = vpop.f32.mrb[0].mxu0
      %v5024 = vpop.f32.mrb[0].mxu0
      %v5025 = vadd.f32 %v4737, %v5024
      %v5026 = vpop.f32.mrb[0].mxu0
      %5027 = vmatprep.mubr.bf16.mxu0 0
      %5028 = vmatmul.mubr.bf16.gmra.mrb[0].mxu0 %v4807
      %v5029 = vpop.f32.mrb[0].mxu0
      %v5030 = vadd.f32 %v4737, %v5029
      %v5031 = vpop.f32.mrb[0].mxu0
      %v5032 = vpop.f32.mrb[0].mxu0
      %v5033 = vadd.f32 %v4737, %v5032
      %v5034 = vpop.f32.mrb[0].mxu0
      %5035 = vmatprep.mubr.bf16.mxu0 0
      %5036 = vmatmul.mubr.bf16.gmra.mrb[0].mxu0 %v4809
      %v5037 = vpop.f32.mrb[0].mxu0
      %v5038 = vadd.f32 %v4737, %v5037
      %v5039 = vpop.f32.mrb[0].mxu0
      %v5040 = vpop.f32.mrb[0].mxu0
      %v5041 = vadd.f32 %v4737, %v5040
      %v5042 = vpop.f32.mrb[0].mxu0
      %5043 = vmatprep.mubr.bf16.mxu0 0
      %5044 = vmatmul.mubr.bf16.gmra.mrb[0].mxu0 %v4811
      %v5045 = vpop.f32.mrb[0].mxu0
      %v5046 = vadd.f32 %v4737, %v5045
      %v5047 = vpop.f32.mrb[0].mxu0
      %v5048 = vpop.f32.mrb[0].mxu0
      %v5049 = vadd.f32 %v4737, %v5048
      %v5050 = vpop.f32.mrb[0].mxu0
      %5051 = vmatprep.mubr.bf16.mxu0 0
      %5052 = vmatmul.mubr.bf16.gmra.mrb[0].mxu0 %v4813
      %v5053 = vpop.f32.mrb[0].mxu0
      %v5054 = vadd.f32 %v4737, %v5053
      %v5055 = vpop.f32.mrb[0].mxu0
      %v5056 = vpop.f32.mrb[0].mxu0
      %v5057 = vadd.f32 %v4737, %v5056
      %v5058 = vpop.f32.mrb[0].mxu0
      %5059 = vmatprep.mubr.bf16.mxu0 0
      %5060 = vmatmul.mubr.bf16.gmra.mrb[0].mxu0 %v4815
      %v5061 = vpop.f32.mrb[0].mxu0
      %v5062 = vadd.f32 %v4737, %v5061
      %v5063 = vpop.f32.mrb[0].mxu0
      %v5064 = vpop.f32.mrb[0].mxu0
      %v5065 = vadd.f32 %v4737, %v5064
      %v5066 = vpop.f32.mrb[0].mxu0
      %5067 = vmatprep.mubr.bf16.mxu0 0
      %5068 = vmatmul.mubr.bf16.gmra.mrb[0].mxu0 %v4817
      %v5069 = vpop.f32.mrb[0].mxu0
      %v5070 = vadd.f32 %v4737, %v5069
      %v5071 = vpop.f32.mrb[0].mxu0
      %v5072 = vpop.f32.mrb[0].mxu0
      %v5073 = vadd.f32 %v4737, %v5072
      %v5074 = vpop.f32.mrb[0].mxu0
      %5075 = vmatprep.mubr.bf16.mxu0 0
      %5076 = vmatmul.mubr.bf16.gmra.mrb[0].mxu0 %v4819
      %v5077 = vpop.f32.mrb[0].mxu0
      %v5078 = vadd.f32 %v4737, %v5077
      %v5079 = vpop.f32.mrb[0].mxu0
      %v5080 = vpop.f32.mrb[0].mxu0
      %v5081 = vadd.f32 %v4737, %v5080
      %v5082 = vpop.f32.mrb[0].mxu0
      %5083 = vmatprep.mubr.bf16.mxu0 0
      %5084 = vmatmul.mubr.bf16.gmra.mrb[0].mxu0 %v4821
      %v5085 = vpop.f32.mrb[0].mxu0
      %v5086 = vadd.f32 %v4737, %v5085
      %v5087 = vpop.f32.mrb[0].mxu0
      %v5088 = vpop.f32.mrb[0].mxu0
      %v5089 = vadd.f32 %v4737, %v5088
      %v5090 = vpop.f32.mrb[0].mxu0
      %5091 = vmatprep.mubr.bf16.mxu0 0
      %5092 = vmatmul.mubr.bf16.gmra.mrb[0].mxu0 %v4823
      %v5093 = vpop.f32.mrb[0].mxu0
      %v5094 = vadd.f32 %v4737, %v5093
      %v5095 = vpop.f32.mrb[0].mxu0
      %v5096 = vpop.f32.mrb[0].mxu0
      %v5097 = vadd.f32 %v4737, %v5096
      %v5098 = vpop.f32.mrb[0].mxu0
      %5099 = vmatprep.mubr.bf16.mxu0 0
      %5100 = vmatmul.mubr.bf16.gmra.mrb[0].mxu0 %v4825
      %v5101 = vpop.f32.mrb[0].mxu0
      %v5102 = vadd.f32 %v4737, %v5101
      %v5103 = vpop.f32.mrb[0].mxu0
      %v5104 = vpop.f32.mrb[0].mxu0
      %v5105 = vadd.f32 %v4737, %v5104
      %v5106 = vpop.f32.mrb[0].mxu0
      %5107 = vmatprep.mubr.bf16.mxu0 0
      %5108 = vmatmul.mubr.bf16.gmra.mrb[0].mxu0 %v4827
      %v5109 = vpop.f32.mrb[0].mxu0
      %v5110 = vadd.f32 %v4737, %v5109
      %v5111 = vpop.f32.mrb[0].mxu0
      %v5112 = vpop.f32.mrb[0].mxu0
      %v5113 = vadd.f32 %v4737, %v5112
      %v5114 = vpop.f32.mrb[0].mxu0
      %5115 = vmatprep.mubr.bf16.mxu0 0
      %5116 = vmatmul.mubr.bf16.gmra.mrb[0].mxu0 %v4829
      %v5117 = vpop.f32.mrb[0].mxu0
      %v5118 = vadd.f32 %v4737, %v5117
      %v5119 = vpop.f32.mrb[0].mxu0
      %v5120 = vpop.f32.mrb[0].mxu0
      %v5121 = vadd.f32 %v4737, %v5120
      %v5122 = vpop.f32.mrb[0].mxu0
      %5123 = vdwg.mxu0
      %v5124 = vmax.f32 %v4870, 0.0
      %v5125 = vmax.f32 %v4873, 0.0
      %v5126 = vmax.f32 %v4878, 0.0
      %v5127 = vmax.f32 %v4881, 0.0
      %v5128 = vmax.f32 %v4886, 0.0
      %v5129 = vmax.f32 %v4889, 0.0
      %v5130 = vmax.f32 %v4894, 0.0
      %v5131 = vmax.f32 %v4897, 0.0
      %v5132 = vmax.f32 %v4902, 0.0
      %v5133 = vmax.f32 %v4905, 0.0
      %v5134 = vmax.f32 %v4910, 0.0
      %v5135 = vmax.f32 %v4913, 0.0
      %v5136 = vmax.f32 %v4918, 0.0
      %v5137 = vmax.f32 %v4921, 0.0
      %v5138 = vmax.f32 %v4926, 0.0
      %v5139 = vmax.f32 %v4929, 0.0
      %v5140 = vmax.f32 %v4934, 0.0
      %v5141 = vmax.f32 %v4937, 0.0
      %v5142 = vmax.f32 %v4942, 0.0
      %v5143 = vmax.f32 %v4945, 0.0
      %v5144 = vmax.f32 %v4950, 0.0
      %v5145 = vmax.f32 %v4953, 0.0
      %v5146 = vmax.f32 %v4958, 0.0
      %v5147 = vmax.f32 %v4961, 0.0
      %v5148 = vmax.f32 %v4966, 0.0
      %v5149 = vmax.f32 %v4969, 0.0
      %v5150 = vmax.f32 %v4974, 0.0
      %v5151 = vmax.f32 %v4977, 0.0
      %v5152 = vmax.f32 %v4982, 0.0
      %v5153 = vmax.f32 %v4985, 0.0
      %v5154 = vmax.f32 %v4990, 0.0
      %v5155 = vmax.f32 %v4993, 0.0
      %v5156 = vmax.f32 %v4998, 0.0
      %v5157 = vmax.f32 %v5001, 0.0
      %v5158 = vmax.f32 %v5006, 0.0
      %v5159 = vmax.f32 %v5009, 0.0
      %v5160 = vmax.f32 %v5014, 0.0
      %v5161 = vmax.f32 %v5017, 0.0
      %v5162 = vmax.f32 %v5022, 0.0
      %v5163 = vmax.f32 %v5025, 0.0
      %v5164 = vmax.f32 %v5030, 0.0
      %v5165 = vmax.f32 %v5033, 0.0
      %v5166 = vmax.f32 %v5038, 0.0
      %v5167 = vmax.f32 %v5041, 0.0
      %v5168 = vmax.f32 %v5046, 0.0
      %v5169 = vmax.f32 %v5049, 0.0
      %v5170 = vmax.f32 %v5054, 0.0
      %v5171 = vmax.f32 %v5057, 0.0
      %v5172 = vmax.f32 %v5062, 0.0
      %v5173 = vmax.f32 %v5065, 0.0
      %v5174 = vmax.f32 %v5070, 0.0
      %v5175 = vmax.f32 %v5073, 0.0
      %v5176 = vmax.f32 %v5078, 0.0
      %v5177 = vmax.f32 %v5081, 0.0
      %v5178 = vmax.f32 %v5086, 0.0
      %v5179 = vmax.f32 %v5089, 0.0
      %v5180 = vmax.f32 %v5094, 0.0
      %v5181 = vmax.f32 %v5097, 0.0
      %v5182 = vmax.f32 %v5102, 0.0
      %v5183 = vmax.f32 %v5105, 0.0
      %v5184 = vmax.f32 %v5110, 0.0
      %v5185 = vmax.f32 %v5113, 0.0
      %v5186 = vmax.f32 %v5118, 0.0
      %v5187 = vmax.f32 %v5121, 0.0
      %v5188 = vadd.f32 %v5124, %v5125
      %v5189 = vadd.f32 %v5188, %v5126
      %v5190 = vadd.f32 %v5189, %v5127
      %v5191 = vadd.f32 %v5190, %v5128
      %v5192 = vadd.f32 %v5191, %v5129
      %v5193 = vadd.f32 %v5192, %v5130
      %v5194 = vadd.f32 %v5193, %v5131
      %v5195 = vadd.f32 %v5194, %v5132
      %v5196 = vadd.f32 %v5195, %v5133
      %v5197 = vadd.f32 %v5196, %v5134
      %v5198 = vadd.f32 %v5197, %v5135
      %v5199 = vadd.f32 %v5198, %v5136
      %v5200 = vadd.f32 %v5199, %v5137
      %v5201 = vadd.f32 %v5200, %v5138
      %v5202 = vadd.f32 %v5201, %v5139
      %v5203 = vadd.f32 %v5202, %v5140
      %v5204 = vadd.f32 %v5203, %v5141
      %v5205 = vadd.f32 %v5204, %v5142
      %v5206 = vadd.f32 %v5205, %v5143
      %v5207 = vadd.f32 %v5206, %v5144
      %v5208 = vadd.f32 %v5207, %v5145
      %v5209 = vadd.f32 %v5208, %v5146
      %v5210 = vadd.f32 %v5209, %v5147
      %v5211 = vadd.f32 %v5210, %v5148
      %v5212 = vadd.f32 %v5211, %v5149
      %v5213 = vadd.f32 %v5212, %v5150
      %v5214 = vadd.f32 %v5213, %v5151
      %v5215 = vadd.f32 %v5214, %v5152
      %v5216 = vadd.f32 %v5215, %v5153
      %v5217 = vadd.f32 %v5216, %v5154
      %v5218 = vadd.f32 %v5217, %v5155
      %v5219 = vrot.slane %v5218, 4
      %v5220 = vadd.f32 %v5218, %v5219
      %v5221 = vrot.slane %v5220, 2
      %v5222 = vadd.f32 %v5220, %v5221
      %v5223 = vrot.slane %v5222, 1
      %v5224 = vadd.f32 %v5222, %v5223
      %v5225 = vadd.f32 %v5156, %v5157
      %v5226 = vadd.f32 %v5225, %v5158
      %v5227 = vadd.f32 %v5226, %v5159
      %v5228 = vadd.f32 %v5227, %v5160
      %v5229 = vadd.f32 %v5228, %v5161
      %v5230 = vadd.f32 %v5229, %v5162
      %v5231 = vadd.f32 %v5230, %v5163
      %v5232 = vadd.f32 %v5231, %v5164
      %v5233 = vadd.f32 %v5232, %v5165
      %v5234 = vadd.f32 %v5233, %v5166
      %v5235 = vadd.f32 %v5234, %v5167
      %v5236 = vadd.f32 %v5235, %v5168
      %v5237 = vadd.f32 %v5236, %v5169
      %v5238 = vadd.f32 %v5237, %v5170
      %v5239 = vadd.f32 %v5238, %v5171
      %v5240 = vadd.f32 %v5239, %v5172
      %v5241 = vadd.f32 %v5240, %v5173
      %v5242 = vadd.f32 %v5241, %v5174
      %v5243 = vadd.f32 %v5242, %v5175
      %v5244 = vadd.f32 %v5243, %v5176
      %v5245 = vadd.f32 %v5244, %v5177
      %v5246 = vadd.f32 %v5245, %v5178
      %v5247 = vadd.f32 %v5246, %v5179
      %v5248 = vadd.f32 %v5247, %v5180
      %v5249 = vadd.f32 %v5248, %v5181
      %v5250 = vadd.f32 %v5249, %v5182
      %v5251 = vadd.f32 %v5250, %v5183
      %v5252 = vadd.f32 %v5251, %v5184
      %v5253 = vadd.f32 %v5252, %v5185
      %v5254 = vadd.f32 %v5253, %v5186
      %v5255 = vadd.f32 %v5254, %v5187
      %v5256 = vrot.slane %v5255, 4
      %v5257 = vadd.f32 %v5255, %v5256
      %v5258 = vrot.slane %v5257, 2
      %v5259 = vadd.f32 %v5257, %v5258
      %v5260 = vrot.slane %v5259, 1
      %v5261 = vadd.f32 %v5259, %v5260
      %v5262 = vrcp.pop 256.0
      %v5263 = vmul.f32 %v5224, %v5262
      %v5264 = vmul.f32 %v5261, %v5262
      %v5265 = vpack.c.bf16 %v5263, %v5263
      %v5266 = vpack.c.bf16 %v5264, %v5264
      %v5267 = vld [vmem:[%s493] sm:$0xf]
      %v5268 = vld [vmem:[%s493 + $0x4] sm:$0xf]
      %v5269 = vld [vmem:[%s493 + $0x8] sm:$0xf]
      %v5270 = vld [vmem:[%s493 + $0xc] sm:$0xf]
      %v5271 = vld [vmem:[%s493 + $0x10] sm:$0xf]
      %v5272 = vld [vmem:[%s493 + $0x14] sm:$0xf]
      %v5273 = vld [vmem:[%s493 + $0x18] sm:$0xf]
      %v5274 = vld [vmem:[%s493 + $0x1c] sm:$0xf]
      %v5275 = vld [vmem:[%s493 + $0x20] sm:$0xf]
      %v5276 = vld [vmem:[%s493 + $0x24] sm:$0xf]
      %v5277 = vld [vmem:[%s493 + $0x28] sm:$0xf]
      %v5278 = vld [vmem:[%s493 + $0x2c] sm:$0xf]
      %v5279 = vld [vmem:[%s493 + $0x30] sm:$0xf]
      %v5280 = vld [vmem:[%s493 + $0x34] sm:$0xf]
      %v5281 = vld [vmem:[%s493 + $0x38] sm:$0xf]
      %v5282 = vld [vmem:[%s493 + $0x3c] sm:$0xf]
      %v5283 = vld [vmem:[%s496] sm:$0x1]
      %v5285 = vlaneseq
      %v5286 = vshrl.u32 %v5285, 7
      %v5287 = vsub.s32 0, %v5286
      %v5288 = vrot.slane %v5283, %v5287
      %v5292 = vunpack.c.l.b16 %v5265
      %v5293 = vunpack.c.l.b16 %v5266
      %vm5294 = vcmask 1041409
      %v5295 = vsel %vm5294, %v5293, %v5292
      %v5296 = vpack.c.b16 %v5295, %v5295
      %v5314 = vunpack.c.l.b16 %v5267
      %v5315 = vunpack.c.l.b16 %v5268
      %v5316 = vunpack.c.l.b16 %v5269
      %v5317 = vunpack.c.l.b16 %v5270
      %v5318 = vunpack.c.l.b16 %v5271
      %v5319 = vunpack.c.l.b16 %v5272
      %v5320 = vunpack.c.l.b16 %v5273
      %v5321 = vunpack.c.l.b16 %v5274
      %v5322 = vunpack.c.l.b16 %v5275
      %v5323 = vunpack.c.l.b16 %v5276
      %v5324 = vunpack.c.l.b16 %v5277
      %v5325 = vunpack.c.l.b16 %v5278
      %v5326 = vunpack.c.l.b16 %v5279
      %v5327 = vunpack.c.l.b16 %v5280
      %v5328 = vunpack.c.l.b16 %v5281
      %v5329 = vunpack.c.l.b16 %v5282
      %v5330 = vpack.c.b16 %v5315, %v5314
      %v5331 = vpack.c.b16 %v5317, %v5316
      %v5332 = vpack.c.b16 %v5319, %v5318
      %v5333 = vpack.c.b16 %v5321, %v5320
      %v5334 = vpack.c.b16 %v5323, %v5322
      %v5335 = vpack.c.b16 %v5325, %v5324
      %v5336 = vpack.c.b16 %v5327, %v5326
      %v5337 = vpack.c.b16 %v5329, %v5328
      %5346 = vmatprep.subr.bf16.mxu0 0
      %5347 = vmatpush1.bf16.msra.mxu0 %v5330
      %5348 = vmatprep.subr.bf16.mxu0 0
      %5349 = vmatpush1.bf16.msra.mxu0 %v5331
      %5350 = vmatprep.subr.bf16.mxu0 0
      %5351 = vmatpush1.bf16.msra.mxu0 %v5332
      %5352 = vmatprep.subr.bf16.mxu0 0
      %5353 = vmatpush1.bf16.msra.mxu0 %v5333
      %5354 = vmatprep.subr.bf16.mxu0 0
      %5355 = vmatpush1.bf16.msra.mxu0 %v5334
      %5356 = vmatprep.subr.bf16.mxu0 0
      %5357 = vmatpush1.bf16.msra.mxu0 %v5335
      %5358 = vmatprep.subr.bf16.mxu0 0
      %5359 = vmatpush1.bf16.msra.mxu0 %v5336
      %5360 = vmatprep.subr.bf16.mxu0 0
      %5361 = vmatpush1.bf16.msra.mxu0 %v5337
      %5362 = vmatprep.subr.bf16.mxu0 0
      %5363 = vmatpush1.bf16.msra.mxu0 0
      %5364 = vmatprep.subr.bf16.mxu0 0
      %5365 = vmatpush1.bf16.msra.mxu0 0
      %5366 = vmatprep.subr.bf16.mxu0 0
      %5367 = vmatpush1.bf16.msra.mxu0 0
      %5368 = vmatprep.subr.bf16.mxu0 0
      %5369 = vmatpush1.bf16.msra.mxu0 0
      %5370 = vmatprep.subr.bf16.mxu0 0
      %5371 = vmatpush1.bf16.msra.mxu0 0
      %5372 = vmatprep.subr.bf16.mxu0 0
      %5373 = vmatpush1.bf16.msra.mxu0 0
      %5374 = vmatprep.subr.bf16.mxu0 0
      %5375 = vmatpush1.bf16.msra.mxu0 0
      %5376 = vmatprep.subr.bf16.mxu0 0
      %5377 = vmatpush1.bf16.msra.mxu0 0
      %5378 = vmatprep.mubr.bf16.mxu0 0
      %5379 = vmatmul.mubr.bf16.gmra.mrb[0].mxu0 %v5296
      %v5380 = vpop.f32.mrb[0].mxu0
      %v5381 = vadd.f32 %v5288, %v5380
      %v5382 = vpop.f32.mrb[0].mxu0
      %v5383 = vpop.f32.mrb[0].mxu0
      %v5384 = vpop.f32.mrb[0].mxu0
      %5385 = vdwg.mxu0
      %v5386 = vmul.f32 %v5381, 0.5
      %v5387 = vmul.f32 %v5381, 0.044715
      %v5388 = vmul.f32 %v5387, %v5381
      %v5389 = vmul.f32 %v5388, %v5381
      %v5390 = vadd.f32 %v5381, %v5389
      %v5391 = vmul.f32 %v5390, 0.7978846
      %v5392 = vtanh.pop %v5391
      %v5393 = vadd.f32 %v5392, 1.0
      %v5394 = vmul.f32 %v5386, %v5393
      %v5395 = vpack.c.bf16 %v5394, %v5394
      %v5396 = vld [vmem:[%s501] sm:$0xf]
      %v5397 = vld [vmem:[%s501 + $0x4] sm:$0xf]
      %v5398 = vld [vmem:[%s501 + $0x8] sm:$0xf]
      %v5399 = vld [vmem:[%s501 + $0xc] sm:$0xf]
      %v5400 = vld [vmem:[%s501 + $0x10] sm:$0xf]
      %v5401 = vld [vmem:[%s501 + $0x14] sm:$0xf]
      %v5402 = vld [vmem:[%s501 + $0x18] sm:$0xf]
      %v5403 = vld [vmem:[%s501 + $0x1c] sm:$0xf]
      %v5404 = vld [vmem:[%s501 + $0x20] sm:$0xf]
      %v5405 = vld [vmem:[%s501 + $0x24] sm:$0xf]
      %v5406 = vld [vmem:[%s501 + $0x28] sm:$0xf]
      %v5407 = vld [vmem:[%s501 + $0x2c] sm:$0xf]
      %v5408 = vld [vmem:[%s501 + $0x30] sm:$0xf]
      %v5409 = vld [vmem:[%s501 + $0x34] sm:$0xf]
      %v5410 = vld [vmem:[%s501 + $0x38] sm:$0xf]
      %v5411 = vld [vmem:[%s501 + $0x3c] sm:$0xf]
      %v5412 = vld [vmem:[%s504] sm:$0x1]
      %v5414 = vlaneseq
      %v5415 = vshrl.u32 %v5414, 7
      %v5416 = vsub.s32 0, %v5415
      %v5417 = vrot.slane %v5412, %v5416
      %v5435 = vunpack.c.l.b16 %v5396
      %v5436 = vunpack.c.l.b16 %v5397
      %v5437 = vunpack.c.l.b16 %v5398
      %v5438 = vunpack.c.l.b16 %v5399
      %v5439 = vunpack.c.l.b16 %v5400
      %v5440 = vunpack.c.l.b16 %v5401
      %v5441 = vunpack.c.l.b16 %v5402
      %v5442 = vunpack.c.l.b16 %v5403
      %v5443 = vunpack.c.l.b16 %v5404
      %v5444 = vunpack.c.l.b16 %v5405
      %v5445 = vunpack.c.l.b16 %v5406
      %v5446 = vunpack.c.l.b16 %v5407
      %v5447 = vunpack.c.l.b16 %v5408
      %v5448 = vunpack.c.l.b16 %v5409
      %v5449 = vunpack.c.l.b16 %v5410
      %v5450 = vunpack.c.l.b16 %v5411
      %v5451 = vpack.c.b16 %v5436, %v5435
      %v5452 = vpack.c.b16 %v5438, %v5437
      %v5453 = vpack.c.b16 %v5440, %v5439
      %v5454 = vpack.c.b16 %v5442, %v5441
      %v5455 = vpack.c.b16 %v5444, %v5443
      %v5456 = vpack.c.b16 %v5446, %v5445
      %v5457 = vpack.c.b16 %v5448, %v5447
      %v5458 = vpack.c.b16 %v5450, %v5449
      %5467 = vmatprep.subr.bf16.mxu0 0
      %5468 = vmatpush1.bf16.msra.mxu0 %v5451
      %5469 = vmatprep.subr.bf16.mxu0 0
      %5470 = vmatpush1.bf16.msra.mxu0 %v5452
      %5471 = vmatprep.subr.bf16.mxu0 0
      %5472 = vmatpush1.bf16.msra.mxu0 %v5453
      %5473 = vmatprep.subr.bf16.mxu0 0
      %5474 = vmatpush1.bf16.msra.mxu0 %v5454
      %5475 = vmatprep.subr.bf16.mxu0 0
      %5476 = vmatpush1.bf16.msra.mxu0 %v5455
      %5477 = vmatprep.subr.bf16.mxu0 0
      %5478 = vmatpush1.bf16.msra.mxu0 %v5456
      %5479 = vmatprep.subr.bf16.mxu0 0
      %5480 = vmatpush1.bf16.msra.mxu0 %v5457
      %5481 = vmatprep.subr.bf16.mxu0 0
      %5482 = vmatpush1.bf16.msra.mxu0 %v5458
      %5483 = vmatprep.subr.bf16.mxu0 0
      %5484 = vmatpush1.bf16.msra.mxu0 0
      %5485 = vmatprep.subr.bf16.mxu0 0
      %5486 = vmatpush1.bf16.msra.mxu0 0
      %5487 = vmatprep.subr.bf16.mxu0 0
      %5488 = vmatpush1.bf16.msra.mxu0 0
      %5489 = vmatprep.subr.bf16.mxu0 0
      %5490 = vmatpush1.bf16.msra.mxu0 0
      %5491 = vmatprep.subr.bf16.mxu0 0
      %5492 = vmatpush1.bf16.msra.mxu0 0
      %5493 = vmatprep.subr.bf16.mxu0 0
      %5494 = vmatpush1.bf16.msra.mxu0 0
      %5495 = vmatprep.subr.bf16.mxu0 0
      %5496 = vmatpush1.bf16.msra.mxu0 0
      %5497 = vmatprep.subr.bf16.mxu0 0
      %5498 = vmatpush1.bf16.msra.mxu0 0
      %5499 = vmatprep.mubr.bf16.mxu0 0
      %5500 = vmatmul.mubr.bf16.gmra.mrb[0].mxu0 %v5395
      %v5501 = vpop.f32.mrb[0].mxu0
      %v5502 = vadd.f32 %v5417, %v5501
      %v5503 = vpop.f32.mrb[0].mxu0
      %v5504 = vpop.f32.mrb[0].mxu0
      %v5505 = vpop.f32.mrb[0].mxu0
      %5506 = vdwg.mxu0
      %v5507 = vadd.f32 %v5502, %v5381
      %v5508 = vlaneseq
      %v5509 = vand.u32 %v5508, 127
      %vm5510 = vcmp.lt.s32.totalorder %v5509, 32
      %v5511 = vsel %vm5510, 1, 0
      %v5512 = vcvt.s32.f32 %v5511
      %v5513 = vmul.f32 %v5507, %v5512
      %vm5514 = vcmask 1041408
      %v5515 = vsel %vm5514, %v5513, 0.0
      %5516 = vadd.xlane.f32.xlu0 %v5515
      %v5517 = vpop.xlane.xlu0 %5516
      %v5518 = vmul.f32 %v5517, 0.03125
      %v5519 = vsub.f32 %v5507, %v5518
      %v5520 = vmul.f32 %v5519, %v5512
      %v5521 = vmul.f32 %v5520, %v5520
      %v5522 = vsel %vm5514, %v5521, 0.0
      %5523 = vadd.xlane.f32.xlu0 %v5522
      %v5524 = vpop.xlane.xlu0 %5523
      %v5525 = vmul.f32 %v5524, 0.03125
      %v5526 = vadd.f32 %v5525, 1e-05
      %v5527 = vrsqrt.pop %v5526
      %v5528 = vmul.f32 %v5519, %v5527
      %v5529 = vld [vmem:[%s507] sm:$0x1]
      %v5531 = vlaneseq
      %v5532 = vshrl.u32 %v5531, 7
      %v5533 = vsub.s32 0, %v5532
      %v5534 = vrot.slane %v5529, %v5533
      %v5536 = vmul.f32 %v5528, %v5534
      %v5537 = vld [vmem:[%s510] sm:$0x1]
      %v5539 = vlaneseq
      %v5540 = vshrl.u32 %v5539, 7
      %v5541 = vsub.s32 0, %v5540
      %v5542 = vrot.slane %v5537, %v5541
      %v5544 = vadd.f32 %v5536, %v5542
      %5545 = vst [vmem:[%s514] sm:$0x3] %v5544
      %p5546 = scmp.lt.s32.totalorder %s22, 1
      %s5547 = scalar_select %p5546, %s22, 1
      %s5548 = smul.addr %s5547, 2
      %s5549 = scalar_lea.vmem %s11, %s5548
      // Predicated region
      $region65: #{clip_forward.2} parent=63 // pred_check
        %p5550 = pneg %p316
      $region66: #{clip_forward.2} parent=63 // pred_check_branch
        %5552 = sbr.rel (%p5550) target = $region68
      $region67: #{clip_forward.2} parent=63 // pred_region
        _
      $region68: #{clip_forward.2} parent=63 // pred_fallthru
        _
    $region64: #{clip_forward.2} parent=5 // pred_fallthru
      _
    %p5553 = scmp.le.s32.totalorder 2, %s17
    // Predicated region
    $region69: #{clip_forward.2} parent=5 // pred_check
      %p5554 = pneg %p5553
    $region70: #{clip_forward.2} parent=5 // pred_check_branch
      %5556 = sbr.rel (%p5554) target = $region72
    $region71: #{clip_forward.2} parent=5 // pred_region
      %s5557 = ssub.s32 %s17, 2
      // Predicated region
      $region73: #{clip_forward.2} parent=71 // pred_check
        %p5558 = pneg %p322
      $region74: #{clip_forward.2} parent=71 // pred_check_branch
        %5560 = sbr.rel (%p5558) target = $region76
      $region75: #{clip_forward.2} parent=71 // pred_region
        %p5561 = scmp.lt.s32.totalorder %s23, 1
        %s5562 = scalar_select %p5561, %s23, 1
        %s5563 = smul.addr %s5562, 2
        %s5564 = scalar_lea.vmem %s11, %s5563
      $region76: #{clip_forward.2} parent=71 // pred_fallthru
        _
    $region72: #{clip_forward.2} parent=5 // pred_fallthru
      _
  $region6: #{clip_forward.2} parent=0 // loop_footer
    %s21 = sadd.s32 1, %s17
  $region7: #{clip_forward.2} parent=0 // loop_footer_branch
    %16 = sbr.rel target = $region3
  $region8: #{clip_forward.2} parent=0 // loop_exit
    _

</llo_original>
